<compile_context>
chip_gen: v5e
topology: v5e:2x2
jax: 0.10.0
libtpu: 0.0.40
codegen_flags: <defaults>
</compile_context>

<pallas_src>
import jax
import jax.numpy as jnp
from jax.experimental import pallas as pl
from jax.experimental.pallas import tpu as pltpu

INPUT_SIZE = 8      # module-level `input_size`
D_MODEL = 32
NHEAD = 4
NUM_LAYERS = 2
DIM_FF = 2048       # fixed by nn.TransformerEncoderLayer(dim_feedforward=2048)
LN_EPS = 1e-5       # PyTorch LayerNorm default
TARGET_ROWS = 256   # MXU row target per grid step (v6e/v7x); 128+ also fine on v5e


# ----------------------------- fused Pallas kernel -----------------------------

def _layernorm(z, g, b):
    """LayerNorm over the last dim. z: (M, D); g, b: (1, D)."""
    mu = jnp.mean(z, axis=-1, keepdims=True)
    zc = z - mu
    var = jnp.mean(zc * zc, axis=-1, keepdims=True)
    return zc * jax.lax.rsqrt(var + LN_EPS) * g + b


def _make_kernel(BB, S, ff_chunk, use_bf16_ff):
    """Builds the fused forward kernel for one batch-block of BB sequences.

    refs = (x_ref, in_w, in_b,
            [qkv_w, qkv_b, proj_w, proj_b, ln1_g, ln1_b,
             ff1_w, ff1_b, ff2_w, ff2_b, ln2_g, ln2_b] * NUM_LAYERS,
            out_wt, out_b, o_ref)
    """
    M = BB * S
    dh = D_MODEL // NHEAD
    scale = 1.0 / float(dh) ** 0.5
    n_chunks = DIM_FF // ff_chunk

    def kernel(*refs):
        x_ref = refs[0]
        o_ref = refs[-1]
        w = refs[1:-1]

        # ---- input layer: (M, F) @ (F, D) ----
        x = x_ref[...]                                                     # (M, F)
        h = jnp.dot(x, w[0][...], preferred_element_type=jnp.float32) + w[1][...]

        idx = 2
        for _ in range(NUM_LAYERS):                    # static unroll over layers
            (qkv_w, qkv_b, proj_w, proj_b, ln1_g, ln1_b,
             ff1_w, ff1_b, ff2_w, ff2_b, ln2_g, ln2_b) = w[idx:idx + 12]
            idx += 12

            # ---- fused QKV projection: one lane-dense (M, D) @ (D, 3D) ----
            qkv = jnp.dot(h, qkv_w[...],
                          preferred_element_type=jnp.float32) + qkv_b[...]  # (M, 3D)
            q3 = qkv[:, 0:D_MODEL].reshape(BB, S, D_MODEL)
            k3 = qkv[:, D_MODEL:2 * D_MODEL].reshape(BB, S, D_MODEL)
            v3 = qkv[:, 2 * D_MODEL:3 * D_MODEL].reshape(BB, S, D_MODEL)

            # ---- multi-head self-attention, batched over the BB sequences ----
            ctx_heads = []
            for hh in range(NHEAD):                    # static unroll over heads
                lo = hh * dh
                qh = q3[:, :, lo:lo + dh] * scale      # (BB, S, dh)
                kh = k3[:, :, lo:lo + dh]
                vh = v3[:, :, lo:lo + dh]
                s = jnp.einsum('bqd,bkd->bqk', qh, kh,
                               preferred_element_type=jnp.float32)          # (BB,S,S)
                s = s - jnp.max(s, axis=-1, keepdims=True)
                p = jnp.exp(s)
                p = p / jnp.sum(p, axis=-1, keepdims=True)    # exact softmax divide
                ctx = jnp.einsum('bqk,bkd->bqd', p, vh,
                                 preferred_element_type=jnp.float32)        # (BB,S,dh)
                ctx_heads.append(ctx.reshape(M, dh))
            ctx = jnp.concatenate(ctx_heads, axis=-1)                       # (M, D)
            attn = jnp.dot(ctx, proj_w[...],
                           preferred_element_type=jnp.float32) + proj_b[...]
            h = _layernorm(h + attn, ln1_g[...], ln1_b[...])                # norm1

            # ---- feed-forward (ReLU), chunked over DIM_FF ----
            h_ff = h.astype(jnp.bfloat16) if use_bf16_ff else h
            ff = jnp.zeros((M, D_MODEL), jnp.float32)
            for c in range(n_chunks):
                c0 = c * ff_chunk
                w1 = ff1_w[:, c0:c0 + ff_chunk]        # (D, C) slice from VMEM ref
                b1 = ff1_b[:, c0:c0 + ff_chunk]        # (1, C)
                w2 = ff2_w[c0:c0 + ff_chunk, :]        # (C, D)
                a = jnp.dot(h_ff, w1, preferred_element_type=jnp.float32) + b1
                a = jnp.maximum(a, 0.0)                # relu
                if use_bf16_ff:
                    a = a.astype(jnp.bfloat16)
                ff = ff + jnp.dot(a, w2, preferred_element_type=jnp.float32)
            ff = ff + ff2_b[...]
            h = _layernorm(h + ff, ln2_g[...], ln2_b[...])                  # norm2

        # ---- output layer (Dout=1) folded into the epilogue ----
        out_wt = w[-2][...]                            # (1, D)
        out_b = w[-1][...]                             # (1, 1)
        o_ref[...] = jnp.sum(h * out_wt, axis=-1, keepdims=True) + out_b   # (M, 1)

    return kernel


# ---------------------------- parameters / wrapper ----------------------------

def init_params(key):
    def dense(k, din, dout, scale=0.02):
        kw, kb = jax.random.split(k)
        w = jax.random.normal(kw, (din, dout), jnp.float32) * scale
        b = jax.random.normal(kb, (1, dout), jnp.float32) * scale
        return w, b

    keys = jax.random.split(key, 2 + NUM_LAYERS)
    params = {}
    params["in_w"], params["in_b"] = dense(keys[0], INPUT_SIZE, D_MODEL)
    out_w, out_b = dense(keys[1], D_MODEL, 1)
    params["out_wt"] = out_w.T                      # (1, D_MODEL), lane-major
    params["out_b"] = out_b                         # (1, 1)

    layers = []
    for l in range(NUM_LAYERS):
        lk = jax.random.split(keys[2 + l], 6)
        q_w, q_b = dense(lk[0], D_MODEL, D_MODEL)   # in_proj, q part
        k_w, k_b = dense(lk[1], D_MODEL, D_MODEL)   # in_proj, k part
        v_w, v_b = dense(lk[2], D_MODEL, D_MODEL)   # in_proj, v part
        proj_w, proj_b = dense(lk[3], D_MODEL, D_MODEL)   # out_proj
        ff1_w, ff1_b = dense(lk[4], D_MODEL, DIM_FF)      # linear1
        ff2_w, ff2_b = dense(lk[5], DIM_FF, D_MODEL)      # linear2
        layers.append(dict(
            q_w=q_w, q_b=q_b, k_w=k_w, k_b=k_b, v_w=v_w, v_b=v_b,
            proj_w=proj_w, proj_b=proj_b,
            ff1_w=ff1_w, ff1_b=ff1_b, ff2_w=ff2_w, ff2_b=ff2_b,
            ln1_g=jnp.ones((1, D_MODEL), jnp.float32),
            ln1_b=jnp.zeros((1, D_MODEL), jnp.float32),
            ln2_g=jnp.ones((1, D_MODEL), jnp.float32),
            ln2_b=jnp.zeros((1, D_MODEL), jnp.float32),
        ))
    params["layers"] = layers
    return params


def _choose_bb(B, S):
    """Sequences per grid step: target ~TARGET_ROWS rows, keep >=2 grid steps."""
    if S % 8 != 0:
        return max(B, 1)                      # single full block (dims == array dims)
    bb = max(1, TARGET_ROWS // S)
    if B >= 2:
        bb = min(bb, (B + 1) // 2)            # keep >=2 grid steps for 2 TCs (v7x)
    return max(1, min(bb, B))


def pinn_forward(params, x, use_bf16_ff=False):
    """x: (S, B, INPUT_SIZE) -> (S, B, 1), matching the PyTorch seq-first layout."""
    S, B, F = x.shape
    xb = jnp.transpose(x.astype(jnp.float32), (1, 0, 2))   # (B, S, F)

    BB = _choose_bb(B, S)
    nb = -(-B // BB)                                        # ceil_div
    B_pad = nb * BB
    if B_pad != B:
        xb = jnp.pad(xb, ((0, B_pad - B), (0, 0), (0, 0)))
    x2 = xb.reshape(B_pad * S, F)                           # flatten rows in wrapper
    M = BB * S

    flat = [params["in_w"], params["in_b"]]
    for lp in params["layers"]:
        qkv_w = jnp.concatenate([lp["q_w"], lp["k_w"], lp["v_w"]], axis=1)  # (D, 3D)
        qkv_b = jnp.concatenate([lp["q_b"], lp["k_b"], lp["v_b"]], axis=1)  # (1, 3D)
        ff1_w = lp["ff1_w"]
        ff2_w = lp["ff2_w"]
        if use_bf16_ff:
            ff1_w = ff1_w.astype(jnp.bfloat16)
            ff2_w = ff2_w.astype(jnp.bfloat16)
        flat += [qkv_w, qkv_b, lp["proj_w"], lp["proj_b"],
                 lp["ln1_g"], lp["ln1_b"],
                 ff1_w, lp["ff1_b"], ff2_w, lp["ff2_b"],
                 lp["ln2_g"], lp["ln2_b"]]
    flat += [params["out_wt"], params["out_b"]]

    def _const_spec(a):
        nd = a.ndim
        # Whole array as one block, same block every grid step -> stays VMEM-resident.
        return pl.BlockSpec(a.shape, lambda i, _nd=nd: (0,) * _nd)

    ff_chunk = 512 if M <= 128 else 256                     # vreg-pressure knob
    kernel = _make_kernel(BB, S, ff_chunk, use_bf16_ff)

    in_specs = [pl.BlockSpec((M, F), lambda i: (i, 0))] + [_const_spec(a) for a in flat]
    out_spec = pl.BlockSpec((M, 1), lambda i: (i, 0))

    out = pl.pallas_call(
        kernel,
        out_shape=jax.ShapeDtypeStruct((B_pad * S, 1), jnp.float32),
        grid=(nb,),
        in_specs=in_specs,
        out_specs=out_spec,
        compiler_params=pltpu.CompilerParams(
            dimension_semantics=("parallel",)),
    )(x2, *flat)

    out = out.reshape(B_pad, S, 1)[:B]                      # (B, S, 1)
    return jnp.transpose(out, (1, 0, 2))                    # (S, B, 1)


if __name__ == "__main__":
    key = jax.random.PRNGKey(0)
    pkey, xkey = jax.random.split(key)
    params = init_params(pkey)
    S, B = 8, 2
    x = jax.random.normal(xkey, (S, B, INPUT_SIZE), jnp.float32)
    fwd = jax.jit(pinn_forward)
    y = fwd(params, x)
    jax.block_until_ready(y)
    assert y.shape == (S, B, 1) and y.dtype == jnp.float32
    print("KERNEL_OK")
</pallas_src>

<mosaic_0001>
module attributes {stable_mosaic.version = 11 : i64} {
  func.func @kernel(%arg0: i32, %arg1: memref<8x8xf32, #tpu.memory_space<vmem>>, %arg2: memref<8x32xf32, #tpu.memory_space<vmem>>, %arg3: memref<1x32xf32, #tpu.memory_space<vmem>>, %arg4: memref<32x96xf32, #tpu.memory_space<vmem>>, %arg5: memref<1x96xf32, #tpu.memory_space<vmem>>, %arg6: memref<32x32xf32, #tpu.memory_space<vmem>>, %arg7: memref<1x32xf32, #tpu.memory_space<vmem>>, %arg8: memref<1x32xf32, #tpu.memory_space<vmem>>, %arg9: memref<1x32xf32, #tpu.memory_space<vmem>>, %arg10: memref<32x2048xf32, #tpu.memory_space<vmem>>, %arg11: memref<1x2048xf32, #tpu.memory_space<vmem>>, %arg12: memref<2048x32xf32, #tpu.memory_space<vmem>>, %arg13: memref<1x32xf32, #tpu.memory_space<vmem>>, %arg14: memref<1x32xf32, #tpu.memory_space<vmem>>, %arg15: memref<1x32xf32, #tpu.memory_space<vmem>>, %arg16: memref<32x96xf32, #tpu.memory_space<vmem>>, %arg17: memref<1x96xf32, #tpu.memory_space<vmem>>, %arg18: memref<32x32xf32, #tpu.memory_space<vmem>>, %arg19: memref<1x32xf32, #tpu.memory_space<vmem>>, %arg20: memref<1x32xf32, #tpu.memory_space<vmem>>, %arg21: memref<1x32xf32, #tpu.memory_space<vmem>>, %arg22: memref<32x2048xf32, #tpu.memory_space<vmem>>, %arg23: memref<1x2048xf32, #tpu.memory_space<vmem>>, %arg24: memref<2048x32xf32, #tpu.memory_space<vmem>>, %arg25: memref<1x32xf32, #tpu.memory_space<vmem>>, %arg26: memref<1x32xf32, #tpu.memory_space<vmem>>, %arg27: memref<1x32xf32, #tpu.memory_space<vmem>>, %arg28: memref<1x32xf32, #tpu.memory_space<vmem>>, %arg29: memref<1x1xf32, #tpu.memory_space<vmem>>, %arg30: memref<8x1xf32, #tpu.memory_space<vmem>>) attributes {dimension_semantics = [#tpu.dimension_semantics<parallel>], iteration_bounds = array<i64: 2>, scalar_prefetch = 0 : i64, scratch_operands = 0 : i64, tpu.core_type = #tpu.core_type<tc>, window_params = [{transform_indices = @transform_0, window_bounds = array<i64: 8, 8>}, {pipeline_mode = #tpu.pipeline_mode<synchronous>, transform_indices = @transform_1, window_bounds = array<i64: 8, 32>}, {pipeline_mode = #tpu.pipeline_mode<synchronous>, transform_indices = @transform_2, window_bounds = array<i64: 1, 32>}, {pipeline_mode = #tpu.pipeline_mode<synchronous>, transform_indices = @transform_3, window_bounds = array<i64: 32, 96>}, {pipeline_mode = #tpu.pipeline_mode<synchronous>, transform_indices = @transform_4, window_bounds = array<i64: 1, 96>}, {pipeline_mode = #tpu.pipeline_mode<synchronous>, transform_indices = @transform_5, window_bounds = array<i64: 32, 32>}, {pipeline_mode = #tpu.pipeline_mode<synchronous>, transform_indices = @transform_6, window_bounds = array<i64: 1, 32>}, {pipeline_mode = #tpu.pipeline_mode<synchronous>, transform_indices = @transform_7, window_bounds = array<i64: 1, 32>}, {pipeline_mode = #tpu.pipeline_mode<synchronous>, transform_indices = @transform_8, window_bounds = array<i64: 1, 32>}, {pipeline_mode = #tpu.pipeline_mode<synchronous>, transform_indices = @transform_9, window_bounds = array<i64: 32, 2048>}, {pipeline_mode = #tpu.pipeline_mode<synchronous>, transform_indices = @transform_10, window_bounds = array<i64: 1, 2048>}, {pipeline_mode = #tpu.pipeline_mode<synchronous>, transform_indices = @transform_11, window_bounds = array<i64: 2048, 32>}, {pipeline_mode = #tpu.pipeline_mode<synchronous>, transform_indices = @transform_12, window_bounds = array<i64: 1, 32>}, {pipeline_mode = #tpu.pipeline_mode<synchronous>, transform_indices = @transform_13, window_bounds = array<i64: 1, 32>}, {pipeline_mode = #tpu.pipeline_mode<synchronous>, transform_indices = @transform_14, window_bounds = array<i64: 1, 32>}, {pipeline_mode = #tpu.pipeline_mode<synchronous>, transform_indices = @transform_15, window_bounds = array<i64: 32, 96>}, {pipeline_mode = #tpu.pipeline_mode<synchronous>, transform_indices = @transform_16, window_bounds = array<i64: 1, 96>}, {pipeline_mode = #tpu.pipeline_mode<synchronous>, transform_indices = @transform_17, window_bounds = array<i64: 32, 32>}, {pipeline_mode = #tpu.pipeline_mode<synchronous>, transform_indices = @transform_18, window_bounds = array<i64: 1, 32>}, {pipeline_mode = #tpu.pipeline_mode<synchronous>, transform_indices = @transform_19, window_bounds = array<i64: 1, 32>}, {pipeline_mode = #tpu.pipeline_mode<synchronous>, transform_indices = @transform_20, window_bounds = array<i64: 1, 32>}, {pipeline_mode = #tpu.pipeline_mode<synchronous>, transform_indices = @transform_21, window_bounds = array<i64: 32, 2048>}, {pipeline_mode = #tpu.pipeline_mode<synchronous>, transform_indices = @transform_22, window_bounds = array<i64: 1, 2048>}, {pipeline_mode = #tpu.pipeline_mode<synchronous>, transform_indices = @transform_23, window_bounds = array<i64: 2048, 32>}, {pipeline_mode = #tpu.pipeline_mode<synchronous>, transform_indices = @transform_24, window_bounds = array<i64: 1, 32>}, {pipeline_mode = #tpu.pipeline_mode<synchronous>, transform_indices = @transform_25, window_bounds = array<i64: 1, 32>}, {pipeline_mode = #tpu.pipeline_mode<synchronous>, transform_indices = @transform_26, window_bounds = array<i64: 1, 32>}, {pipeline_mode = #tpu.pipeline_mode<synchronous>, transform_indices = @transform_27, window_bounds = array<i64: 1, 32>}, {pipeline_mode = #tpu.pipeline_mode<synchronous>, transform_indices = @transform_28, window_bounds = array<i64: 1, 1>}, {transform_indices = @transform_29, window_bounds = array<i64: 8, 1>}]} {
    %c0 = arith.constant 0 : index
    %c0_0 = arith.constant 0 : index
    %0 = vector.load %arg1[%c0, %c0_0] : memref<8x8xf32, #tpu.memory_space<vmem>>, vector<8x8xf32>
    %c0_1 = arith.constant 0 : index
    %c0_2 = arith.constant 0 : index
    %1 = vector.load %arg2[%c0_1, %c0_2] : memref<8x32xf32, #tpu.memory_space<vmem>>, vector<8x32xf32>
    %cst = arith.constant dense<0.000000e+00> : vector<8x32xf32>
    %2 = tpu.matmul %0, %1, %cst {dimension_numbers = #tpu.dot_dimension_numbers<[1], [0], [0], [1], [0, 0, 1, 1], [], []>} : vector<8x8xf32>, vector<8x32xf32>, vector<8x32xf32> -> vector<8x32xf32>
    %c0_3 = arith.constant 0 : index
    %c0_4 = arith.constant 0 : index
    %3 = vector.load %arg3[%c0_3, %c0_4] : memref<1x32xf32, #tpu.memory_space<vmem>>, vector<1x32xf32>
    %4 = vector.broadcast %3 : vector<1x32xf32> to vector<8x32xf32>
    %5 = arith.addf %2, %4 : vector<8x32xf32>
    %c0_5 = arith.constant 0 : index
    %c0_6 = arith.constant 0 : index
    %6 = vector.load %arg4[%c0_5, %c0_6] : memref<32x96xf32, #tpu.memory_space<vmem>>, vector<32x96xf32>
    %cst_7 = arith.constant dense<0.000000e+00> : vector<8x96xf32>
    %7 = tpu.matmul %5, %6, %cst_7 {dimension_numbers = #tpu.dot_dimension_numbers<[1], [0], [0], [1], [0, 0, 1, 1], [], []>} : vector<8x32xf32>, vector<32x96xf32>, vector<8x96xf32> -> vector<8x96xf32>
    %c0_8 = arith.constant 0 : index
    %c0_9 = arith.constant 0 : index
    %8 = vector.load %arg5[%c0_8, %c0_9] : memref<1x96xf32, #tpu.memory_space<vmem>>, vector<1x96xf32>
    %9 = vector.broadcast %8 : vector<1x96xf32> to vector<8x96xf32>
    %10 = arith.addf %7, %9 : vector<8x96xf32>
    %11 = vector.extract_strided_slice %10 {offsets = [0, 0], sizes = [8, 32], strides = [1, 1]} : vector<8x96xf32> to vector<8x32xf32>
    %12 = vector.shape_cast %11 : vector<8x32xf32> to vector<1x8x32xf32>
    %13 = vector.extract_strided_slice %10 {offsets = [0, 32], sizes = [8, 32], strides = [1, 1]} : vector<8x96xf32> to vector<8x32xf32>
    %14 = vector.shape_cast %13 : vector<8x32xf32> to vector<1x8x32xf32>
    %15 = vector.extract_strided_slice %10 {offsets = [0, 64], sizes = [8, 32], strides = [1, 1]} : vector<8x96xf32> to vector<8x32xf32>
    %16 = vector.shape_cast %15 : vector<8x32xf32> to vector<1x8x32xf32>
    %17 = vector.extract_strided_slice %12 {offsets = [0, 0, 0], sizes = [1, 8, 8], strides = [1, 1, 1]} : vector<1x8x32xf32> to vector<1x8x8xf32>
    %cst_10 = arith.constant 0.353553385 : f32
    %18 = vector.broadcast %cst_10 : f32 to vector<1x8x8xf32>
    %19 = arith.mulf %17, %18 : vector<1x8x8xf32>
    %20 = vector.extract_strided_slice %14 {offsets = [0, 0, 0], sizes = [1, 8, 8], strides = [1, 1, 1]} : vector<1x8x32xf32> to vector<1x8x8xf32>
    %21 = vector.extract_strided_slice %16 {offsets = [0, 0, 0], sizes = [1, 8, 8], strides = [1, 1, 1]} : vector<1x8x32xf32> to vector<1x8x8xf32>
    "tpu.trace_start"() <{level = 10 : i32, message = "bqd,bkd->bqk"}> : () -> ()
    %cst_11 = arith.constant dense<0.000000e+00> : vector<1x8x8xf32>
    %22 = tpu.matmul %19, %20, %cst_11 {dimension_numbers = #tpu.dot_dimension_numbers<[2], [2], [1], [1], [0, 0, 0, 1, 1, 1], [0], [0]>} : vector<1x8x8xf32>, vector<1x8x8xf32>, vector<1x8x8xf32> -> vector<1x8x8xf32>
    "tpu.trace_stop"() : () -> ()
    %cst_12 = arith.constant dense<0xFF800000> : vector<1x8xf32>
    %23 = vector.multi_reduction <maximumf>, %22, %cst_12 [2] : vector<1x8x8xf32> to vector<1x8xf32>
    %24 = vector.shape_cast %23 : vector<1x8xf32> to vector<1x8x1xf32>
    %25 = vector.broadcast %24 : vector<1x8x1xf32> to vector<1x8x8xf32>
    %26 = arith.subf %22, %25 : vector<1x8x8xf32>
    %27 = math.exp %26 : vector<1x8x8xf32>
    %cst_13 = arith.constant dense<0.000000e+00> : vector<1x8xf32>
    %28 = vector.multi_reduction <add>, %27, %cst_13 [2] : vector<1x8x8xf32> to vector<1x8xf32>
    %29 = vector.shape_cast %28 : vector<1x8xf32> to vector<1x8x1xf32>
    %30 = vector.broadcast %29 : vector<1x8x1xf32> to vector<1x8x8xf32>
    %31 = arith.divf %27, %30 : vector<1x8x8xf32>
    "tpu.trace_start"() <{level = 10 : i32, message = "bqk,bkd->bqd"}> : () -> ()
    %cst_14 = arith.constant dense<0.000000e+00> : vector<1x8x8xf32>
    %32 = tpu.matmul %31, %21, %cst_14 {dimension_numbers = #tpu.dot_dimension_numbers<[2], [1], [1], [2], [0, 0, 0, 1, 1, 2], [0], [0]>} : vector<1x8x8xf32>, vector<1x8x8xf32>, vector<1x8x8xf32> -> vector<1x8x8xf32>
    "tpu.trace_stop"() : () -> ()
    %33 = vector.shape_cast %32 : vector<1x8x8xf32> to vector<8x8xf32>
    %34 = vector.extract_strided_slice %12 {offsets = [0, 0, 8], sizes = [1, 8, 8], strides = [1, 1, 1]} : vector<1x8x32xf32> to vector<1x8x8xf32>
    %cst_15 = arith.constant 0.353553385 : f32
    %35 = vector.broadcast %cst_15 : f32 to vector<1x8x8xf32>
    %36 = arith.mulf %34, %35 : vector<1x8x8xf32>
    %37 = vector.extract_strided_slice %14 {offsets = [0, 0, 8], sizes = [1, 8, 8], strides = [1, 1, 1]} : vector<1x8x32xf32> to vector<1x8x8xf32>
    %38 = vector.extract_strided_slice %16 {offsets = [0, 0, 8], sizes = [1, 8, 8], strides = [1, 1, 1]} : vector<1x8x32xf32> to vector<1x8x8xf32>
    "tpu.trace_start"() <{level = 10 : i32, message = "bqd,bkd->bqk"}> : () -> ()
    %cst_16 = arith.constant dense<0.000000e+00> : vector<1x8x8xf32>
    %39 = tpu.matmul %36, %37, %cst_16 {dimension_numbers = #tpu.dot_dimension_numbers<[2], [2], [1], [1], [0, 0, 0, 1, 1, 1], [0], [0]>} : vector<1x8x8xf32>, vector<1x8x8xf32>, vector<1x8x8xf32> -> vector<1x8x8xf32>
    "tpu.trace_stop"() : () -> ()
    %cst_17 = arith.constant dense<0xFF800000> : vector<1x8xf32>
    %40 = vector.multi_reduction <maximumf>, %39, %cst_17 [2] : vector<1x8x8xf32> to vector<1x8xf32>
    %41 = vector.shape_cast %40 : vector<1x8xf32> to vector<1x8x1xf32>
    %42 = vector.broadcast %41 : vector<1x8x1xf32> to vector<1x8x8xf32>
    %43 = arith.subf %39, %42 : vector<1x8x8xf32>
    %44 = math.exp %43 : vector<1x8x8xf32>
    %cst_18 = arith.constant dense<0.000000e+00> : vector<1x8xf32>
    %45 = vector.multi_reduction <add>, %44, %cst_18 [2] : vector<1x8x8xf32> to vector<1x8xf32>
    %46 = vector.shape_cast %45 : vector<1x8xf32> to vector<1x8x1xf32>
    %47 = vector.broadcast %46 : vector<1x8x1xf32> to vector<1x8x8xf32>
    %48 = arith.divf %44, %47 : vector<1x8x8xf32>
    "tpu.trace_start"() <{level = 10 : i32, message = "bqk,bkd->bqd"}> : () -> ()
    %cst_19 = arith.constant dense<0.000000e+00> : vector<1x8x8xf32>
    %49 = tpu.matmul %48, %38, %cst_19 {dimension_numbers = #tpu.dot_dimension_numbers<[2], [1], [1], [2], [0, 0, 0, 1, 1, 2], [0], [0]>} : vector<1x8x8xf32>, vector<1x8x8xf32>, vector<1x8x8xf32> -> vector<1x8x8xf32>
    "tpu.trace_stop"() : () -> ()
    %50 = vector.shape_cast %49 : vector<1x8x8xf32> to vector<8x8xf32>
    %51 = vector.extract_strided_slice %12 {offsets = [0, 0, 16], sizes = [1, 8, 8], strides = [1, 1, 1]} : vector<1x8x32xf32> to vector<1x8x8xf32>
    %cst_20 = arith.constant 0.353553385 : f32
    %52 = vector.broadcast %cst_20 : f32 to vector<1x8x8xf32>
    %53 = arith.mulf %51, %52 : vector<1x8x8xf32>
    %54 = vector.extract_strided_slice %14 {offsets = [0, 0, 16], sizes = [1, 8, 8], strides = [1, 1, 1]} : vector<1x8x32xf32> to vector<1x8x8xf32>
    %55 = vector.extract_strided_slice %16 {offsets = [0, 0, 16], sizes = [1, 8, 8], strides = [1, 1, 1]} : vector<1x8x32xf32> to vector<1x8x8xf32>
    "tpu.trace_start"() <{level = 10 : i32, message = "bqd,bkd->bqk"}> : () -> ()
    %cst_21 = arith.constant dense<0.000000e+00> : vector<1x8x8xf32>
    %56 = tpu.matmul %53, %54, %cst_21 {dimension_numbers = #tpu.dot_dimension_numbers<[2], [2], [1], [1], [0, 0, 0, 1, 1, 1], [0], [0]>} : vector<1x8x8xf32>, vector<1x8x8xf32>, vector<1x8x8xf32> -> vector<1x8x8xf32>
    "tpu.trace_stop"() : () -> ()
    %cst_22 = arith.constant dense<0xFF800000> : vector<1x8xf32>
    %57 = vector.multi_reduction <maximumf>, %56, %cst_22 [2] : vector<1x8x8xf32> to vector<1x8xf32>
    %58 = vector.shape_cast %57 : vector<1x8xf32> to vector<1x8x1xf32>
    %59 = vector.broadcast %58 : vector<1x8x1xf32> to vector<1x8x8xf32>
    %60 = arith.subf %56, %59 : vector<1x8x8xf32>
    %61 = math.exp %60 : vector<1x8x8xf32>
    %cst_23 = arith.constant dense<0.000000e+00> : vector<1x8xf32>
    %62 = vector.multi_reduction <add>, %61, %cst_23 [2] : vector<1x8x8xf32> to vector<1x8xf32>
    %63 = vector.shape_cast %62 : vector<1x8xf32> to vector<1x8x1xf32>
    %64 = vector.broadcast %63 : vector<1x8x1xf32> to vector<1x8x8xf32>
    %65 = arith.divf %61, %64 : vector<1x8x8xf32>
    "tpu.trace_start"() <{level = 10 : i32, message = "bqk,bkd->bqd"}> : () -> ()
    %cst_24 = arith.constant dense<0.000000e+00> : vector<1x8x8xf32>
    %66 = tpu.matmul %65, %55, %cst_24 {dimension_numbers = #tpu.dot_dimension_numbers<[2], [1], [1], [2], [0, 0, 0, 1, 1, 2], [0], [0]>} : vector<1x8x8xf32>, vector<1x8x8xf32>, vector<1x8x8xf32> -> vector<1x8x8xf32>
    "tpu.trace_stop"() : () -> ()
    %67 = vector.shape_cast %66 : vector<1x8x8xf32> to vector<8x8xf32>
    %68 = vector.extract_strided_slice %12 {offsets = [0, 0, 24], sizes = [1, 8, 8], strides = [1, 1, 1]} : vector<1x8x32xf32> to vector<1x8x8xf32>
    %cst_25 = arith.constant 0.353553385 : f32
    %69 = vector.broadcast %cst_25 : f32 to vector<1x8x8xf32>
    %70 = arith.mulf %68, %69 : vector<1x8x8xf32>
    %71 = vector.extract_strided_slice %14 {offsets = [0, 0, 24], sizes = [1, 8, 8], strides = [1, 1, 1]} : vector<1x8x32xf32> to vector<1x8x8xf32>
    %72 = vector.extract_strided_slice %16 {offsets = [0, 0, 24], sizes = [1, 8, 8], strides = [1, 1, 1]} : vector<1x8x32xf32> to vector<1x8x8xf32>
    "tpu.trace_start"() <{level = 10 : i32, message = "bqd,bkd->bqk"}> : () -> ()
    %cst_26 = arith.constant dense<0.000000e+00> : vector<1x8x8xf32>
    %73 = tpu.matmul %70, %71, %cst_26 {dimension_numbers = #tpu.dot_dimension_numbers<[2], [2], [1], [1], [0, 0, 0, 1, 1, 1], [0], [0]>} : vector<1x8x8xf32>, vector<1x8x8xf32>, vector<1x8x8xf32> -> vector<1x8x8xf32>
    "tpu.trace_stop"() : () -> ()
    %cst_27 = arith.constant dense<0xFF800000> : vector<1x8xf32>
    %74 = vector.multi_reduction <maximumf>, %73, %cst_27 [2] : vector<1x8x8xf32> to vector<1x8xf32>
    %75 = vector.shape_cast %74 : vector<1x8xf32> to vector<1x8x1xf32>
    %76 = vector.broadcast %75 : vector<1x8x1xf32> to vector<1x8x8xf32>
    %77 = arith.subf %73, %76 : vector<1x8x8xf32>
    %78 = math.exp %77 : vector<1x8x8xf32>
    %cst_28 = arith.constant dense<0.000000e+00> : vector<1x8xf32>
    %79 = vector.multi_reduction <add>, %78, %cst_28 [2] : vector<1x8x8xf32> to vector<1x8xf32>
    %80 = vector.shape_cast %79 : vector<1x8xf32> to vector<1x8x1xf32>
    %81 = vector.broadcast %80 : vector<1x8x1xf32> to vector<1x8x8xf32>
    %82 = arith.divf %78, %81 : vector<1x8x8xf32>
    "tpu.trace_start"() <{level = 10 : i32, message = "bqk,bkd->bqd"}> : () -> ()
    %cst_29 = arith.constant dense<0.000000e+00> : vector<1x8x8xf32>
    %83 = tpu.matmul %82, %72, %cst_29 {dimension_numbers = #tpu.dot_dimension_numbers<[2], [1], [1], [2], [0, 0, 0, 1, 1, 2], [0], [0]>} : vector<1x8x8xf32>, vector<1x8x8xf32>, vector<1x8x8xf32> -> vector<1x8x8xf32>
    "tpu.trace_stop"() : () -> ()
    %84 = vector.shape_cast %83 : vector<1x8x8xf32> to vector<8x8xf32>
    %85 = tpu.concatenate %33, %50, %67, %84 in 1 : vector<8x8xf32>, vector<8x8xf32>, vector<8x8xf32>, vector<8x8xf32> -> vector<8x32xf32>
    %c0_30 = arith.constant 0 : index
    %c0_31 = arith.constant 0 : index
    %86 = vector.load %arg6[%c0_30, %c0_31] : memref<32x32xf32, #tpu.memory_space<vmem>>, vector<32x32xf32>
    %cst_32 = arith.constant dense<0.000000e+00> : vector<8x32xf32>
    %87 = tpu.matmul %85, %86, %cst_32 {dimension_numbers = #tpu.dot_dimension_numbers<[1], [0], [0], [1], [0, 0, 1, 1], [], []>} : vector<8x32xf32>, vector<32x32xf32>, vector<8x32xf32> -> vector<8x32xf32>
    %c0_33 = arith.constant 0 : index
    %c0_34 = arith.constant 0 : index
    %88 = vector.load %arg7[%c0_33, %c0_34] : memref<1x32xf32, #tpu.memory_space<vmem>>, vector<1x32xf32>
    %89 = vector.broadcast %88 : vector<1x32xf32> to vector<8x32xf32>
    %90 = arith.addf %87, %89 : vector<8x32xf32>
    %91 = arith.addf %5, %90 : vector<8x32xf32>
    %c0_35 = arith.constant 0 : index
    %c0_36 = arith.constant 0 : index
    %92 = vector.load %arg8[%c0_35, %c0_36] : memref<1x32xf32, #tpu.memory_space<vmem>>, vector<1x32xf32>
    %c0_37 = arith.constant 0 : index
    %c0_38 = arith.constant 0 : index
    %93 = vector.load %arg9[%c0_37, %c0_38] : memref<1x32xf32, #tpu.memory_space<vmem>>, vector<1x32xf32>
    %cst_39 = arith.constant dense<0.000000e+00> : vector<8xf32>
    %94 = vector.multi_reduction <add>, %91, %cst_39 [1] : vector<8x32xf32> to vector<8xf32>
    %95 = vector.shape_cast %94 : vector<8xf32> to vector<8x1xf32>
    %cst_40 = arith.constant 3.200000e+01 : f32
    %96 = vector.broadcast %cst_40 : f32 to vector<8x1xf32>
    %97 = arith.divf %95, %96 : vector<8x1xf32>
    %98 = vector.broadcast %97 : vector<8x1xf32> to vector<8x32xf32>
    %99 = arith.subf %91, %98 : vector<8x32xf32>
    %100 = arith.mulf %99, %99 : vector<8x32xf32>
    %cst_41 = arith.constant dense<0.000000e+00> : vector<8xf32>
    %101 = vector.multi_reduction <add>, %100, %cst_41 [1] : vector<8x32xf32> to vector<8xf32>
    %102 = vector.shape_cast %101 : vector<8xf32> to vector<8x1xf32>
    %cst_42 = arith.constant 3.200000e+01 : f32
    %103 = vector.broadcast %cst_42 : f32 to vector<8x1xf32>
    %104 = arith.divf %102, %103 : vector<8x1xf32>
    %cst_43 = arith.constant 9.99999974E-6 : f32
    %105 = vector.broadcast %cst_43 : f32 to vector<8x1xf32>
    %106 = arith.addf %104, %105 : vector<8x1xf32>
    %107 = math.rsqrt %106 : vector<8x1xf32>
    %108 = vector.broadcast %107 : vector<8x1xf32> to vector<8x32xf32>
    %109 = arith.mulf %99, %108 : vector<8x32xf32>
    %110 = vector.broadcast %92 : vector<1x32xf32> to vector<8x32xf32>
    %111 = arith.mulf %109, %110 : vector<8x32xf32>
    %112 = vector.broadcast %93 : vector<1x32xf32> to vector<8x32xf32>
    %113 = arith.addf %111, %112 : vector<8x32xf32>
    %cst_44 = arith.constant 0.000000e+00 : f32
    %114 = vector.broadcast %cst_44 : f32 to vector<8x32xf32>
    %c0_45 = arith.constant 0 : index
    %c0_46 = arith.constant 0 : index
    %115 = vector.load %arg10[%c0_45, %c0_46] : memref<32x2048xf32, #tpu.memory_space<vmem>>, vector<32x512xf32>
    %c0_47 = arith.constant 0 : index
    %c0_48 = arith.constant 0 : index
    %116 = vector.load %arg11[%c0_47, %c0_48] : memref<1x2048xf32, #tpu.memory_space<vmem>>, vector<1x512xf32>
    %c0_49 = arith.constant 0 : index
    %c0_50 = arith.constant 0 : index
    %117 = vector.load %arg12[%c0_49, %c0_50] : memref<2048x32xf32, #tpu.memory_space<vmem>>, vector<512x32xf32>
    %cst_51 = arith.constant dense<0.000000e+00> : vector<8x512xf32>
    %118 = tpu.matmul %113, %115, %cst_51 {dimension_numbers = #tpu.dot_dimension_numbers<[1], [0], [0], [1], [0, 0, 1, 1], [], []>} : vector<8x32xf32>, vector<32x512xf32>, vector<8x512xf32> -> vector<8x512xf32>
    %119 = vector.broadcast %116 : vector<1x512xf32> to vector<8x512xf32>
    %120 = arith.addf %118, %119 : vector<8x512xf32>
    %cst_52 = arith.constant 0.000000e+00 : f32
    %121 = vector.broadcast %cst_52 : f32 to vector<8x512xf32>
    %122 = arith.maximumf %120, %121 : vector<8x512xf32>
    %cst_53 = arith.constant dense<0.000000e+00> : vector<8x32xf32>
    %123 = tpu.matmul %122, %117, %cst_53 {dimension_numbers = #tpu.dot_dimension_numbers<[1], [0], [0], [1], [0, 0, 1, 1], [], []>} : vector<8x512xf32>, vector<512x32xf32>, vector<8x32xf32> -> vector<8x32xf32>
    %124 = arith.addf %114, %123 : vector<8x32xf32>
    %c0_54 = arith.constant 0 : index
    %c512 = arith.constant 512 : index
    %125 = vector.load %arg10[%c0_54, %c512] : memref<32x2048xf32, #tpu.memory_space<vmem>>, vector<32x512xf32>
    %c0_55 = arith.constant 0 : index
    %c512_56 = arith.constant 512 : index
    %126 = vector.load %arg11[%c0_55, %c512_56] : memref<1x2048xf32, #tpu.memory_space<vmem>>, vector<1x512xf32>
    %c512_57 = arith.constant 512 : index
    %c0_58 = arith.constant 0 : index
    %127 = vector.load %arg12[%c512_57, %c0_58] : memref<2048x32xf32, #tpu.memory_space<vmem>>, vector<512x32xf32>
    %cst_59 = arith.constant dense<0.000000e+00> : vector<8x512xf32>
    %128 = tpu.matmul %113, %125, %cst_59 {dimension_numbers = #tpu.dot_dimension_numbers<[1], [0], [0], [1], [0, 0, 1, 1], [], []>} : vector<8x32xf32>, vector<32x512xf32>, vector<8x512xf32> -> vector<8x512xf32>
    %129 = vector.broadcast %126 : vector<1x512xf32> to vector<8x512xf32>
    %130 = arith.addf %128, %129 : vector<8x512xf32>
    %cst_60 = arith.constant 0.000000e+00 : f32
    %131 = vector.broadcast %cst_60 : f32 to vector<8x512xf32>
    %132 = arith.maximumf %130, %131 : vector<8x512xf32>
    %cst_61 = arith.constant dense<0.000000e+00> : vector<8x32xf32>
    %133 = tpu.matmul %132, %127, %cst_61 {dimension_numbers = #tpu.dot_dimension_numbers<[1], [0], [0], [1], [0, 0, 1, 1], [], []>} : vector<8x512xf32>, vector<512x32xf32>, vector<8x32xf32> -> vector<8x32xf32>
    %134 = arith.addf %124, %133 : vector<8x32xf32>
    %c0_62 = arith.constant 0 : index
    %c1024 = arith.constant 1024 : index
    %135 = vector.load %arg10[%c0_62, %c1024] : memref<32x2048xf32, #tpu.memory_space<vmem>>, vector<32x512xf32>
    %c0_63 = arith.constant 0 : index
    %c1024_64 = arith.constant 1024 : index
    %136 = vector.load %arg11[%c0_63, %c1024_64] : memref<1x2048xf32, #tpu.memory_space<vmem>>, vector<1x512xf32>
    %c1024_65 = arith.constant 1024 : index
    %c0_66 = arith.constant 0 : index
    %137 = vector.load %arg12[%c1024_65, %c0_66] : memref<2048x32xf32, #tpu.memory_space<vmem>>, vector<512x32xf32>
    %cst_67 = arith.constant dense<0.000000e+00> : vector<8x512xf32>
    %138 = tpu.matmul %113, %135, %cst_67 {dimension_numbers = #tpu.dot_dimension_numbers<[1], [0], [0], [1], [0, 0, 1, 1], [], []>} : vector<8x32xf32>, vector<32x512xf32>, vector<8x512xf32> -> vector<8x512xf32>
    %139 = vector.broadcast %136 : vector<1x512xf32> to vector<8x512xf32>
    %140 = arith.addf %138, %139 : vector<8x512xf32>
    %cst_68 = arith.constant 0.000000e+00 : f32
    %141 = vector.broadcast %cst_68 : f32 to vector<8x512xf32>
    %142 = arith.maximumf %140, %141 : vector<8x512xf32>
    %cst_69 = arith.constant dense<0.000000e+00> : vector<8x32xf32>
    %143 = tpu.matmul %142, %137, %cst_69 {dimension_numbers = #tpu.dot_dimension_numbers<[1], [0], [0], [1], [0, 0, 1, 1], [], []>} : vector<8x512xf32>, vector<512x32xf32>, vector<8x32xf32> -> vector<8x32xf32>
    %144 = arith.addf %134, %143 : vector<8x32xf32>
    %c0_70 = arith.constant 0 : index
    %c1536 = arith.constant 1536 : index
    %145 = vector.load %arg10[%c0_70, %c1536] : memref<32x2048xf32, #tpu.memory_space<vmem>>, vector<32x512xf32>
    %c0_71 = arith.constant 0 : index
    %c1536_72 = arith.constant 1536 : index
    %146 = vector.load %arg11[%c0_71, %c1536_72] : memref<1x2048xf32, #tpu.memory_space<vmem>>, vector<1x512xf32>
    %c1536_73 = arith.constant 1536 : index
    %c0_74 = arith.constant 0 : index
    %147 = vector.load %arg12[%c1536_73, %c0_74] : memref<2048x32xf32, #tpu.memory_space<vmem>>, vector<512x32xf32>
    %cst_75 = arith.constant dense<0.000000e+00> : vector<8x512xf32>
    %148 = tpu.matmul %113, %145, %cst_75 {dimension_numbers = #tpu.dot_dimension_numbers<[1], [0], [0], [1], [0, 0, 1, 1], [], []>} : vector<8x32xf32>, vector<32x512xf32>, vector<8x512xf32> -> vector<8x512xf32>
    %149 = vector.broadcast %146 : vector<1x512xf32> to vector<8x512xf32>
    %150 = arith.addf %148, %149 : vector<8x512xf32>
    %cst_76 = arith.constant 0.000000e+00 : f32
    %151 = vector.broadcast %cst_76 : f32 to vector<8x512xf32>
    %152 = arith.maximumf %150, %151 : vector<8x512xf32>
    %cst_77 = arith.constant dense<0.000000e+00> : vector<8x32xf32>
    %153 = tpu.matmul %152, %147, %cst_77 {dimension_numbers = #tpu.dot_dimension_numbers<[1], [0], [0], [1], [0, 0, 1, 1], [], []>} : vector<8x512xf32>, vector<512x32xf32>, vector<8x32xf32> -> vector<8x32xf32>
    %154 = arith.addf %144, %153 : vector<8x32xf32>
    %c0_78 = arith.constant 0 : index
    %c0_79 = arith.constant 0 : index
    %155 = vector.load %arg13[%c0_78, %c0_79] : memref<1x32xf32, #tpu.memory_space<vmem>>, vector<1x32xf32>
    %156 = vector.broadcast %155 : vector<1x32xf32> to vector<8x32xf32>
    %157 = arith.addf %154, %156 : vector<8x32xf32>
    %158 = arith.addf %113, %157 : vector<8x32xf32>
    %c0_80 = arith.constant 0 : index
    %c0_81 = arith.constant 0 : index
    %159 = vector.load %arg14[%c0_80, %c0_81] : memref<1x32xf32, #tpu.memory_space<vmem>>, vector<1x32xf32>
    %c0_82 = arith.constant 0 : index
    %c0_83 = arith.constant 0 : index
    %160 = vector.load %arg15[%c0_82, %c0_83] : memref<1x32xf32, #tpu.memory_space<vmem>>, vector<1x32xf32>
    %cst_84 = arith.constant dense<0.000000e+00> : vector<8xf32>
    %161 = vector.multi_reduction <add>, %158, %cst_84 [1] : vector<8x32xf32> to vector<8xf32>
    %162 = vector.shape_cast %161 : vector<8xf32> to vector<8x1xf32>
    %cst_85 = arith.constant 3.200000e+01 : f32
    %163 = vector.broadcast %cst_85 : f32 to vector<8x1xf32>
    %164 = arith.divf %162, %163 : vector<8x1xf32>
    %165 = vector.broadcast %164 : vector<8x1xf32> to vector<8x32xf32>
    %166 = arith.subf %158, %165 : vector<8x32xf32>
    %167 = arith.mulf %166, %166 : vector<8x32xf32>
    %cst_86 = arith.constant dense<0.000000e+00> : vector<8xf32>
    %168 = vector.multi_reduction <add>, %167, %cst_86 [1] : vector<8x32xf32> to vector<8xf32>
    %169 = vector.shape_cast %168 : vector<8xf32> to vector<8x1xf32>
    %cst_87 = arith.constant 3.200000e+01 : f32
    %170 = vector.broadcast %cst_87 : f32 to vector<8x1xf32>
    %171 = arith.divf %169, %170 : vector<8x1xf32>
    %cst_88 = arith.constant 9.99999974E-6 : f32
    %172 = vector.broadcast %cst_88 : f32 to vector<8x1xf32>
    %173 = arith.addf %171, %172 : vector<8x1xf32>
    %174 = math.rsqrt %173 : vector<8x1xf32>
    %175 = vector.broadcast %174 : vector<8x1xf32> to vector<8x32xf32>
    %176 = arith.mulf %166, %175 : vector<8x32xf32>
    %177 = vector.broadcast %159 : vector<1x32xf32> to vector<8x32xf32>
    %178 = arith.mulf %176, %177 : vector<8x32xf32>
    %179 = vector.broadcast %160 : vector<1x32xf32> to vector<8x32xf32>
    %180 = arith.addf %178, %179 : vector<8x32xf32>
    %c0_89 = arith.constant 0 : index
    %c0_90 = arith.constant 0 : index
    %181 = vector.load %arg16[%c0_89, %c0_90] : memref<32x96xf32, #tpu.memory_space<vmem>>, vector<32x96xf32>
    %cst_91 = arith.constant dense<0.000000e+00> : vector<8x96xf32>
    %182 = tpu.matmul %180, %181, %cst_91 {dimension_numbers = #tpu.dot_dimension_numbers<[1], [0], [0], [1], [0, 0, 1, 1], [], []>} : vector<8x32xf32>, vector<32x96xf32>, vector<8x96xf32> -> vector<8x96xf32>
    %c0_92 = arith.constant 0 : index
    %c0_93 = arith.constant 0 : index
    %183 = vector.load %arg17[%c0_92, %c0_93] : memref<1x96xf32, #tpu.memory_space<vmem>>, vector<1x96xf32>
    %184 = vector.broadcast %183 : vector<1x96xf32> to vector<8x96xf32>
    %185 = arith.addf %182, %184 : vector<8x96xf32>
    %186 = vector.extract_strided_slice %185 {offsets = [0, 0], sizes = [8, 32], strides = [1, 1]} : vector<8x96xf32> to vector<8x32xf32>
    %187 = vector.shape_cast %186 : vector<8x32xf32> to vector<1x8x32xf32>
    %188 = vector.extract_strided_slice %185 {offsets = [0, 32], sizes = [8, 32], strides = [1, 1]} : vector<8x96xf32> to vector<8x32xf32>
    %189 = vector.shape_cast %188 : vector<8x32xf32> to vector<1x8x32xf32>
    %190 = vector.extract_strided_slice %185 {offsets = [0, 64], sizes = [8, 32], strides = [1, 1]} : vector<8x96xf32> to vector<8x32xf32>
    %191 = vector.shape_cast %190 : vector<8x32xf32> to vector<1x8x32xf32>
    %192 = vector.extract_strided_slice %187 {offsets = [0, 0, 0], sizes = [1, 8, 8], strides = [1, 1, 1]} : vector<1x8x32xf32> to vector<1x8x8xf32>
    %cst_94 = arith.constant 0.353553385 : f32
    %193 = vector.broadcast %cst_94 : f32 to vector<1x8x8xf32>
    %194 = arith.mulf %192, %193 : vector<1x8x8xf32>
    %195 = vector.extract_strided_slice %189 {offsets = [0, 0, 0], sizes = [1, 8, 8], strides = [1, 1, 1]} : vector<1x8x32xf32> to vector<1x8x8xf32>
    %196 = vector.extract_strided_slice %191 {offsets = [0, 0, 0], sizes = [1, 8, 8], strides = [1, 1, 1]} : vector<1x8x32xf32> to vector<1x8x8xf32>
    "tpu.trace_start"() <{level = 10 : i32, message = "bqd,bkd->bqk"}> : () -> ()
    %cst_95 = arith.constant dense<0.000000e+00> : vector<1x8x8xf32>
    %197 = tpu.matmul %194, %195, %cst_95 {dimension_numbers = #tpu.dot_dimension_numbers<[2], [2], [1], [1], [0, 0, 0, 1, 1, 1], [0], [0]>} : vector<1x8x8xf32>, vector<1x8x8xf32>, vector<1x8x8xf32> -> vector<1x8x8xf32>
    "tpu.trace_stop"() : () -> ()
    %cst_96 = arith.constant dense<0xFF800000> : vector<1x8xf32>
    %198 = vector.multi_reduction <maximumf>, %197, %cst_96 [2] : vector<1x8x8xf32> to vector<1x8xf32>
    %199 = vector.shape_cast %198 : vector<1x8xf32> to vector<1x8x1xf32>
    %200 = vector.broadcast %199 : vector<1x8x1xf32> to vector<1x8x8xf32>
    %201 = arith.subf %197, %200 : vector<1x8x8xf32>
    %202 = math.exp %201 : vector<1x8x8xf32>
    %cst_97 = arith.constant dense<0.000000e+00> : vector<1x8xf32>
    %203 = vector.multi_reduction <add>, %202, %cst_97 [2] : vector<1x8x8xf32> to vector<1x8xf32>
    %204 = vector.shape_cast %203 : vector<1x8xf32> to vector<1x8x1xf32>
    %205 = vector.broadcast %204 : vector<1x8x1xf32> to vector<1x8x8xf32>
    %206 = arith.divf %202, %205 : vector<1x8x8xf32>
    "tpu.trace_start"() <{level = 10 : i32, message = "bqk,bkd->bqd"}> : () -> ()
    %cst_98 = arith.constant dense<0.000000e+00> : vector<1x8x8xf32>
    %207 = tpu.matmul %206, %196, %cst_98 {dimension_numbers = #tpu.dot_dimension_numbers<[2], [1], [1], [2], [0, 0, 0, 1, 1, 2], [0], [0]>} : vector<1x8x8xf32>, vector<1x8x8xf32>, vector<1x8x8xf32> -> vector<1x8x8xf32>
    "tpu.trace_stop"() : () -> ()
    %208 = vector.shape_cast %207 : vector<1x8x8xf32> to vector<8x8xf32>
    %209 = vector.extract_strided_slice %187 {offsets = [0, 0, 8], sizes = [1, 8, 8], strides = [1, 1, 1]} : vector<1x8x32xf32> to vector<1x8x8xf32>
    %cst_99 = arith.constant 0.353553385 : f32
    %210 = vector.broadcast %cst_99 : f32 to vector<1x8x8xf32>
    %211 = arith.mulf %209, %210 : vector<1x8x8xf32>
    %212 = vector.extract_strided_slice %189 {offsets = [0, 0, 8], sizes = [1, 8, 8], strides = [1, 1, 1]} : vector<1x8x32xf32> to vector<1x8x8xf32>
    %213 = vector.extract_strided_slice %191 {offsets = [0, 0, 8], sizes = [1, 8, 8], strides = [1, 1, 1]} : vector<1x8x32xf32> to vector<1x8x8xf32>
    "tpu.trace_start"() <{level = 10 : i32, message = "bqd,bkd->bqk"}> : () -> ()
    %cst_100 = arith.constant dense<0.000000e+00> : vector<1x8x8xf32>
    %214 = tpu.matmul %211, %212, %cst_100 {dimension_numbers = #tpu.dot_dimension_numbers<[2], [2], [1], [1], [0, 0, 0, 1, 1, 1], [0], [0]>} : vector<1x8x8xf32>, vector<1x8x8xf32>, vector<1x8x8xf32> -> vector<1x8x8xf32>
    "tpu.trace_stop"() : () -> ()
    %cst_101 = arith.constant dense<0xFF800000> : vector<1x8xf32>
    %215 = vector.multi_reduction <maximumf>, %214, %cst_101 [2] : vector<1x8x8xf32> to vector<1x8xf32>
    %216 = vector.shape_cast %215 : vector<1x8xf32> to vector<1x8x1xf32>
    %217 = vector.broadcast %216 : vector<1x8x1xf32> to vector<1x8x8xf32>
    %218 = arith.subf %214, %217 : vector<1x8x8xf32>
    %219 = math.exp %218 : vector<1x8x8xf32>
    %cst_102 = arith.constant dense<0.000000e+00> : vector<1x8xf32>
    %220 = vector.multi_reduction <add>, %219, %cst_102 [2] : vector<1x8x8xf32> to vector<1x8xf32>
    %221 = vector.shape_cast %220 : vector<1x8xf32> to vector<1x8x1xf32>
    %222 = vector.broadcast %221 : vector<1x8x1xf32> to vector<1x8x8xf32>
    %223 = arith.divf %219, %222 : vector<1x8x8xf32>
    "tpu.trace_start"() <{level = 10 : i32, message = "bqk,bkd->bqd"}> : () -> ()
    %cst_103 = arith.constant dense<0.000000e+00> : vector<1x8x8xf32>
    %224 = tpu.matmul %223, %213, %cst_103 {dimension_numbers = #tpu.dot_dimension_numbers<[2], [1], [1], [2], [0, 0, 0, 1, 1, 2], [0], [0]>} : vector<1x8x8xf32>, vector<1x8x8xf32>, vector<1x8x8xf32> -> vector<1x8x8xf32>
    "tpu.trace_stop"() : () -> ()
    %225 = vector.shape_cast %224 : vector<1x8x8xf32> to vector<8x8xf32>
    %226 = vector.extract_strided_slice %187 {offsets = [0, 0, 16], sizes = [1, 8, 8], strides = [1, 1, 1]} : vector<1x8x32xf32> to vector<1x8x8xf32>
    %cst_104 = arith.constant 0.353553385 : f32
    %227 = vector.broadcast %cst_104 : f32 to vector<1x8x8xf32>
    %228 = arith.mulf %226, %227 : vector<1x8x8xf32>
    %229 = vector.extract_strided_slice %189 {offsets = [0, 0, 16], sizes = [1, 8, 8], strides = [1, 1, 1]} : vector<1x8x32xf32> to vector<1x8x8xf32>
    %230 = vector.extract_strided_slice %191 {offsets = [0, 0, 16], sizes = [1, 8, 8], strides = [1, 1, 1]} : vector<1x8x32xf32> to vector<1x8x8xf32>
    "tpu.trace_start"() <{level = 10 : i32, message = "bqd,bkd->bqk"}> : () -> ()
    %cst_105 = arith.constant dense<0.000000e+00> : vector<1x8x8xf32>
    %231 = tpu.matmul %228, %229, %cst_105 {dimension_numbers = #tpu.dot_dimension_numbers<[2], [2], [1], [1], [0, 0, 0, 1, 1, 1], [0], [0]>} : vector<1x8x8xf32>, vector<1x8x8xf32>, vector<1x8x8xf32> -> vector<1x8x8xf32>
    "tpu.trace_stop"() : () -> ()
    %cst_106 = arith.constant dense<0xFF800000> : vector<1x8xf32>
    %232 = vector.multi_reduction <maximumf>, %231, %cst_106 [2] : vector<1x8x8xf32> to vector<1x8xf32>
    %233 = vector.shape_cast %232 : vector<1x8xf32> to vector<1x8x1xf32>
    %234 = vector.broadcast %233 : vector<1x8x1xf32> to vector<1x8x8xf32>
    %235 = arith.subf %231, %234 : vector<1x8x8xf32>
    %236 = math.exp %235 : vector<1x8x8xf32>
    %cst_107 = arith.constant dense<0.000000e+00> : vector<1x8xf32>
    %237 = vector.multi_reduction <add>, %236, %cst_107 [2] : vector<1x8x8xf32> to vector<1x8xf32>
    %238 = vector.shape_cast %237 : vector<1x8xf32> to vector<1x8x1xf32>
    %239 = vector.broadcast %238 : vector<1x8x1xf32> to vector<1x8x8xf32>
    %240 = arith.divf %236, %239 : vector<1x8x8xf32>
    "tpu.trace_start"() <{level = 10 : i32, message = "bqk,bkd->bqd"}> : () -> ()
    %cst_108 = arith.constant dense<0.000000e+00> : vector<1x8x8xf32>
    %241 = tpu.matmul %240, %230, %cst_108 {dimension_numbers = #tpu.dot_dimension_numbers<[2], [1], [1], [2], [0, 0, 0, 1, 1, 2], [0], [0]>} : vector<1x8x8xf32>, vector<1x8x8xf32>, vector<1x8x8xf32> -> vector<1x8x8xf32>
    "tpu.trace_stop"() : () -> ()
    %242 = vector.shape_cast %241 : vector<1x8x8xf32> to vector<8x8xf32>
    %243 = vector.extract_strided_slice %187 {offsets = [0, 0, 24], sizes = [1, 8, 8], strides = [1, 1, 1]} : vector<1x8x32xf32> to vector<1x8x8xf32>
    %cst_109 = arith.constant 0.353553385 : f32
    %244 = vector.broadcast %cst_109 : f32 to vector<1x8x8xf32>
    %245 = arith.mulf %243, %244 : vector<1x8x8xf32>
    %246 = vector.extract_strided_slice %189 {offsets = [0, 0, 24], sizes = [1, 8, 8], strides = [1, 1, 1]} : vector<1x8x32xf32> to vector<1x8x8xf32>
    %247 = vector.extract_strided_slice %191 {offsets = [0, 0, 24], sizes = [1, 8, 8], strides = [1, 1, 1]} : vector<1x8x32xf32> to vector<1x8x8xf32>
    "tpu.trace_start"() <{level = 10 : i32, message = "bqd,bkd->bqk"}> : () -> ()
    %cst_110 = arith.constant dense<0.000000e+00> : vector<1x8x8xf32>
    %248 = tpu.matmul %245, %246, %cst_110 {dimension_numbers = #tpu.dot_dimension_numbers<[2], [2], [1], [1], [0, 0, 0, 1, 1, 1], [0], [0]>} : vector<1x8x8xf32>, vector<1x8x8xf32>, vector<1x8x8xf32> -> vector<1x8x8xf32>
    "tpu.trace_stop"() : () -> ()
    %cst_111 = arith.constant dense<0xFF800000> : vector<1x8xf32>
    %249 = vector.multi_reduction <maximumf>, %248, %cst_111 [2] : vector<1x8x8xf32> to vector<1x8xf32>
    %250 = vector.shape_cast %249 : vector<1x8xf32> to vector<1x8x1xf32>
    %251 = vector.broadcast %250 : vector<1x8x1xf32> to vector<1x8x8xf32>
    %252 = arith.subf %248, %251 : vector<1x8x8xf32>
    %253 = math.exp %252 : vector<1x8x8xf32>
    %cst_112 = arith.constant dense<0.000000e+00> : vector<1x8xf32>
    %254 = vector.multi_reduction <add>, %253, %cst_112 [2] : vector<1x8x8xf32> to vector<1x8xf32>
    %255 = vector.shape_cast %254 : vector<1x8xf32> to vector<1x8x1xf32>
    %256 = vector.broadcast %255 : vector<1x8x1xf32> to vector<1x8x8xf32>
    %257 = arith.divf %253, %256 : vector<1x8x8xf32>
    "tpu.trace_start"() <{level = 10 : i32, message = "bqk,bkd->bqd"}> : () -> ()
    %cst_113 = arith.constant dense<0.000000e+00> : vector<1x8x8xf32>
    %258 = tpu.matmul %257, %247, %cst_113 {dimension_numbers = #tpu.dot_dimension_numbers<[2], [1], [1], [2], [0, 0, 0, 1, 1, 2], [0], [0]>} : vector<1x8x8xf32>, vector<1x8x8xf32>, vector<1x8x8xf32> -> vector<1x8x8xf32>
    "tpu.trace_stop"() : () -> ()
    %259 = vector.shape_cast %258 : vector<1x8x8xf32> to vector<8x8xf32>
    %260 = tpu.concatenate %208, %225, %242, %259 in 1 : vector<8x8xf32>, vector<8x8xf32>, vector<8x8xf32>, vector<8x8xf32> -> vector<8x32xf32>
    %c0_114 = arith.constant 0 : index
    %c0_115 = arith.constant 0 : index
    %261 = vector.load %arg18[%c0_114, %c0_115] : memref<32x32xf32, #tpu.memory_space<vmem>>, vector<32x32xf32>
    %cst_116 = arith.constant dense<0.000000e+00> : vector<8x32xf32>
    %262 = tpu.matmul %260, %261, %cst_116 {dimension_numbers = #tpu.dot_dimension_numbers<[1], [0], [0], [1], [0, 0, 1, 1], [], []>} : vector<8x32xf32>, vector<32x32xf32>, vector<8x32xf32> -> vector<8x32xf32>
    %c0_117 = arith.constant 0 : index
    %c0_118 = arith.constant 0 : index
    %263 = vector.load %arg19[%c0_117, %c0_118] : memref<1x32xf32, #tpu.memory_space<vmem>>, vector<1x32xf32>
    %264 = vector.broadcast %263 : vector<1x32xf32> to vector<8x32xf32>
    %265 = arith.addf %262, %264 : vector<8x32xf32>
    %266 = arith.addf %180, %265 : vector<8x32xf32>
    %c0_119 = arith.constant 0 : index
    %c0_120 = arith.constant 0 : index
    %267 = vector.load %arg20[%c0_119, %c0_120] : memref<1x32xf32, #tpu.memory_space<vmem>>, vector<1x32xf32>
    %c0_121 = arith.constant 0 : index
    %c0_122 = arith.constant 0 : index
    %268 = vector.load %arg21[%c0_121, %c0_122] : memref<1x32xf32, #tpu.memory_space<vmem>>, vector<1x32xf32>
    %cst_123 = arith.constant dense<0.000000e+00> : vector<8xf32>
    %269 = vector.multi_reduction <add>, %266, %cst_123 [1] : vector<8x32xf32> to vector<8xf32>
    %270 = vector.shape_cast %269 : vector<8xf32> to vector<8x1xf32>
    %cst_124 = arith.constant 3.200000e+01 : f32
    %271 = vector.broadcast %cst_124 : f32 to vector<8x1xf32>
    %272 = arith.divf %270, %271 : vector<8x1xf32>
    %273 = vector.broadcast %272 : vector<8x1xf32> to vector<8x32xf32>
    %274 = arith.subf %266, %273 : vector<8x32xf32>
    %275 = arith.mulf %274, %274 : vector<8x32xf32>
    %cst_125 = arith.constant dense<0.000000e+00> : vector<8xf32>
    %276 = vector.multi_reduction <add>, %275, %cst_125 [1] : vector<8x32xf32> to vector<8xf32>
    %277 = vector.shape_cast %276 : vector<8xf32> to vector<8x1xf32>
    %cst_126 = arith.constant 3.200000e+01 : f32
    %278 = vector.broadcast %cst_126 : f32 to vector<8x1xf32>
    %279 = arith.divf %277, %278 : vector<8x1xf32>
    %cst_127 = arith.constant 9.99999974E-6 : f32
    %280 = vector.broadcast %cst_127 : f32 to vector<8x1xf32>
    %281 = arith.addf %279, %280 : vector<8x1xf32>
    %282 = math.rsqrt %281 : vector<8x1xf32>
    %283 = vector.broadcast %282 : vector<8x1xf32> to vector<8x32xf32>
    %284 = arith.mulf %274, %283 : vector<8x32xf32>
    %285 = vector.broadcast %267 : vector<1x32xf32> to vector<8x32xf32>
    %286 = arith.mulf %284, %285 : vector<8x32xf32>
    %287 = vector.broadcast %268 : vector<1x32xf32> to vector<8x32xf32>
    %288 = arith.addf %286, %287 : vector<8x32xf32>
    %cst_128 = arith.constant 0.000000e+00 : f32
    %289 = vector.broadcast %cst_128 : f32 to vector<8x32xf32>
    %c0_129 = arith.constant 0 : index
    %c0_130 = arith.constant 0 : index
    %290 = vector.load %arg22[%c0_129, %c0_130] : memref<32x2048xf32, #tpu.memory_space<vmem>>, vector<32x512xf32>
    %c0_131 = arith.constant 0 : index
    %c0_132 = arith.constant 0 : index
    %291 = vector.load %arg23[%c0_131, %c0_132] : memref<1x2048xf32, #tpu.memory_space<vmem>>, vector<1x512xf32>
    %c0_133 = arith.constant 0 : index
    %c0_134 = arith.constant 0 : index
    %292 = vector.load %arg24[%c0_133, %c0_134] : memref<2048x32xf32, #tpu.memory_space<vmem>>, vector<512x32xf32>
    %cst_135 = arith.constant dense<0.000000e+00> : vector<8x512xf32>
    %293 = tpu.matmul %288, %290, %cst_135 {dimension_numbers = #tpu.dot_dimension_numbers<[1], [0], [0], [1], [0, 0, 1, 1], [], []>} : vector<8x32xf32>, vector<32x512xf32>, vector<8x512xf32> -> vector<8x512xf32>
    %294 = vector.broadcast %291 : vector<1x512xf32> to vector<8x512xf32>
    %295 = arith.addf %293, %294 : vector<8x512xf32>
    %cst_136 = arith.constant 0.000000e+00 : f32
    %296 = vector.broadcast %cst_136 : f32 to vector<8x512xf32>
    %297 = arith.maximumf %295, %296 : vector<8x512xf32>
    %cst_137 = arith.constant dense<0.000000e+00> : vector<8x32xf32>
    %298 = tpu.matmul %297, %292, %cst_137 {dimension_numbers = #tpu.dot_dimension_numbers<[1], [0], [0], [1], [0, 0, 1, 1], [], []>} : vector<8x512xf32>, vector<512x32xf32>, vector<8x32xf32> -> vector<8x32xf32>
    %299 = arith.addf %289, %298 : vector<8x32xf32>
    %c0_138 = arith.constant 0 : index
    %c512_139 = arith.constant 512 : index
    %300 = vector.load %arg22[%c0_138, %c512_139] : memref<32x2048xf32, #tpu.memory_space<vmem>>, vector<32x512xf32>
    %c0_140 = arith.constant 0 : index
    %c512_141 = arith.constant 512 : index
    %301 = vector.load %arg23[%c0_140, %c512_141] : memref<1x2048xf32, #tpu.memory_space<vmem>>, vector<1x512xf32>
    %c512_142 = arith.constant 512 : index
    %c0_143 = arith.constant 0 : index
    %302 = vector.load %arg24[%c512_142, %c0_143] : memref<2048x32xf32, #tpu.memory_space<vmem>>, vector<512x32xf32>
    %cst_144 = arith.constant dense<0.000000e+00> : vector<8x512xf32>
    %303 = tpu.matmul %288, %300, %cst_144 {dimension_numbers = #tpu.dot_dimension_numbers<[1], [0], [0], [1], [0, 0, 1, 1], [], []>} : vector<8x32xf32>, vector<32x512xf32>, vector<8x512xf32> -> vector<8x512xf32>
    %304 = vector.broadcast %301 : vector<1x512xf32> to vector<8x512xf32>
    %305 = arith.addf %303, %304 : vector<8x512xf32>
    %cst_145 = arith.constant 0.000000e+00 : f32
    %306 = vector.broadcast %cst_145 : f32 to vector<8x512xf32>
    %307 = arith.maximumf %305, %306 : vector<8x512xf32>
    %cst_146 = arith.constant dense<0.000000e+00> : vector<8x32xf32>
    %308 = tpu.matmul %307, %302, %cst_146 {dimension_numbers = #tpu.dot_dimension_numbers<[1], [0], [0], [1], [0, 0, 1, 1], [], []>} : vector<8x512xf32>, vector<512x32xf32>, vector<8x32xf32> -> vector<8x32xf32>
    %309 = arith.addf %299, %308 : vector<8x32xf32>
    %c0_147 = arith.constant 0 : index
    %c1024_148 = arith.constant 1024 : index
    %310 = vector.load %arg22[%c0_147, %c1024_148] : memref<32x2048xf32, #tpu.memory_space<vmem>>, vector<32x512xf32>
    %c0_149 = arith.constant 0 : index
    %c1024_150 = arith.constant 1024 : index
    %311 = vector.load %arg23[%c0_149, %c1024_150] : memref<1x2048xf32, #tpu.memory_space<vmem>>, vector<1x512xf32>
    %c1024_151 = arith.constant 1024 : index
    %c0_152 = arith.constant 0 : index
    %312 = vector.load %arg24[%c1024_151, %c0_152] : memref<2048x32xf32, #tpu.memory_space<vmem>>, vector<512x32xf32>
    %cst_153 = arith.constant dense<0.000000e+00> : vector<8x512xf32>
    %313 = tpu.matmul %288, %310, %cst_153 {dimension_numbers = #tpu.dot_dimension_numbers<[1], [0], [0], [1], [0, 0, 1, 1], [], []>} : vector<8x32xf32>, vector<32x512xf32>, vector<8x512xf32> -> vector<8x512xf32>
    %314 = vector.broadcast %311 : vector<1x512xf32> to vector<8x512xf32>
    %315 = arith.addf %313, %314 : vector<8x512xf32>
    %cst_154 = arith.constant 0.000000e+00 : f32
    %316 = vector.broadcast %cst_154 : f32 to vector<8x512xf32>
    %317 = arith.maximumf %315, %316 : vector<8x512xf32>
    %cst_155 = arith.constant dense<0.000000e+00> : vector<8x32xf32>
    %318 = tpu.matmul %317, %312, %cst_155 {dimension_numbers = #tpu.dot_dimension_numbers<[1], [0], [0], [1], [0, 0, 1, 1], [], []>} : vector<8x512xf32>, vector<512x32xf32>, vector<8x32xf32> -> vector<8x32xf32>
    %319 = arith.addf %309, %318 : vector<8x32xf32>
    %c0_156 = arith.constant 0 : index
    %c1536_157 = arith.constant 1536 : index
    %320 = vector.load %arg22[%c0_156, %c1536_157] : memref<32x2048xf32, #tpu.memory_space<vmem>>, vector<32x512xf32>
    %c0_158 = arith.constant 0 : index
    %c1536_159 = arith.constant 1536 : index
    %321 = vector.load %arg23[%c0_158, %c1536_159] : memref<1x2048xf32, #tpu.memory_space<vmem>>, vector<1x512xf32>
    %c1536_160 = arith.constant 1536 : index
    %c0_161 = arith.constant 0 : index
    %322 = vector.load %arg24[%c1536_160, %c0_161] : memref<2048x32xf32, #tpu.memory_space<vmem>>, vector<512x32xf32>
    %cst_162 = arith.constant dense<0.000000e+00> : vector<8x512xf32>
    %323 = tpu.matmul %288, %320, %cst_162 {dimension_numbers = #tpu.dot_dimension_numbers<[1], [0], [0], [1], [0, 0, 1, 1], [], []>} : vector<8x32xf32>, vector<32x512xf32>, vector<8x512xf32> -> vector<8x512xf32>
    %324 = vector.broadcast %321 : vector<1x512xf32> to vector<8x512xf32>
    %325 = arith.addf %323, %324 : vector<8x512xf32>
    %cst_163 = arith.constant 0.000000e+00 : f32
    %326 = vector.broadcast %cst_163 : f32 to vector<8x512xf32>
    %327 = arith.maximumf %325, %326 : vector<8x512xf32>
    %cst_164 = arith.constant dense<0.000000e+00> : vector<8x32xf32>
    %328 = tpu.matmul %327, %322, %cst_164 {dimension_numbers = #tpu.dot_dimension_numbers<[1], [0], [0], [1], [0, 0, 1, 1], [], []>} : vector<8x512xf32>, vector<512x32xf32>, vector<8x32xf32> -> vector<8x32xf32>
    %329 = arith.addf %319, %328 : vector<8x32xf32>
    %c0_165 = arith.constant 0 : index
    %c0_166 = arith.constant 0 : index
    %330 = vector.load %arg25[%c0_165, %c0_166] : memref<1x32xf32, #tpu.memory_space<vmem>>, vector<1x32xf32>
    %331 = vector.broadcast %330 : vector<1x32xf32> to vector<8x32xf32>
    %332 = arith.addf %329, %331 : vector<8x32xf32>
    %333 = arith.addf %288, %332 : vector<8x32xf32>
    %c0_167 = arith.constant 0 : index
    %c0_168 = arith.constant 0 : index
    %334 = vector.load %arg26[%c0_167, %c0_168] : memref<1x32xf32, #tpu.memory_space<vmem>>, vector<1x32xf32>
    %c0_169 = arith.constant 0 : index
    %c0_170 = arith.constant 0 : index
    %335 = vector.load %arg27[%c0_169, %c0_170] : memref<1x32xf32, #tpu.memory_space<vmem>>, vector<1x32xf32>
    %cst_171 = arith.constant dense<0.000000e+00> : vector<8xf32>
    %336 = vector.multi_reduction <add>, %333, %cst_171 [1] : vector<8x32xf32> to vector<8xf32>
    %337 = vector.shape_cast %336 : vector<8xf32> to vector<8x1xf32>
    %cst_172 = arith.constant 3.200000e+01 : f32
    %338 = vector.broadcast %cst_172 : f32 to vector<8x1xf32>
    %339 = arith.divf %337, %338 : vector<8x1xf32>
    %340 = vector.broadcast %339 : vector<8x1xf32> to vector<8x32xf32>
    %341 = arith.subf %333, %340 : vector<8x32xf32>
    %342 = arith.mulf %341, %341 : vector<8x32xf32>
    %cst_173 = arith.constant dense<0.000000e+00> : vector<8xf32>
    %343 = vector.multi_reduction <add>, %342, %cst_173 [1] : vector<8x32xf32> to vector<8xf32>
    %344 = vector.shape_cast %343 : vector<8xf32> to vector<8x1xf32>
    %cst_174 = arith.constant 3.200000e+01 : f32
    %345 = vector.broadcast %cst_174 : f32 to vector<8x1xf32>
    %346 = arith.divf %344, %345 : vector<8x1xf32>
    %cst_175 = arith.constant 9.99999974E-6 : f32
    %347 = vector.broadcast %cst_175 : f32 to vector<8x1xf32>
    %348 = arith.addf %346, %347 : vector<8x1xf32>
    %349 = math.rsqrt %348 : vector<8x1xf32>
    %350 = vector.broadcast %349 : vector<8x1xf32> to vector<8x32xf32>
    %351 = arith.mulf %341, %350 : vector<8x32xf32>
    %352 = vector.broadcast %334 : vector<1x32xf32> to vector<8x32xf32>
    %353 = arith.mulf %351, %352 : vector<8x32xf32>
    %354 = vector.broadcast %335 : vector<1x32xf32> to vector<8x32xf32>
    %355 = arith.addf %353, %354 : vector<8x32xf32>
    %c0_176 = arith.constant 0 : index
    %c0_177 = arith.constant 0 : index
    %356 = vector.load %arg28[%c0_176, %c0_177] : memref<1x32xf32, #tpu.memory_space<vmem>>, vector<1x32xf32>
    %c0_178 = arith.constant 0 : index
    %c0_179 = arith.constant 0 : index
    %357 = vector.load %arg29[%c0_178, %c0_179] : memref<1x1xf32, #tpu.memory_space<vmem>>, vector<1x1xf32>
    %358 = vector.broadcast %356 : vector<1x32xf32> to vector<8x32xf32>
    %359 = arith.mulf %355, %358 : vector<8x32xf32>
    %cst_180 = arith.constant dense<0.000000e+00> : vector<8xf32>
    %360 = vector.multi_reduction <add>, %359, %cst_180 [1] : vector<8x32xf32> to vector<8xf32>
    %361 = vector.shape_cast %360 : vector<8xf32> to vector<8x1xf32>
    %362 = vector.broadcast %357 : vector<1x1xf32> to vector<8x1xf32>
    %363 = arith.addf %361, %362 : vector<8x1xf32>
    %c0_181 = arith.constant 0 : index
    %c0_182 = arith.constant 0 : index
    %364 = vector.load %arg30[%c0_181, %c0_182] : memref<8x1xf32, #tpu.memory_space<vmem>>, vector<8x1xf32>
    tpu.vector_store %arg30[%c0_181, %c0_182], %363 {strides = array<i32>} : memref<8x1xf32, #tpu.memory_space<vmem>>, vector<8x1xf32>,
    return
  }
  func.func @transform_0(%arg0: i32) -> (i32, i32) {
    %c0_i32 = arith.constant 0 : i32
    %c0_i32_0 = arith.constant 0 : i32
    return %arg0, %c0_i32 : i32, i32
  }
  func.func @transform_1(%arg0: i32) -> (i32, i32) {
    %c0_i32 = arith.constant 0 : i32
    %c0_i32_0 = arith.constant 0 : i32
    %c0_i32_1 = arith.constant 0 : i32
    return %c0_i32, %c0_i32_0 : i32, i32
  }
  func.func @transform_2(%arg0: i32) -> (i32, i32) {
    %c0_i32 = arith.constant 0 : i32
    %c0_i32_0 = arith.constant 0 : i32
    %c0_i32_1 = arith.constant 0 : i32
    return %c0_i32, %c0_i32_0 : i32, i32
  }
  func.func @transform_3(%arg0: i32) -> (i32, i32) {
    %c0_i32 = arith.constant 0 : i32
    %c0_i32_0 = arith.constant 0 : i32
    %c0_i32_1 = arith.constant 0 : i32
    return %c0_i32, %c0_i32_0 : i32, i32
  }
  func.func @transform_4(%arg0: i32) -> (i32, i32) {
    %c0_i32 = arith.constant 0 : i32
    %c0_i32_0 = arith.constant 0 : i32
    %c0_i32_1 = arith.constant 0 : i32
    return %c0_i32, %c0_i32_0 : i32, i32
  }
  func.func @transform_5(%arg0: i32) -> (i32, i32) {
    %c0_i32 = arith.constant 0 : i32
    %c0_i32_0 = arith.constant 0 : i32
    %c0_i32_1 = arith.constant 0 : i32
    return %c0_i32, %c0_i32_0 : i32, i32
  }
  func.func @transform_6(%arg0: i32) -> (i32, i32) {
    %c0_i32 = arith.constant 0 : i32
    %c0_i32_0 = arith.constant 0 : i32
    %c0_i32_1 = arith.constant 0 : i32
    return %c0_i32, %c0_i32_0 : i32, i32
  }
  func.func @transform_7(%arg0: i32) -> (i32, i32) {
    %c0_i32 = arith.constant 0 : i32
    %c0_i32_0 = arith.constant 0 : i32
    %c0_i32_1 = arith.constant 0 : i32
    return %c0_i32, %c0_i32_0 : i32, i32
  }
  func.func @transform_8(%arg0: i32) -> (i32, i32) {
    %c0_i32 = arith.constant 0 : i32
    %c0_i32_0 = arith.constant 0 : i32
    %c0_i32_1 = arith.constant 0 : i32
    return %c0_i32, %c0_i32_0 : i32, i32
  }
  func.func @transform_9(%arg0: i32) -> (i32, i32) {
    %c0_i32 = arith.constant 0 : i32
    %c0_i32_0 = arith.constant 0 : i32
    %c0_i32_1 = arith.constant 0 : i32
    return %c0_i32, %c0_i32_0 : i32, i32
  }
  func.func @transform_10(%arg0: i32) -> (i32, i32) {
    %c0_i32 = arith.constant 0 : i32
    %c0_i32_0 = arith.constant 0 : i32
    %c0_i32_1 = arith.constant 0 : i32
    return %c0_i32, %c0_i32_0 : i32, i32
  }
  func.func @transform_11(%arg0: i32) -> (i32, i32) {
    %c0_i32 = arith.constant 0 : i32
    %c0_i32_0 = arith.constant 0 : i32
    %c0_i32_1 = arith.constant 0 : i32
    return %c0_i32, %c0_i32_0 : i32, i32
  }
  func.func @transform_12(%arg0: i32) -> (i32, i32) {
    %c0_i32 = arith.constant 0 : i32
    %c0_i32_0 = arith.constant 0 : i32
    %c0_i32_1 = arith.constant 0 : i32
    return %c0_i32, %c0_i32_0 : i32, i32
  }
  func.func @transform_13(%arg0: i32) -> (i32, i32) {
    %c0_i32 = arith.constant 0 : i32
    %c0_i32_0 = arith.constant 0 : i32
    %c0_i32_1 = arith.constant 0 : i32
    return %c0_i32, %c0_i32_0 : i32, i32
  }
  func.func @transform_14(%arg0: i32) -> (i32, i32) {
    %c0_i32 = arith.constant 0 : i32
    %c0_i32_0 = arith.constant 0 : i32
    %c0_i32_1 = arith.constant 0 : i32
    return %c0_i32, %c0_i32_0 : i32, i32
  }
  func.func @transform_15(%arg0: i32) -> (i32, i32) {
    %c0_i32 = arith.constant 0 : i32
    %c0_i32_0 = arith.constant 0 : i32
    %c0_i32_1 = arith.constant 0 : i32
    return %c0_i32, %c0_i32_0 : i32, i32
  }
  func.func @transform_16(%arg0: i32) -> (i32, i32) {
    %c0_i32 = arith.constant 0 : i32
    %c0_i32_0 = arith.constant 0 : i32
    %c0_i32_1 = arith.constant 0 : i32
    return %c0_i32, %c0_i32_0 : i32, i32
  }
  func.func @transform_17(%arg0: i32) -> (i32, i32) {
    %c0_i32 = arith.constant 0 : i32
    %c0_i32_0 = arith.constant 0 : i32
    %c0_i32_1 = arith.constant 0 : i32
    return %c0_i32, %c0_i32_0 : i32, i32
  }
  func.func @transform_18(%arg0: i32) -> (i32, i32) {
    %c0_i32 = arith.constant 0 : i32
    %c0_i32_0 = arith.constant 0 : i32
    %c0_i32_1 = arith.constant 0 : i32
    return %c0_i32, %c0_i32_0 : i32, i32
  }
  func.func @transform_19(%arg0: i32) -> (i32, i32) {
    %c0_i32 = arith.constant 0 : i32
    %c0_i32_0 = arith.constant 0 : i32
    %c0_i32_1 = arith.constant 0 : i32
    return %c0_i32, %c0_i32_0 : i32, i32
  }
  func.func @transform_20(%arg0: i32) -> (i32, i32) {
    %c0_i32 = arith.constant 0 : i32
    %c0_i32_0 = arith.constant 0 : i32
    %c0_i32_1 = arith.constant 0 : i32
    return %c0_i32, %c0_i32_0 : i32, i32
  }
  func.func @transform_21(%arg0: i32) -> (i32, i32) {
    %c0_i32 = arith.constant 0 : i32
    %c0_i32_0 = arith.constant 0 : i32
    %c0_i32_1 = arith.constant 0 : i32
    return %c0_i32, %c0_i32_0 : i32, i32
  }
  func.func @transform_22(%arg0: i32) -> (i32, i32) {
    %c0_i32 = arith.constant 0 : i32
    %c0_i32_0 = arith.constant 0 : i32
    %c0_i32_1 = arith.constant 0 : i32
    return %c0_i32, %c0_i32_0 : i32, i32
  }
  func.func @transform_23(%arg0: i32) -> (i32, i32) {
    %c0_i32 = arith.constant 0 : i32
    %c0_i32_0 = arith.constant 0 : i32
    %c0_i32_1 = arith.constant 0 : i32
    return %c0_i32, %c0_i32_0 : i32, i32
  }
  func.func @transform_24(%arg0: i32) -> (i32, i32) {
    %c0_i32 = arith.constant 0 : i32
    %c0_i32_0 = arith.constant 0 : i32
    %c0_i32_1 = arith.constant 0 : i32
    return %c0_i32, %c0_i32_0 : i32, i32
  }
  func.func @transform_25(%arg0: i32) -> (i32, i32) {
    %c0_i32 = arith.constant 0 : i32
    %c0_i32_0 = arith.constant 0 : i32
    %c0_i32_1 = arith.constant 0 : i32
    return %c0_i32, %c0_i32_0 : i32, i32
  }
  func.func @transform_26(%arg0: i32) -> (i32, i32) {
    %c0_i32 = arith.constant 0 : i32
    %c0_i32_0 = arith.constant 0 : i32
    %c0_i32_1 = arith.constant 0 : i32
    return %c0_i32, %c0_i32_0 : i32, i32
  }
  func.func @transform_27(%arg0: i32) -> (i32, i32) {
    %c0_i32 = arith.constant 0 : i32
    %c0_i32_0 = arith.constant 0 : i32
    %c0_i32_1 = arith.constant 0 : i32
    return %c0_i32, %c0_i32_0 : i32, i32
  }
  func.func @transform_28(%arg0: i32) -> (i32, i32) {
    %c0_i32 = arith.constant 0 : i32
    %c0_i32_0 = arith.constant 0 : i32
    %c0_i32_1 = arith.constant 0 : i32
    return %c0_i32, %c0_i32_0 : i32, i32
  }
  func.func @transform_29(%arg0: i32) -> (i32, i32) {
    %c0_i32 = arith.constant 0 : i32
    %c0_i32_0 = arith.constant 0 : i32
    return %arg0, %c0_i32 : i32, i32
  }
}

</mosaic_0001>

<llo_original>
// kernel: pinn_forward.1
$region0: #{pinn_forward.1}
  #allocation0 [shape = 'u32[]', space=smem, size = 0x4, offset = 0x4, fixed_abs, tag = 'smem constant byte address 0x4 - core index']
  #allocation1 [shape = 'u32[72,128]{1,0:T(1,128)}', space=vmem, size = 0x9000, scoped, tag = 'internal scratch']
  #allocation2 [shape = 'f32[1,1]{1,0:T(1,128)S(1)}', space=vmem, size = 0x200, scoped, tag = 'scoped memory for pinn_forward.1']
  %s0 = inlined_call_operand.smem [shape: u32[30], index: -1, kind: input, shape index: {}]
  %s1 = sld [smem:[%s0]]
  %s2 = scalar_lea.smem %s0, 1
  %s3 = sld [smem:[%s2]]
  %s4 = scalar_lea.smem %s0, 2
  %s5 = sld [smem:[%s4]]
  %s6 = scalar_lea.smem %s0, 3
  %s7 = sld [smem:[%s6]]
  %s8 = scalar_lea.smem %s0, 4
  %s9 = sld [smem:[%s8]]
  %s10 = scalar_lea.smem %s0, 5
  %s11 = sld [smem:[%s10]]
  %s12 = scalar_lea.smem %s0, 6
  %s13 = sld [smem:[%s12]]
  %s14 = scalar_lea.smem %s0, 7
  %s15 = sld [smem:[%s14]]
  %s16 = scalar_lea.smem %s0, 8
  %s17 = sld [smem:[%s16]]
  %s18 = scalar_lea.smem %s0, 9
  %s19 = sld [smem:[%s18]]
  %s20 = scalar_lea.smem %s0, 10
  %s21 = sld [smem:[%s20]]
  %s22 = scalar_lea.smem %s0, 11
  %s23 = sld [smem:[%s22]]
  %s24 = scalar_lea.smem %s0, 12
  %s25 = sld [smem:[%s24]]
  %s26 = scalar_lea.smem %s0, 13
  %s27 = sld [smem:[%s26]]
  %s28 = scalar_lea.smem %s0, 14
  %s29 = sld [smem:[%s28]]
  %s30 = scalar_lea.smem %s0, 15
  %s31 = sld [smem:[%s30]]
  %s32 = scalar_lea.smem %s0, 16
  %s33 = sld [smem:[%s32]]
  %s34 = scalar_lea.smem %s0, 17
  %s35 = sld [smem:[%s34]]
  %s36 = scalar_lea.smem %s0, 18
  %s37 = sld [smem:[%s36]]
  %s38 = scalar_lea.smem %s0, 19
  %s39 = sld [smem:[%s38]]
  %s40 = scalar_lea.smem %s0, 20
  %s41 = sld [smem:[%s40]]
  %s42 = scalar_lea.smem %s0, 21
  %s43 = sld [smem:[%s42]]
  %s44 = scalar_lea.smem %s0, 22
  %s45 = sld [smem:[%s44]]
  %s46 = scalar_lea.smem %s0, 23
  %s47 = sld [smem:[%s46]]
  %s48 = scalar_lea.smem %s0, 24
  %s49 = sld [smem:[%s48]]
  %s50 = scalar_lea.smem %s0, 25
  %s51 = sld [smem:[%s50]]
  %s52 = scalar_lea.smem %s0, 26
  %s53 = sld [smem:[%s52]]
  %s54 = scalar_lea.smem %s0, 27
  %s55 = sld [smem:[%s54]]
  %s56 = scalar_lea.smem %s0, 28
  %s57 = sld [smem:[%s56]]
  %s58 = scalar_lea.smem %s0, 29
  %s59 = sld [smem:[%s58]]
  %s60 = sld [smem:[#allocation0]]
  $region149: #{pinn_forward.1} parent=0
    _
  %s62 = ssub.s32 1, %s60
  %s63 = scalar_select 0, %s62, %s60
  %v64 = vstv %s57
  %65 = vst [vmem:[#allocation2] sm:$0x1] %v64
  loop: start=0, step=1, limit=4
  $region2: #{pinn_forward.1} parent=0 // loop_pre_header
    _
  $region3: #{pinn_forward.1} parent=0 // loop_header
    %s67 = sphi 0, %s71
    %p68 = scmp.ge.s32.totalorder %s67, 4
    %s77 = sphi 0, %s79
    %s80 = sphi 0, %s77
    %s81 = sphi 0, %s80
    %s97 = sphi 0, %s81
    %s101 = sphi 0, %s101
    %s103 = sphi 0, %s101
    %s104 = sphi 0, %s103
    %s118 = sphi 0, %s104
    %s122 = sphi 0, %s122
    %s124 = sphi 0, %s122
    %s125 = sphi 0, %s124
    %s139 = sphi 0, %s125
    %s143 = sphi 0, %s143
    %s145 = sphi 0, %s143
    %s146 = sphi 0, %s145
    %s160 = sphi 0, %s146
    %s164 = sphi 0, %s164
    %s166 = sphi 0, %s164
    %s167 = sphi 0, %s166
    %s181 = sphi 0, %s167
    %s185 = sphi 0, %s185
    %s187 = sphi 0, %s185
    %s188 = sphi 0, %s187
    %s202 = sphi 0, %s188
    %s206 = sphi 0, %s206
    %s208 = sphi 0, %s206
    %s209 = sphi 0, %s208
    %s223 = sphi 0, %s209
    %s227 = sphi 0, %s227
    %s229 = sphi 0, %s227
    %s230 = sphi 0, %s229
    %s244 = sphi 0, %s230
    %s248 = sphi 0, %s248
    %s250 = sphi 0, %s248
    %s251 = sphi 0, %s250
    %s265 = sphi 0, %s251
    %s269 = sphi 0, %s269
    %s271 = sphi 0, %s269
    %s272 = sphi 0, %s271
    %s286 = sphi 0, %s272
    %s290 = sphi 0, %s290
    %s292 = sphi 0, %s290
    %s293 = sphi 0, %s292
    %s307 = sphi 0, %s293
    %s311 = sphi 0, %s311
    %s313 = sphi 0, %s311
    %s314 = sphi 0, %s313
    %s328 = sphi 0, %s314
    %s332 = sphi 0, %s332
    %s334 = sphi 0, %s332
    %s335 = sphi 0, %s334
    %s349 = sphi 0, %s335
    %s353 = sphi 0, %s353
    %s355 = sphi 0, %s353
    %s356 = sphi 0, %s355
    %s370 = sphi 0, %s356
    %s374 = sphi 0, %s374
    %s376 = sphi 0, %s374
    %s377 = sphi 0, %s376
    %s391 = sphi 0, %s377
    %s395 = sphi 0, %s395
    %s397 = sphi 0, %s395
    %s398 = sphi 0, %s397
    %s412 = sphi 0, %s398
    %s416 = sphi 0, %s416
    %s418 = sphi 0, %s416
    %s419 = sphi 0, %s418
    %s433 = sphi 0, %s419
    %s437 = sphi 0, %s437
    %s439 = sphi 0, %s437
    %s440 = sphi 0, %s439
    %s454 = sphi 0, %s440
    %s458 = sphi 0, %s458
    %s460 = sphi 0, %s458
    %s461 = sphi 0, %s460
    %s475 = sphi 0, %s461
    %s479 = sphi 0, %s479
    %s481 = sphi 0, %s479
    %s482 = sphi 0, %s481
    %s496 = sphi 0, %s482
    %s500 = sphi 0, %s500
    %s502 = sphi 0, %s500
    %s503 = sphi 0, %s502
    %s517 = sphi 0, %s503
    %s521 = sphi 0, %s521
    %s523 = sphi 0, %s521
    %s524 = sphi 0, %s523
    %s538 = sphi 0, %s524
    %s542 = sphi 0, %s542
    %s544 = sphi 0, %s542
    %s545 = sphi 0, %s544
    %s559 = sphi 0, %s545
    %s563 = sphi 0, %s563
    %s565 = sphi 0, %s563
    %s566 = sphi 0, %s565
    %s580 = sphi 0, %s566
    %s584 = sphi 0, %s584
    %s586 = sphi 0, %s584
    %s587 = sphi 0, %s586
    %s601 = sphi 0, %s587
    %s605 = sphi 0, %s605
    %s607 = sphi 0, %s605
    %s608 = sphi 0, %s607
    %s622 = sphi 0, %s608
    %s626 = sphi 0, %s626
    %s628 = sphi 0, %s626
    %s629 = sphi 0, %s628
    %s643 = sphi 0, %s629
    %s647 = sphi 0, %s647
    %s649 = sphi 0, %s647
    %s650 = sphi 0, %s649
    %s664 = sphi 0, %s650
    %s668 = sphi 0, %s668
    %s670 = sphi 0, %s668
    %s671 = sphi 0, %s670
    %s685 = sphi 0, %s671
    %s691 = sphi 0, %s693
    %s694 = sphi 0, %s691
    %s695 = sphi 0, %s694
    %s711 = sphi 0, %s695
  $region4: #{pinn_forward.1} parent=0 // loop_header_branch
    %70 = sbr.rel (%p68) target = $region8
  $region5: #{pinn_forward.1} parent=0 // loop_body
    %s72 = ssub.s32 %s67, 1
    %s73 = ssub.s32 %s67, 2
    %s74 = sadd.s32 %s67, 1
    %s75 = ssub.s32 %s67, %s74
    %p76 = scmp.eq.s32.totalorder %s75, 0
    %s78 = sadd.s32 %s77, 1
    %s79 = scalar_select %p76, %s77, %s78
    %p82 = pneg %p76
    %p83 = scmp.eq.s32.totalorder %s67, 1
    %p84 = por %p82, %p83
    %p85 = scmp.ne.s32.totalorder %s77, %s80
    %p86 = scmp.eq.s32.totalorder %s67, 0
    %p87 = por %p85, %p86
    %p88 = scmp.ne.s32.totalorder %s77, %s80
    %p89 = scmp.eq.s32.totalorder %s72, 1
    %p90 = por %p88, %p89
    %p91 = scmp.ne.s32.totalorder %s80, %s81
    %p92 = scmp.eq.s32.totalorder %s72, 0
    %p93 = por %p91, %p92
    %p94 = scmp.ne.s32.totalorder %s80, %s81
    %p95 = scmp.eq.s32.totalorder %s73, 1
    %p96 = por %p94, %p95
    %p98 = scmp.ne.s32.totalorder %s81, %s97
    %p99 = scmp.eq.s32.totalorder %s73, 0
    %p100 = por %p98, %p99
    %s102 = sadd.s32 %s101, 1
    %p105 = scmp.eq.s32.totalorder %s67, 1
    %p106 = scmp.ne.s32.totalorder %s101, %s103
    %p107 = scmp.eq.s32.totalorder %s67, 0
    %p108 = por %p106, %p107
    %p109 = scmp.ne.s32.totalorder %s101, %s103
    %p110 = scmp.eq.s32.totalorder %s72, 1
    %p111 = por %p109, %p110
    %p112 = scmp.ne.s32.totalorder %s103, %s104
    %p113 = scmp.eq.s32.totalorder %s72, 0
    %p114 = por %p112, %p113
    %p115 = scmp.ne.s32.totalorder %s103, %s104
    %p116 = scmp.eq.s32.totalorder %s73, 1
    %p117 = por %p115, %p116
    %p119 = scmp.ne.s32.totalorder %s104, %s118
    %p120 = scmp.eq.s32.totalorder %s73, 0
    %p121 = por %p119, %p120
    %s123 = sadd.s32 %s122, 1
    %p126 = scmp.eq.s32.totalorder %s67, 1
    %p127 = scmp.ne.s32.totalorder %s122, %s124
    %p128 = scmp.eq.s32.totalorder %s67, 0
    %p129 = por %p127, %p128
    %p130 = scmp.ne.s32.totalorder %s122, %s124
    %p131 = scmp.eq.s32.totalorder %s72, 1
    %p132 = por %p130, %p131
    %p133 = scmp.ne.s32.totalorder %s124, %s125
    %p134 = scmp.eq.s32.totalorder %s72, 0
    %p135 = por %p133, %p134
    %p136 = scmp.ne.s32.totalorder %s124, %s125
    %p137 = scmp.eq.s32.totalorder %s73, 1
    %p138 = por %p136, %p137
    %p140 = scmp.ne.s32.totalorder %s125, %s139
    %p141 = scmp.eq.s32.totalorder %s73, 0
    %p142 = por %p140, %p141
    %s144 = sadd.s32 %s143, 1
    %p147 = scmp.eq.s32.totalorder %s67, 1
    %p148 = scmp.ne.s32.totalorder %s143, %s145
    %p149 = scmp.eq.s32.totalorder %s67, 0
    %p150 = por %p148, %p149
    %p151 = scmp.ne.s32.totalorder %s143, %s145
    %p152 = scmp.eq.s32.totalorder %s72, 1
    %p153 = por %p151, %p152
    %p154 = scmp.ne.s32.totalorder %s145, %s146
    %p155 = scmp.eq.s32.totalorder %s72, 0
    %p156 = por %p154, %p155
    %p157 = scmp.ne.s32.totalorder %s145, %s146
    %p158 = scmp.eq.s32.totalorder %s73, 1
    %p159 = por %p157, %p158
    %p161 = scmp.ne.s32.totalorder %s146, %s160
    %p162 = scmp.eq.s32.totalorder %s73, 0
    %p163 = por %p161, %p162
    %s165 = sadd.s32 %s164, 1
    %p168 = scmp.eq.s32.totalorder %s67, 1
    %p169 = scmp.ne.s32.totalorder %s164, %s166
    %p170 = scmp.eq.s32.totalorder %s67, 0
    %p171 = por %p169, %p170
    %p172 = scmp.ne.s32.totalorder %s164, %s166
    %p173 = scmp.eq.s32.totalorder %s72, 1
    %p174 = por %p172, %p173
    %p175 = scmp.ne.s32.totalorder %s166, %s167
    %p176 = scmp.eq.s32.totalorder %s72, 0
    %p177 = por %p175, %p176
    %p178 = scmp.ne.s32.totalorder %s166, %s167
    %p179 = scmp.eq.s32.totalorder %s73, 1
    %p180 = por %p178, %p179
    %p182 = scmp.ne.s32.totalorder %s167, %s181
    %p183 = scmp.eq.s32.totalorder %s73, 0
    %p184 = por %p182, %p183
    %s186 = sadd.s32 %s185, 1
    %p189 = scmp.eq.s32.totalorder %s67, 1
    %p190 = scmp.ne.s32.totalorder %s185, %s187
    %p191 = scmp.eq.s32.totalorder %s67, 0
    %p192 = por %p190, %p191
    %p193 = scmp.ne.s32.totalorder %s185, %s187
    %p194 = scmp.eq.s32.totalorder %s72, 1
    %p195 = por %p193, %p194
    %p196 = scmp.ne.s32.totalorder %s187, %s188
    %p197 = scmp.eq.s32.totalorder %s72, 0
    %p198 = por %p196, %p197
    %p199 = scmp.ne.s32.totalorder %s187, %s188
    %p200 = scmp.eq.s32.totalorder %s73, 1
    %p201 = por %p199, %p200
    %p203 = scmp.ne.s32.totalorder %s188, %s202
    %p204 = scmp.eq.s32.totalorder %s73, 0
    %p205 = por %p203, %p204
    %s207 = sadd.s32 %s206, 1
    %p210 = scmp.eq.s32.totalorder %s67, 1
    %p211 = scmp.ne.s32.totalorder %s206, %s208
    %p212 = scmp.eq.s32.totalorder %s67, 0
    %p213 = por %p211, %p212
    %p214 = scmp.ne.s32.totalorder %s206, %s208
    %p215 = scmp.eq.s32.totalorder %s72, 1
    %p216 = por %p214, %p215
    %p217 = scmp.ne.s32.totalorder %s208, %s209
    %p218 = scmp.eq.s32.totalorder %s72, 0
    %p219 = por %p217, %p218
    %p220 = scmp.ne.s32.totalorder %s208, %s209
    %p221 = scmp.eq.s32.totalorder %s73, 1
    %p222 = por %p220, %p221
    %p224 = scmp.ne.s32.totalorder %s209, %s223
    %p225 = scmp.eq.s32.totalorder %s73, 0
    %p226 = por %p224, %p225
    %s228 = sadd.s32 %s227, 1
    %p231 = scmp.eq.s32.totalorder %s67, 1
    %p232 = scmp.ne.s32.totalorder %s227, %s229
    %p233 = scmp.eq.s32.totalorder %s67, 0
    %p234 = por %p232, %p233
    %p235 = scmp.ne.s32.totalorder %s227, %s229
    %p236 = scmp.eq.s32.totalorder %s72, 1
    %p237 = por %p235, %p236
    %p238 = scmp.ne.s32.totalorder %s229, %s230
    %p239 = scmp.eq.s32.totalorder %s72, 0
    %p240 = por %p238, %p239
    %p241 = scmp.ne.s32.totalorder %s229, %s230
    %p242 = scmp.eq.s32.totalorder %s73, 1
    %p243 = por %p241, %p242
    %p245 = scmp.ne.s32.totalorder %s230, %s244
    %p246 = scmp.eq.s32.totalorder %s73, 0
    %p247 = por %p245, %p246
    %s249 = sadd.s32 %s248, 1
    %p252 = scmp.eq.s32.totalorder %s67, 1
    %p253 = scmp.ne.s32.totalorder %s248, %s250
    %p254 = scmp.eq.s32.totalorder %s67, 0
    %p255 = por %p253, %p254
    %p256 = scmp.ne.s32.totalorder %s248, %s250
    %p257 = scmp.eq.s32.totalorder %s72, 1
    %p258 = por %p256, %p257
    %p259 = scmp.ne.s32.totalorder %s250, %s251
    %p260 = scmp.eq.s32.totalorder %s72, 0
    %p261 = por %p259, %p260
    %p262 = scmp.ne.s32.totalorder %s250, %s251
    %p263 = scmp.eq.s32.totalorder %s73, 1
    %p264 = por %p262, %p263
    %p266 = scmp.ne.s32.totalorder %s251, %s265
    %p267 = scmp.eq.s32.totalorder %s73, 0
    %p268 = por %p266, %p267
    %s270 = sadd.s32 %s269, 1
    %p273 = scmp.eq.s32.totalorder %s67, 1
    %p274 = scmp.ne.s32.totalorder %s269, %s271
    %p275 = scmp.eq.s32.totalorder %s67, 0
    %p276 = por %p274, %p275
    %p277 = scmp.ne.s32.totalorder %s269, %s271
    %p278 = scmp.eq.s32.totalorder %s72, 1
    %p279 = por %p277, %p278
    %p280 = scmp.ne.s32.totalorder %s271, %s272
    %p281 = scmp.eq.s32.totalorder %s72, 0
    %p282 = por %p280, %p281
    %p283 = scmp.ne.s32.totalorder %s271, %s272
    %p284 = scmp.eq.s32.totalorder %s73, 1
    %p285 = por %p283, %p284
    %p287 = scmp.ne.s32.totalorder %s272, %s286
    %p288 = scmp.eq.s32.totalorder %s73, 0
    %p289 = por %p287, %p288
    %s291 = sadd.s32 %s290, 1
    %p294 = scmp.eq.s32.totalorder %s67, 1
    %p295 = scmp.ne.s32.totalorder %s290, %s292
    %p296 = scmp.eq.s32.totalorder %s67, 0
    %p297 = por %p295, %p296
    %p298 = scmp.ne.s32.totalorder %s290, %s292
    %p299 = scmp.eq.s32.totalorder %s72, 1
    %p300 = por %p298, %p299
    %p301 = scmp.ne.s32.totalorder %s292, %s293
    %p302 = scmp.eq.s32.totalorder %s72, 0
    %p303 = por %p301, %p302
    %p304 = scmp.ne.s32.totalorder %s292, %s293
    %p305 = scmp.eq.s32.totalorder %s73, 1
    %p306 = por %p304, %p305
    %p308 = scmp.ne.s32.totalorder %s293, %s307
    %p309 = scmp.eq.s32.totalorder %s73, 0
    %p310 = por %p308, %p309
    %s312 = sadd.s32 %s311, 1
    %p315 = scmp.eq.s32.totalorder %s67, 1
    %p316 = scmp.ne.s32.totalorder %s311, %s313
    %p317 = scmp.eq.s32.totalorder %s67, 0
    %p318 = por %p316, %p317
    %p319 = scmp.ne.s32.totalorder %s311, %s313
    %p320 = scmp.eq.s32.totalorder %s72, 1
    %p321 = por %p319, %p320
    %p322 = scmp.ne.s32.totalorder %s313, %s314
    %p323 = scmp.eq.s32.totalorder %s72, 0
    %p324 = por %p322, %p323
    %p325 = scmp.ne.s32.totalorder %s313, %s314
    %p326 = scmp.eq.s32.totalorder %s73, 1
    %p327 = por %p325, %p326
    %p329 = scmp.ne.s32.totalorder %s314, %s328
    %p330 = scmp.eq.s32.totalorder %s73, 0
    %p331 = por %p329, %p330
    %s333 = sadd.s32 %s332, 1
    %p336 = scmp.eq.s32.totalorder %s67, 1
    %p337 = scmp.ne.s32.totalorder %s332, %s334
    %p338 = scmp.eq.s32.totalorder %s67, 0
    %p339 = por %p337, %p338
    %p340 = scmp.ne.s32.totalorder %s332, %s334
    %p341 = scmp.eq.s32.totalorder %s72, 1
    %p342 = por %p340, %p341
    %p343 = scmp.ne.s32.totalorder %s334, %s335
    %p344 = scmp.eq.s32.totalorder %s72, 0
    %p345 = por %p343, %p344
    %p346 = scmp.ne.s32.totalorder %s334, %s335
    %p347 = scmp.eq.s32.totalorder %s73, 1
    %p348 = por %p346, %p347
    %p350 = scmp.ne.s32.totalorder %s335, %s349
    %p351 = scmp.eq.s32.totalorder %s73, 0
    %p352 = por %p350, %p351
    %s354 = sadd.s32 %s353, 1
    %p357 = scmp.eq.s32.totalorder %s67, 1
    %p358 = scmp.ne.s32.totalorder %s353, %s355
    %p359 = scmp.eq.s32.totalorder %s67, 0
    %p360 = por %p358, %p359
    %p361 = scmp.ne.s32.totalorder %s353, %s355
    %p362 = scmp.eq.s32.totalorder %s72, 1
    %p363 = por %p361, %p362
    %p364 = scmp.ne.s32.totalorder %s355, %s356
    %p365 = scmp.eq.s32.totalorder %s72, 0
    %p366 = por %p364, %p365
    %p367 = scmp.ne.s32.totalorder %s355, %s356
    %p368 = scmp.eq.s32.totalorder %s73, 1
    %p369 = por %p367, %p368
    %p371 = scmp.ne.s32.totalorder %s356, %s370
    %p372 = scmp.eq.s32.totalorder %s73, 0
    %p373 = por %p371, %p372
    %s375 = sadd.s32 %s374, 1
    %p378 = scmp.eq.s32.totalorder %s67, 1
    %p379 = scmp.ne.s32.totalorder %s374, %s376
    %p380 = scmp.eq.s32.totalorder %s67, 0
    %p381 = por %p379, %p380
    %p382 = scmp.ne.s32.totalorder %s374, %s376
    %p383 = scmp.eq.s32.totalorder %s72, 1
    %p384 = por %p382, %p383
    %p385 = scmp.ne.s32.totalorder %s376, %s377
    %p386 = scmp.eq.s32.totalorder %s72, 0
    %p387 = por %p385, %p386
    %p388 = scmp.ne.s32.totalorder %s376, %s377
    %p389 = scmp.eq.s32.totalorder %s73, 1
    %p390 = por %p388, %p389
    %p392 = scmp.ne.s32.totalorder %s377, %s391
    %p393 = scmp.eq.s32.totalorder %s73, 0
    %p394 = por %p392, %p393
    %s396 = sadd.s32 %s395, 1
    %p399 = scmp.eq.s32.totalorder %s67, 1
    %p400 = scmp.ne.s32.totalorder %s395, %s397
    %p401 = scmp.eq.s32.totalorder %s67, 0
    %p402 = por %p400, %p401
    %p403 = scmp.ne.s32.totalorder %s395, %s397
    %p404 = scmp.eq.s32.totalorder %s72, 1
    %p405 = por %p403, %p404
    %p406 = scmp.ne.s32.totalorder %s397, %s398
    %p407 = scmp.eq.s32.totalorder %s72, 0
    %p408 = por %p406, %p407
    %p409 = scmp.ne.s32.totalorder %s397, %s398
    %p410 = scmp.eq.s32.totalorder %s73, 1
    %p411 = por %p409, %p410
    %p413 = scmp.ne.s32.totalorder %s398, %s412
    %p414 = scmp.eq.s32.totalorder %s73, 0
    %p415 = por %p413, %p414
    %s417 = sadd.s32 %s416, 1
    %p420 = scmp.eq.s32.totalorder %s67, 1
    %p421 = scmp.ne.s32.totalorder %s416, %s418
    %p422 = scmp.eq.s32.totalorder %s67, 0
    %p423 = por %p421, %p422
    %p424 = scmp.ne.s32.totalorder %s416, %s418
    %p425 = scmp.eq.s32.totalorder %s72, 1
    %p426 = por %p424, %p425
    %p427 = scmp.ne.s32.totalorder %s418, %s419
    %p428 = scmp.eq.s32.totalorder %s72, 0
    %p429 = por %p427, %p428
    %p430 = scmp.ne.s32.totalorder %s418, %s419
    %p431 = scmp.eq.s32.totalorder %s73, 1
    %p432 = por %p430, %p431
    %p434 = scmp.ne.s32.totalorder %s419, %s433
    %p435 = scmp.eq.s32.totalorder %s73, 0
    %p436 = por %p434, %p435
    %s438 = sadd.s32 %s437, 1
    %p441 = scmp.eq.s32.totalorder %s67, 1
    %p442 = scmp.ne.s32.totalorder %s437, %s439
    %p443 = scmp.eq.s32.totalorder %s67, 0
    %p444 = por %p442, %p443
    %p445 = scmp.ne.s32.totalorder %s437, %s439
    %p446 = scmp.eq.s32.totalorder %s72, 1
    %p447 = por %p445, %p446
    %p448 = scmp.ne.s32.totalorder %s439, %s440
    %p449 = scmp.eq.s32.totalorder %s72, 0
    %p450 = por %p448, %p449
    %p451 = scmp.ne.s32.totalorder %s439, %s440
    %p452 = scmp.eq.s32.totalorder %s73, 1
    %p453 = por %p451, %p452
    %p455 = scmp.ne.s32.totalorder %s440, %s454
    %p456 = scmp.eq.s32.totalorder %s73, 0
    %p457 = por %p455, %p456
    %s459 = sadd.s32 %s458, 1
    %p462 = scmp.eq.s32.totalorder %s67, 1
    %p463 = scmp.ne.s32.totalorder %s458, %s460
    %p464 = scmp.eq.s32.totalorder %s67, 0
    %p465 = por %p463, %p464
    %p466 = scmp.ne.s32.totalorder %s458, %s460
    %p467 = scmp.eq.s32.totalorder %s72, 1
    %p468 = por %p466, %p467
    %p469 = scmp.ne.s32.totalorder %s460, %s461
    %p470 = scmp.eq.s32.totalorder %s72, 0
    %p471 = por %p469, %p470
    %p472 = scmp.ne.s32.totalorder %s460, %s461
    %p473 = scmp.eq.s32.totalorder %s73, 1
    %p474 = por %p472, %p473
    %p476 = scmp.ne.s32.totalorder %s461, %s475
    %p477 = scmp.eq.s32.totalorder %s73, 0
    %p478 = por %p476, %p477
    %s480 = sadd.s32 %s479, 1
    %p483 = scmp.eq.s32.totalorder %s67, 1
    %p484 = scmp.ne.s32.totalorder %s479, %s481
    %p485 = scmp.eq.s32.totalorder %s67, 0
    %p486 = por %p484, %p485
    %p487 = scmp.ne.s32.totalorder %s479, %s481
    %p488 = scmp.eq.s32.totalorder %s72, 1
    %p489 = por %p487, %p488
    %p490 = scmp.ne.s32.totalorder %s481, %s482
    %p491 = scmp.eq.s32.totalorder %s72, 0
    %p492 = por %p490, %p491
    %p493 = scmp.ne.s32.totalorder %s481, %s482
    %p494 = scmp.eq.s32.totalorder %s73, 1
    %p495 = por %p493, %p494
    %p497 = scmp.ne.s32.totalorder %s482, %s496
    %p498 = scmp.eq.s32.totalorder %s73, 0
    %p499 = por %p497, %p498
    %s501 = sadd.s32 %s500, 1
    %p504 = scmp.eq.s32.totalorder %s67, 1
    %p505 = scmp.ne.s32.totalorder %s500, %s502
    %p506 = scmp.eq.s32.totalorder %s67, 0
    %p507 = por %p505, %p506
    %p508 = scmp.ne.s32.totalorder %s500, %s502
    %p509 = scmp.eq.s32.totalorder %s72, 1
    %p510 = por %p508, %p509
    %p511 = scmp.ne.s32.totalorder %s502, %s503
    %p512 = scmp.eq.s32.totalorder %s72, 0
    %p513 = por %p511, %p512
    %p514 = scmp.ne.s32.totalorder %s502, %s503
    %p515 = scmp.eq.s32.totalorder %s73, 1
    %p516 = por %p514, %p515
    %p518 = scmp.ne.s32.totalorder %s503, %s517
    %p519 = scmp.eq.s32.totalorder %s73, 0
    %p520 = por %p518, %p519
    %s522 = sadd.s32 %s521, 1
    %p525 = scmp.eq.s32.totalorder %s67, 1
    %p526 = scmp.ne.s32.totalorder %s521, %s523
    %p527 = scmp.eq.s32.totalorder %s67, 0
    %p528 = por %p526, %p527
    %p529 = scmp.ne.s32.totalorder %s521, %s523
    %p530 = scmp.eq.s32.totalorder %s72, 1
    %p531 = por %p529, %p530
    %p532 = scmp.ne.s32.totalorder %s523, %s524
    %p533 = scmp.eq.s32.totalorder %s72, 0
    %p534 = por %p532, %p533
    %p535 = scmp.ne.s32.totalorder %s523, %s524
    %p536 = scmp.eq.s32.totalorder %s73, 1
    %p537 = por %p535, %p536
    %p539 = scmp.ne.s32.totalorder %s524, %s538
    %p540 = scmp.eq.s32.totalorder %s73, 0
    %p541 = por %p539, %p540
    %s543 = sadd.s32 %s542, 1
    %p546 = scmp.eq.s32.totalorder %s67, 1
    %p547 = scmp.ne.s32.totalorder %s542, %s544
    %p548 = scmp.eq.s32.totalorder %s67, 0
    %p549 = por %p547, %p548
    %p550 = scmp.ne.s32.totalorder %s542, %s544
    %p551 = scmp.eq.s32.totalorder %s72, 1
    %p552 = por %p550, %p551
    %p553 = scmp.ne.s32.totalorder %s544, %s545
    %p554 = scmp.eq.s32.totalorder %s72, 0
    %p555 = por %p553, %p554
    %p556 = scmp.ne.s32.totalorder %s544, %s545
    %p557 = scmp.eq.s32.totalorder %s73, 1
    %p558 = por %p556, %p557
    %p560 = scmp.ne.s32.totalorder %s545, %s559
    %p561 = scmp.eq.s32.totalorder %s73, 0
    %p562 = por %p560, %p561
    %s564 = sadd.s32 %s563, 1
    %p567 = scmp.eq.s32.totalorder %s67, 1
    %p568 = scmp.ne.s32.totalorder %s563, %s565
    %p569 = scmp.eq.s32.totalorder %s67, 0
    %p570 = por %p568, %p569
    %p571 = scmp.ne.s32.totalorder %s563, %s565
    %p572 = scmp.eq.s32.totalorder %s72, 1
    %p573 = por %p571, %p572
    %p574 = scmp.ne.s32.totalorder %s565, %s566
    %p575 = scmp.eq.s32.totalorder %s72, 0
    %p576 = por %p574, %p575
    %p577 = scmp.ne.s32.totalorder %s565, %s566
    %p578 = scmp.eq.s32.totalorder %s73, 1
    %p579 = por %p577, %p578
    %p581 = scmp.ne.s32.totalorder %s566, %s580
    %p582 = scmp.eq.s32.totalorder %s73, 0
    %p583 = por %p581, %p582
    %s585 = sadd.s32 %s584, 1
    %p588 = scmp.eq.s32.totalorder %s67, 1
    %p589 = scmp.ne.s32.totalorder %s584, %s586
    %p590 = scmp.eq.s32.totalorder %s67, 0
    %p591 = por %p589, %p590
    %p592 = scmp.ne.s32.totalorder %s584, %s586
    %p593 = scmp.eq.s32.totalorder %s72, 1
    %p594 = por %p592, %p593
    %p595 = scmp.ne.s32.totalorder %s586, %s587
    %p596 = scmp.eq.s32.totalorder %s72, 0
    %p597 = por %p595, %p596
    %p598 = scmp.ne.s32.totalorder %s586, %s587
    %p599 = scmp.eq.s32.totalorder %s73, 1
    %p600 = por %p598, %p599
    %p602 = scmp.ne.s32.totalorder %s587, %s601
    %p603 = scmp.eq.s32.totalorder %s73, 0
    %p604 = por %p602, %p603
    %s606 = sadd.s32 %s605, 1
    %p609 = scmp.eq.s32.totalorder %s67, 1
    %p610 = scmp.ne.s32.totalorder %s605, %s607
    %p611 = scmp.eq.s32.totalorder %s67, 0
    %p612 = por %p610, %p611
    %p613 = scmp.ne.s32.totalorder %s605, %s607
    %p614 = scmp.eq.s32.totalorder %s72, 1
    %p615 = por %p613, %p614
    %p616 = scmp.ne.s32.totalorder %s607, %s608
    %p617 = scmp.eq.s32.totalorder %s72, 0
    %p618 = por %p616, %p617
    %p619 = scmp.ne.s32.totalorder %s607, %s608
    %p620 = scmp.eq.s32.totalorder %s73, 1
    %p621 = por %p619, %p620
    %p623 = scmp.ne.s32.totalorder %s608, %s622
    %p624 = scmp.eq.s32.totalorder %s73, 0
    %p625 = por %p623, %p624
    %s627 = sadd.s32 %s626, 1
    %p630 = scmp.eq.s32.totalorder %s67, 1
    %p631 = scmp.ne.s32.totalorder %s626, %s628
    %p632 = scmp.eq.s32.totalorder %s67, 0
    %p633 = por %p631, %p632
    %p634 = scmp.ne.s32.totalorder %s626, %s628
    %p635 = scmp.eq.s32.totalorder %s72, 1
    %p636 = por %p634, %p635
    %p637 = scmp.ne.s32.totalorder %s628, %s629
    %p638 = scmp.eq.s32.totalorder %s72, 0
    %p639 = por %p637, %p638
    %p640 = scmp.ne.s32.totalorder %s628, %s629
    %p641 = scmp.eq.s32.totalorder %s73, 1
    %p642 = por %p640, %p641
    %p644 = scmp.ne.s32.totalorder %s629, %s643
    %p645 = scmp.eq.s32.totalorder %s73, 0
    %p646 = por %p644, %p645
    %s648 = sadd.s32 %s647, 1
    %p651 = scmp.eq.s32.totalorder %s67, 1
    %p652 = scmp.ne.s32.totalorder %s647, %s649
    %p653 = scmp.eq.s32.totalorder %s67, 0
    %p654 = por %p652, %p653
    %p655 = scmp.ne.s32.totalorder %s647, %s649
    %p656 = scmp.eq.s32.totalorder %s72, 1
    %p657 = por %p655, %p656
    %p658 = scmp.ne.s32.totalorder %s649, %s650
    %p659 = scmp.eq.s32.totalorder %s72, 0
    %p660 = por %p658, %p659
    %p661 = scmp.ne.s32.totalorder %s649, %s650
    %p662 = scmp.eq.s32.totalorder %s73, 1
    %p663 = por %p661, %p662
    %p665 = scmp.ne.s32.totalorder %s650, %s664
    %p666 = scmp.eq.s32.totalorder %s73, 0
    %p667 = por %p665, %p666
    %s669 = sadd.s32 %s668, 1
    %p672 = scmp.eq.s32.totalorder %s67, 1
    %p673 = scmp.ne.s32.totalorder %s668, %s670
    %p674 = scmp.eq.s32.totalorder %s67, 0
    %p675 = por %p673, %p674
    %p676 = scmp.ne.s32.totalorder %s668, %s670
    %p677 = scmp.eq.s32.totalorder %s72, 1
    %p678 = por %p676, %p677
    %p679 = scmp.ne.s32.totalorder %s670, %s671
    %p680 = scmp.eq.s32.totalorder %s72, 0
    %p681 = por %p679, %p680
    %p682 = scmp.ne.s32.totalorder %s670, %s671
    %p683 = scmp.eq.s32.totalorder %s73, 1
    %p684 = por %p682, %p683
    %p686 = scmp.ne.s32.totalorder %s671, %s685
    %p687 = scmp.eq.s32.totalorder %s73, 0
    %p688 = por %p686, %p687
    %s689 = ssub.s32 %s67, %s74
    %p690 = scmp.eq.s32.totalorder %s689, 0
    %s692 = sadd.s32 %s691, 1
    %s693 = scalar_select %p690, %s691, %s692
    %p696 = pneg %p690
    %p697 = scmp.eq.s32.totalorder %s67, 1
    %p698 = por %p696, %p697
    %p699 = scmp.ne.s32.totalorder %s691, %s694
    %p700 = scmp.eq.s32.totalorder %s67, 0
    %p701 = por %p699, %p700
    %p702 = scmp.ne.s32.totalorder %s691, %s694
    %p703 = scmp.eq.s32.totalorder %s72, 1
    %p704 = por %p702, %p703
    %p705 = scmp.ne.s32.totalorder %s694, %s695
    %p706 = scmp.eq.s32.totalorder %s72, 0
    %p707 = por %p705, %p706
    %p708 = scmp.ne.s32.totalorder %s694, %s695
    %p709 = scmp.eq.s32.totalorder %s73, 1
    %p710 = por %p708, %p709
    %p712 = scmp.ne.s32.totalorder %s695, %s711
    %p713 = scmp.eq.s32.totalorder %s73, 0
    %p714 = por %p712, %p713
    %p715 = scmp.le.s32.totalorder 1, %s67
    %p716 = scmp.lt.s32.totalorder %s67, 3
    %p717 = pnand %p715, %p716
    %p718 = pneg %p717
    // Predicated region
    $region9: #{pinn_forward.1} parent=5 // pred_check
      _
    $region10: #{pinn_forward.1} parent=5 // pred_check_branch
      %720 = sbr.rel (%p717) target = $region12
    $region11: #{pinn_forward.1} parent=5 // pred_region
      %s721 = ssub.s32 %s67, 1
      // Predicated region
      $region13: #{pinn_forward.1} parent=11 // pred_check
        %p722 = pneg %p114
      $region14: #{pinn_forward.1} parent=11 // pred_check_branch
        %724 = sbr.rel (%p722) target = $region16
      $region15: #{pinn_forward.1} parent=11 // pred_region
        _
      $region16: #{pinn_forward.1} parent=11 // pred_fallthru
        _
      // Predicated region
      $region17: #{pinn_forward.1} parent=11 // pred_check
        %p725 = pneg %p135
      $region18: #{pinn_forward.1} parent=11 // pred_check_branch
        %727 = sbr.rel (%p725) target = $region20
      $region19: #{pinn_forward.1} parent=11 // pred_region
        _
      $region20: #{pinn_forward.1} parent=11 // pred_fallthru
        _
      // Predicated region
      $region21: #{pinn_forward.1} parent=11 // pred_check
        %p728 = pneg %p156
      $region22: #{pinn_forward.1} parent=11 // pred_check_branch
        %730 = sbr.rel (%p728) target = $region24
      $region23: #{pinn_forward.1} parent=11 // pred_region
        _
      $region24: #{pinn_forward.1} parent=11 // pred_fallthru
        _
      // Predicated region
      $region25: #{pinn_forward.1} parent=11 // pred_check
        %p731 = pneg %p177
      $region26: #{pinn_forward.1} parent=11 // pred_check_branch
        %733 = sbr.rel (%p731) target = $region28
      $region27: #{pinn_forward.1} parent=11 // pred_region
        _
      $region28: #{pinn_forward.1} parent=11 // pred_fallthru
        _
      // Predicated region
      $region29: #{pinn_forward.1} parent=11 // pred_check
        %p734 = pneg %p198
      $region30: #{pinn_forward.1} parent=11 // pred_check_branch
        %736 = sbr.rel (%p734) target = $region32
      $region31: #{pinn_forward.1} parent=11 // pred_region
        _
      $region32: #{pinn_forward.1} parent=11 // pred_fallthru
        _
      // Predicated region
      $region33: #{pinn_forward.1} parent=11 // pred_check
        %p737 = pneg %p219
      $region34: #{pinn_forward.1} parent=11 // pred_check_branch
        %739 = sbr.rel (%p737) target = $region36
      $region35: #{pinn_forward.1} parent=11 // pred_region
        _
      $region36: #{pinn_forward.1} parent=11 // pred_fallthru
        _
      // Predicated region
      $region37: #{pinn_forward.1} parent=11 // pred_check
        %p740 = pneg %p240
      $region38: #{pinn_forward.1} parent=11 // pred_check_branch
        %742 = sbr.rel (%p740) target = $region40
      $region39: #{pinn_forward.1} parent=11 // pred_region
        _
      $region40: #{pinn_forward.1} parent=11 // pred_fallthru
        _
      // Predicated region
      $region41: #{pinn_forward.1} parent=11 // pred_check
        %p743 = pneg %p261
      $region42: #{pinn_forward.1} parent=11 // pred_check_branch
        %745 = sbr.rel (%p743) target = $region44
      $region43: #{pinn_forward.1} parent=11 // pred_region
        _
      $region44: #{pinn_forward.1} parent=11 // pred_fallthru
        _
      // Predicated region
      $region45: #{pinn_forward.1} parent=11 // pred_check
        %p746 = pneg %p282
      $region46: #{pinn_forward.1} parent=11 // pred_check_branch
        %748 = sbr.rel (%p746) target = $region48
      $region47: #{pinn_forward.1} parent=11 // pred_region
        _
      $region48: #{pinn_forward.1} parent=11 // pred_fallthru
        _
      // Predicated region
      $region49: #{pinn_forward.1} parent=11 // pred_check
        %p749 = pneg %p303
      $region50: #{pinn_forward.1} parent=11 // pred_check_branch
        %751 = sbr.rel (%p749) target = $region52
      $region51: #{pinn_forward.1} parent=11 // pred_region
        _
      $region52: #{pinn_forward.1} parent=11 // pred_fallthru
        _
      // Predicated region
      $region53: #{pinn_forward.1} parent=11 // pred_check
        %p752 = pneg %p324
      $region54: #{pinn_forward.1} parent=11 // pred_check_branch
        %754 = sbr.rel (%p752) target = $region56
      $region55: #{pinn_forward.1} parent=11 // pred_region
        _
      $region56: #{pinn_forward.1} parent=11 // pred_fallthru
        _
      // Predicated region
      $region57: #{pinn_forward.1} parent=11 // pred_check
        %p755 = pneg %p345
      $region58: #{pinn_forward.1} parent=11 // pred_check_branch
        %757 = sbr.rel (%p755) target = $region60
      $region59: #{pinn_forward.1} parent=11 // pred_region
        _
      $region60: #{pinn_forward.1} parent=11 // pred_fallthru
        _
      // Predicated region
      $region61: #{pinn_forward.1} parent=11 // pred_check
        %p758 = pneg %p366
      $region62: #{pinn_forward.1} parent=11 // pred_check_branch
        %760 = sbr.rel (%p758) target = $region64
      $region63: #{pinn_forward.1} parent=11 // pred_region
        _
      $region64: #{pinn_forward.1} parent=11 // pred_fallthru
        _
      // Predicated region
      $region65: #{pinn_forward.1} parent=11 // pred_check
        %p761 = pneg %p387
      $region66: #{pinn_forward.1} parent=11 // pred_check_branch
        %763 = sbr.rel (%p761) target = $region68
      $region67: #{pinn_forward.1} parent=11 // pred_region
        _
      $region68: #{pinn_forward.1} parent=11 // pred_fallthru
        _
      // Predicated region
      $region69: #{pinn_forward.1} parent=11 // pred_check
        %p764 = pneg %p408
      $region70: #{pinn_forward.1} parent=11 // pred_check_branch
        %766 = sbr.rel (%p764) target = $region72
      $region71: #{pinn_forward.1} parent=11 // pred_region
        _
      $region72: #{pinn_forward.1} parent=11 // pred_fallthru
        _
      // Predicated region
      $region73: #{pinn_forward.1} parent=11 // pred_check
        %p767 = pneg %p429
      $region74: #{pinn_forward.1} parent=11 // pred_check_branch
        %769 = sbr.rel (%p767) target = $region76
      $region75: #{pinn_forward.1} parent=11 // pred_region
        _
      $region76: #{pinn_forward.1} parent=11 // pred_fallthru
        _
      // Predicated region
      $region77: #{pinn_forward.1} parent=11 // pred_check
        %p770 = pneg %p450
      $region78: #{pinn_forward.1} parent=11 // pred_check_branch
        %772 = sbr.rel (%p770) target = $region80
      $region79: #{pinn_forward.1} parent=11 // pred_region
        _
      $region80: #{pinn_forward.1} parent=11 // pred_fallthru
        _
      // Predicated region
      $region81: #{pinn_forward.1} parent=11 // pred_check
        %p773 = pneg %p471
      $region82: #{pinn_forward.1} parent=11 // pred_check_branch
        %775 = sbr.rel (%p773) target = $region84
      $region83: #{pinn_forward.1} parent=11 // pred_region
        _
      $region84: #{pinn_forward.1} parent=11 // pred_fallthru
        _
      // Predicated region
      $region85: #{pinn_forward.1} parent=11 // pred_check
        %p776 = pneg %p492
      $region86: #{pinn_forward.1} parent=11 // pred_check_branch
        %778 = sbr.rel (%p776) target = $region88
      $region87: #{pinn_forward.1} parent=11 // pred_region
        _
      $region88: #{pinn_forward.1} parent=11 // pred_fallthru
        _
      // Predicated region
      $region89: #{pinn_forward.1} parent=11 // pred_check
        %p779 = pneg %p513
      $region90: #{pinn_forward.1} parent=11 // pred_check_branch
        %781 = sbr.rel (%p779) target = $region92
      $region91: #{pinn_forward.1} parent=11 // pred_region
        _
      $region92: #{pinn_forward.1} parent=11 // pred_fallthru
        _
      // Predicated region
      $region93: #{pinn_forward.1} parent=11 // pred_check
        %p782 = pneg %p534
      $region94: #{pinn_forward.1} parent=11 // pred_check_branch
        %784 = sbr.rel (%p782) target = $region96
      $region95: #{pinn_forward.1} parent=11 // pred_region
        _
      $region96: #{pinn_forward.1} parent=11 // pred_fallthru
        _
      // Predicated region
      $region97: #{pinn_forward.1} parent=11 // pred_check
        %p785 = pneg %p555
      $region98: #{pinn_forward.1} parent=11 // pred_check_branch
        %787 = sbr.rel (%p785) target = $region100
      $region99: #{pinn_forward.1} parent=11 // pred_region
        _
      $region100: #{pinn_forward.1} parent=11 // pred_fallthru
        _
      // Predicated region
      $region101: #{pinn_forward.1} parent=11 // pred_check
        %p788 = pneg %p576
      $region102: #{pinn_forward.1} parent=11 // pred_check_branch
        %790 = sbr.rel (%p788) target = $region104
      $region103: #{pinn_forward.1} parent=11 // pred_region
        _
      $region104: #{pinn_forward.1} parent=11 // pred_fallthru
        _
      // Predicated region
      $region105: #{pinn_forward.1} parent=11 // pred_check
        %p791 = pneg %p597
      $region106: #{pinn_forward.1} parent=11 // pred_check_branch
        %793 = sbr.rel (%p791) target = $region108
      $region107: #{pinn_forward.1} parent=11 // pred_region
        _
      $region108: #{pinn_forward.1} parent=11 // pred_fallthru
        _
      // Predicated region
      $region109: #{pinn_forward.1} parent=11 // pred_check
        %p794 = pneg %p618
      $region110: #{pinn_forward.1} parent=11 // pred_check_branch
        %796 = sbr.rel (%p794) target = $region112
      $region111: #{pinn_forward.1} parent=11 // pred_region
        _
      $region112: #{pinn_forward.1} parent=11 // pred_fallthru
        _
      // Predicated region
      $region113: #{pinn_forward.1} parent=11 // pred_check
        %p797 = pneg %p639
      $region114: #{pinn_forward.1} parent=11 // pred_check_branch
        %799 = sbr.rel (%p797) target = $region116
      $region115: #{pinn_forward.1} parent=11 // pred_region
        _
      $region116: #{pinn_forward.1} parent=11 // pred_fallthru
        _
      // Predicated region
      $region117: #{pinn_forward.1} parent=11 // pred_check
        %p800 = pneg %p660
      $region118: #{pinn_forward.1} parent=11 // pred_check_branch
        %802 = sbr.rel (%p800) target = $region120
      $region119: #{pinn_forward.1} parent=11 // pred_region
        _
      $region120: #{pinn_forward.1} parent=11 // pred_fallthru
        _
      // Predicated region
      $region121: #{pinn_forward.1} parent=11 // pred_check
        %p803 = pneg %p681
      $region122: #{pinn_forward.1} parent=11 // pred_check_branch
        %805 = sbr.rel (%p803) target = $region124
      $region123: #{pinn_forward.1} parent=11 // pred_region
        _
      $region124: #{pinn_forward.1} parent=11 // pred_fallthru
        _
    $region12: #{pinn_forward.1} parent=5 // pred_fallthru
      _
    %p806 = scmp.lt.s32.totalorder %s67, 2
    // Predicated region
    $region125: #{pinn_forward.1} parent=5 // pred_check
      %p807 = pneg %p806
    $region126: #{pinn_forward.1} parent=5 // pred_check_branch
      %809 = sbr.rel (%p807) target = $region128
    $region127: #{pinn_forward.1} parent=5 // pred_region
      // Predicated region
      $region129: #{pinn_forward.1} parent=127 // pred_check
        %p810 = pneg %p87
      $region130: #{pinn_forward.1} parent=127 // pred_check_branch
        %812 = sbr.rel (%p810) target = $region132
      $region131: #{pinn_forward.1} parent=127 // pred_region
        %p813 = scmp.lt.s32.totalorder %s67, 1
        %s814 = scalar_select %p813, %s67, 1
        %s815 = smul.addr %s814, 8
        %s816 = scalar_lea.vmem %s1, %s815
      $region132: #{pinn_forward.1} parent=127 // pred_fallthru
        _
    $region128: #{pinn_forward.1} parent=5 // pred_fallthru
      _
    %p817 = scmp.le.s32.totalorder 1, %s67
    %p818 = scmp.lt.s32.totalorder %s67, 3
    %p819 = pnand %p817, %p818
    %p820 = pneg %p819
    // Predicated region
    $region133: #{pinn_forward.1} parent=5 // pred_check
      _
    $region134: #{pinn_forward.1} parent=5 // pred_check_branch
      %822 = sbr.rel (%p819) target = $region136
    $region135: #{pinn_forward.1} parent=5 // pred_region
      %s823 = ssub.s32 %s67, 1
      %p824 = scmp.lt.s32.totalorder %s72, 1
      %s825 = scalar_select %p824, %s72, 1
      %s826 = smul.addr %s825, 8
      %s827 = scalar_lea.vmem %s1, %s826
      %p828 = pneg %p93
      %p829 = pneg %p90
      %p830 = pneg %p114
      %p831 = pneg %p111
      %p832 = pneg %p135
      %p833 = pneg %p132
      %p834 = pneg %p156
      %p835 = pneg %p153
      %p836 = pneg %p177
      %p837 = pneg %p174
      %p838 = pneg %p198
      %p839 = pneg %p195
      %p840 = pneg %p219
      %p841 = pneg %p216
      %p842 = pneg %p240
      %p843 = pneg %p237
      %p844 = pneg %p261
      %p845 = pneg %p258
      %p846 = pneg %p282
      %p847 = pneg %p279
      %p848 = pneg %p303
      %p849 = pneg %p300
      %p850 = pneg %p324
      %p851 = pneg %p321
      %p852 = pneg %p345
      %p853 = pneg %p342
      %p854 = pneg %p366
      %p855 = pneg %p363
      %p856 = pneg %p387
      %p857 = pneg %p384
      %p858 = pneg %p408
      %p859 = pneg %p405
      %p860 = pneg %p429
      %p861 = pneg %p426
      %p862 = pneg %p450
      %p863 = pneg %p447
      %p864 = pneg %p471
      %p865 = pneg %p468
      %p866 = pneg %p492
      %p867 = pneg %p489
      %p868 = pneg %p513
      %p869 = pneg %p510
      %p870 = pneg %p534
      %p871 = pneg %p531
      %p872 = pneg %p555
      %p873 = pneg %p552
      %p874 = pneg %p576
      %p875 = pneg %p573
      %p876 = pneg %p597
      %p877 = pneg %p594
      %p878 = pneg %p618
      %p879 = pneg %p615
      %p880 = pneg %p639
      %p881 = pneg %p636
      %p882 = pneg %p660
      %p883 = pneg %p657
      %p884 = pneg %p681
      %p885 = pneg %p678
      %p886 = pneg %p707
      %p887 = pneg %p704
      %p888 = scmp.lt.s32.totalorder %s72, 1
      %s889 = scalar_select %p888, %s72, 1
      %s890 = smul.addr %s889, 8
      %s891 = scalar_lea.vmem %s59, %s890
      %p892 = scmp.lt.s32.totalorder %s72, 1
      %s893 = scalar_select %p892, %s72, 1
      %s894 = smul.addr %s893, 8
      %s895 = scalar_lea.vmem %s1, %s894
      %p896 = scmp.lt.s32.totalorder %s72, 1
      %s897 = scalar_select %p896, %s72, 1
      %s898 = smul.addr %s897, 8
      %s899 = scalar_lea.vmem %s59, %s898
      %v900 = vld [vmem:[%s895] sm:$0xff]
      %v901 = vld [vmem:[%s3] sm:$0xff]
      %v902 = vld [vmem:[%s5] sm:$0x1]
      %v904 = vperm.slane %v902, 0
      %vm906 = vcmask 64512
      %v908 = vsel %vm906, %v900, 0
      %910 = vmatpush.msra.mxu0 0.0
      %911 = vmatpush.msra.mxu0 0.0
      %912 = vmatpush.msra.mxu0 0.0
      %913 = vmatpush.msra.mxu0 0.0
      %914 = vmatpush.msra.mxu0 0.0
      %915 = vmatpush.msra.mxu0 0.0
      %916 = vmatpush.msra.mxu0 0.0
      %917 = vmatpush.msra.mxu0 0.0
      %918 = vmatpush.msra.mxu0 0.0
      %919 = vmatpush.msra.mxu0 0.0
      %920 = vmatpush.msra.mxu0 0.0
      %921 = vmatpush.msra.mxu0 0.0
      %922 = vmatpush.msra.mxu0 0.0
      %923 = vmatpush.msra.mxu0 0.0
      %924 = vmatpush.msra.mxu0 0.0
      %925 = vmatpush.msra.mxu0 %v901
      %926 = vmatmul.f32.gmra.mxu0 %v908
      %v927 = vpop.f32.mrf.mxu0
      %v928 = vadd.f32 %v904, %v927
      %929 = vdwg.mxu0
      %v930 = vld [vmem:[%s7] sm:$0xff]
      %v931 = vld [vmem:[%s7 + $0x8] sm:$0xff]
      %v932 = vld [vmem:[%s7 + $0x10] sm:$0xff]
      %v933 = vld [vmem:[%s7 + $0x18] sm:$0xff]
      %v934 = vld [vmem:[%s9] sm:$0x1]
      %v936 = vperm.slane %v934, 0
      %vm938 = vcmask 261120
      %v940 = vsel %vm938, %v928, 0
      %942 = vmatpush.msra.mxu0 0.0
      %943 = vmatpush.msra.mxu0 0.0
      %944 = vmatpush.msra.mxu0 0.0
      %945 = vmatpush.msra.mxu0 0.0
      %946 = vmatpush.msra.mxu0 0.0
      %947 = vmatpush.msra.mxu0 0.0
      %948 = vmatpush.msra.mxu0 0.0
      %949 = vmatpush.msra.mxu0 0.0
      %950 = vmatpush.msra.mxu0 0.0
      %951 = vmatpush.msra.mxu0 0.0
      %952 = vmatpush.msra.mxu0 0.0
      %953 = vmatpush.msra.mxu0 0.0
      %954 = vmatpush.msra.mxu0 %v933
      %955 = vmatpush.msra.mxu0 %v932
      %956 = vmatpush.msra.mxu0 %v931
      %957 = vmatpush.msra.mxu0 %v930
      %958 = vmatmul.f32.gmra.mxu0 %v940
      %v959 = vpop.f32.mrf.mxu0
      %v960 = vadd.f32 %v936, %v959
      %961 = vdwg.mxu0
      %v962 = vmul.f32 %v960, 0.35355338
      %964 = vrot.lane.b32.xlu0 %v960, 96
      %v965 = vpop.permute.xlu0 %964
      %v967 = vsel %vm906, %v962, 0
      %v969 = vsel %vm906, %v965, 0
      %971 = vmatpush.xpose.msra.mxu0 0.0
      %972 = vmatpush.xpose.msra.mxu0 0.0
      %973 = vmatpush.xpose.msra.mxu0 0.0
      %974 = vmatpush.xpose.msra.mxu0 0.0
      %975 = vmatpush.xpose.msra.mxu0 0.0
      %976 = vmatpush.xpose.msra.mxu0 0.0
      %977 = vmatpush.xpose.msra.mxu0 0.0
      %978 = vmatpush.xpose.msra.mxu0 0.0
      %979 = vmatpush.xpose.msra.mxu0 0.0
      %980 = vmatpush.xpose.msra.mxu0 0.0
      %981 = vmatpush.xpose.msra.mxu0 0.0
      %982 = vmatpush.xpose.msra.mxu0 0.0
      %983 = vmatpush.xpose.msra.mxu0 0.0
      %984 = vmatpush.xpose.msra.mxu0 0.0
      %985 = vmatpush.xpose.msra.mxu0 0.0
      %986 = vmatpush.xpose.msra.mxu0 %v969
      %987 = vmatmul.f32.gmra.mxu0 %v967
      %v988 = vpop.f32.mrf.mxu0
      %v989 = vadd.f32 0.0, %v988
      %990 = vdwg.mxu0
      %v991 = vsel %vm906, %v989, -inf
      %992 = vmax.xlane.f32.xlu0 %v991
      %v993 = vpop.xlane.xlu0 %992
      %v994 = vsub.f32 %v989, %v993
      %v995 = vmul.f32 %v994, 1.442695
      %v996 = vpow.pop %v995
      %v997 = vsel %vm906, %v996, 0.0
      %998 = vadd.xlane.f32.xlu0 %v997
      %v999 = vpop.xlane.xlu0 %998
      %v1000 = vrcp.pop %v999
      %v1001 = vmul.f32 %v999, %v1000
      %v1002 = vsub.f32 1.0, %v1001
      %v1003 = vmul.f32 %v1000, %v1002
      %v1004 = vadd.f32 %v1000, %v1003
      %vm1005 = vweird.f32 %v999
      %vm1006 = vweird.f32 %v1000
      %vm1007 = vmor %vm1005, %vm1006
      %v1008 = vsel %vm1007, %v1000, %v1004
      %v1009 = vand.u32 2147483647, %v999
      %vm1010 = vcmp.eq.f32.partialorder %v1009, 8.507059e+37
      %v1011 = vand.u32 %v999, 2147483648
      %v1012 = vor.u32 1.1754944e-38, %v1011
      %v1013 = vsel %vm1010, %v1012, %v1008
      %v1014 = vmul.f32 %v996, %v1013
      %1015 = vrot.lane.b32.xlu0 %v960, 64
      %v1016 = vpop.permute.xlu0 %1015
      %v1019 = vsel %vm906, %v1014, 0
      %1021 = vmatpush.msra.mxu0 0.0
      %1022 = vmatpush.msra.mxu0 0.0
      %1023 = vmatpush.msra.mxu0 0.0
      %1024 = vmatpush.msra.mxu0 0.0
      %1025 = vmatpush.msra.mxu0 0.0
      %1026 = vmatpush.msra.mxu0 0.0
      %1027 = vmatpush.msra.mxu0 0.0
      %1028 = vmatpush.msra.mxu0 0.0
      %1029 = vmatpush.msra.mxu0 0.0
      %1030 = vmatpush.msra.mxu0 0.0
      %1031 = vmatpush.msra.mxu0 0.0
      %1032 = vmatpush.msra.mxu0 0.0
      %1033 = vmatpush.msra.mxu0 0.0
      %1034 = vmatpush.msra.mxu0 0.0
      %1035 = vmatpush.msra.mxu0 0.0
      %1036 = vmatpush.msra.mxu0 %v1016
      %1037 = vmatmul.f32.gmra.mxu0 %v1019
      %v1038 = vpop.f32.mrf.mxu0
      %v1039 = vadd.f32 0.0, %v1038
      %1040 = vdwg.mxu0
      %1041 = vrot.lane.b32.xlu0 %v962, 120
      %v1042 = vpop.permute.xlu0 %1041
      %1043 = vrot.lane.b32.xlu0 %v960, 88
      %v1044 = vpop.permute.xlu0 %1043
      %v1045 = vsel %vm906, %v1042, 0
      %v1047 = vsel %vm906, %v1044, 0
      %1049 = vmatpush.xpose.msra.mxu0 0.0
      %1050 = vmatpush.xpose.msra.mxu0 0.0
      %1051 = vmatpush.xpose.msra.mxu0 0.0
      %1052 = vmatpush.xpose.msra.mxu0 0.0
      %1053 = vmatpush.xpose.msra.mxu0 0.0
      %1054 = vmatpush.xpose.msra.mxu0 0.0
      %1055 = vmatpush.xpose.msra.mxu0 0.0
      %1056 = vmatpush.xpose.msra.mxu0 0.0
      %1057 = vmatpush.xpose.msra.mxu0 0.0
      %1058 = vmatpush.xpose.msra.mxu0 0.0
      %1059 = vmatpush.xpose.msra.mxu0 0.0
      %1060 = vmatpush.xpose.msra.mxu0 0.0
      %1061 = vmatpush.xpose.msra.mxu0 0.0
      %1062 = vmatpush.xpose.msra.mxu0 0.0
      %1063 = vmatpush.xpose.msra.mxu0 0.0
      %1064 = vmatpush.xpose.msra.mxu0 %v1047
      %1065 = vmatmul.f32.gmra.mxu0 %v1045
      %v1066 = vpop.f32.mrf.mxu0
      %v1067 = vadd.f32 0.0, %v1066
      %1068 = vdwg.mxu0
      %v1069 = vsel %vm906, %v1067, -inf
      %1070 = vmax.xlane.f32.xlu0 %v1069
      %v1071 = vpop.xlane.xlu0 %1070
      %v1072 = vsub.f32 %v1067, %v1071
      %v1073 = vmul.f32 %v1072, 1.442695
      %v1074 = vpow.pop %v1073
      %v1075 = vsel %vm906, %v1074, 0.0
      %1076 = vadd.xlane.f32.xlu0 %v1075
      %v1077 = vpop.xlane.xlu0 %1076
      %v1078 = vrcp.pop %v1077
      %v1079 = vmul.f32 %v1077, %v1078
      %v1080 = vsub.f32 1.0, %v1079
      %v1081 = vmul.f32 %v1078, %v1080
      %v1082 = vadd.f32 %v1078, %v1081
      %vm1083 = vweird.f32 %v1077
      %vm1084 = vweird.f32 %v1078
      %vm1085 = vmor %vm1083, %vm1084
      %v1086 = vsel %vm1085, %v1078, %v1082
      %v1087 = vand.u32 2147483647, %v1077
      %vm1088 = vcmp.eq.f32.partialorder %v1087, 8.507059e+37
      %v1089 = vand.u32 %v1077, 2147483648
      %v1090 = vor.u32 1.1754944e-38, %v1089
      %v1091 = vsel %vm1088, %v1090, %v1086
      %v1092 = vmul.f32 %v1074, %v1091
      %1093 = vrot.lane.b32.xlu0 %v960, 56
      %v1094 = vpop.permute.xlu0 %1093
      %v1097 = vsel %vm906, %v1092, 0
      %1099 = vmatpush.msra.mxu0 0.0
      %1100 = vmatpush.msra.mxu0 0.0
      %1101 = vmatpush.msra.mxu0 0.0
      %1102 = vmatpush.msra.mxu0 0.0
      %1103 = vmatpush.msra.mxu0 0.0
      %1104 = vmatpush.msra.mxu0 0.0
      %1105 = vmatpush.msra.mxu0 0.0
      %1106 = vmatpush.msra.mxu0 0.0
      %1107 = vmatpush.msra.mxu0 0.0
      %1108 = vmatpush.msra.mxu0 0.0
      %1109 = vmatpush.msra.mxu0 0.0
      %1110 = vmatpush.msra.mxu0 0.0
      %1111 = vmatpush.msra.mxu0 0.0
      %1112 = vmatpush.msra.mxu0 0.0
      %1113 = vmatpush.msra.mxu0 0.0
      %1114 = vmatpush.msra.mxu0 %v1094
      %1115 = vmatmul.f32.gmra.mxu0 %v1097
      %v1116 = vpop.f32.mrf.mxu0
      %v1117 = vadd.f32 0.0, %v1116
      %1118 = vdwg.mxu0
      %1119 = vrot.lane.b32.xlu0 %v962, 112
      %v1120 = vpop.permute.xlu0 %1119
      %1121 = vrot.lane.b32.xlu0 %v960, 80
      %v1122 = vpop.permute.xlu0 %1121
      %v1123 = vsel %vm906, %v1120, 0
      %v1125 = vsel %vm906, %v1122, 0
      %1127 = vmatpush.xpose.msra.mxu0 0.0
      %1128 = vmatpush.xpose.msra.mxu0 0.0
      %1129 = vmatpush.xpose.msra.mxu0 0.0
      %1130 = vmatpush.xpose.msra.mxu0 0.0
      %1131 = vmatpush.xpose.msra.mxu0 0.0
      %1132 = vmatpush.xpose.msra.mxu0 0.0
      %1133 = vmatpush.xpose.msra.mxu0 0.0
      %1134 = vmatpush.xpose.msra.mxu0 0.0
      %1135 = vmatpush.xpose.msra.mxu0 0.0
      %1136 = vmatpush.xpose.msra.mxu0 0.0
      %1137 = vmatpush.xpose.msra.mxu0 0.0
      %1138 = vmatpush.xpose.msra.mxu0 0.0
      %1139 = vmatpush.xpose.msra.mxu0 0.0
      %1140 = vmatpush.xpose.msra.mxu0 0.0
      %1141 = vmatpush.xpose.msra.mxu0 0.0
      %1142 = vmatpush.xpose.msra.mxu0 %v1125
      %1143 = vmatmul.f32.gmra.mxu0 %v1123
      %v1144 = vpop.f32.mrf.mxu0
      %v1145 = vadd.f32 0.0, %v1144
      %1146 = vdwg.mxu0
      %v1147 = vsel %vm906, %v1145, -inf
      %1148 = vmax.xlane.f32.xlu0 %v1147
      %v1149 = vpop.xlane.xlu0 %1148
      %v1150 = vsub.f32 %v1145, %v1149
      %v1151 = vmul.f32 %v1150, 1.442695
      %v1152 = vpow.pop %v1151
      %v1153 = vsel %vm906, %v1152, 0.0
      %1154 = vadd.xlane.f32.xlu0 %v1153
      %v1155 = vpop.xlane.xlu0 %1154
      %v1156 = vrcp.pop %v1155
      %v1157 = vmul.f32 %v1155, %v1156
      %v1158 = vsub.f32 1.0, %v1157
      %v1159 = vmul.f32 %v1156, %v1158
      %v1160 = vadd.f32 %v1156, %v1159
      %vm1161 = vweird.f32 %v1155
      %vm1162 = vweird.f32 %v1156
      %vm1163 = vmor %vm1161, %vm1162
      %v1164 = vsel %vm1163, %v1156, %v1160
      %v1165 = vand.u32 2147483647, %v1155
      %vm1166 = vcmp.eq.f32.partialorder %v1165, 8.507059e+37
      %v1167 = vand.u32 %v1155, 2147483648
      %v1168 = vor.u32 1.1754944e-38, %v1167
      %v1169 = vsel %vm1166, %v1168, %v1164
      %v1170 = vmul.f32 %v1152, %v1169
      %1171 = vrot.lane.b32.xlu0 %v960, 48
      %v1172 = vpop.permute.xlu0 %1171
      %v1175 = vsel %vm906, %v1170, 0
      %1177 = vmatpush.msra.mxu0 0.0
      %1178 = vmatpush.msra.mxu0 0.0
      %1179 = vmatpush.msra.mxu0 0.0
      %1180 = vmatpush.msra.mxu0 0.0
      %1181 = vmatpush.msra.mxu0 0.0
      %1182 = vmatpush.msra.mxu0 0.0
      %1183 = vmatpush.msra.mxu0 0.0
      %1184 = vmatpush.msra.mxu0 0.0
      %1185 = vmatpush.msra.mxu0 0.0
      %1186 = vmatpush.msra.mxu0 0.0
      %1187 = vmatpush.msra.mxu0 0.0
      %1188 = vmatpush.msra.mxu0 0.0
      %1189 = vmatpush.msra.mxu0 0.0
      %1190 = vmatpush.msra.mxu0 0.0
      %1191 = vmatpush.msra.mxu0 0.0
      %1192 = vmatpush.msra.mxu0 %v1172
      %1193 = vmatmul.f32.gmra.mxu0 %v1175
      %v1194 = vpop.f32.mrf.mxu0
      %v1195 = vadd.f32 0.0, %v1194
      %1196 = vdwg.mxu0
      %1197 = vrot.lane.b32.xlu0 %v962, 104
      %v1198 = vpop.permute.xlu0 %1197
      %1199 = vrot.lane.b32.xlu0 %v960, 72
      %v1200 = vpop.permute.xlu0 %1199
      %v1201 = vsel %vm906, %v1198, 0
      %v1203 = vsel %vm906, %v1200, 0
      %1205 = vmatpush.xpose.msra.mxu0 0.0
      %1206 = vmatpush.xpose.msra.mxu0 0.0
      %1207 = vmatpush.xpose.msra.mxu0 0.0
      %1208 = vmatpush.xpose.msra.mxu0 0.0
      %1209 = vmatpush.xpose.msra.mxu0 0.0
      %1210 = vmatpush.xpose.msra.mxu0 0.0
      %1211 = vmatpush.xpose.msra.mxu0 0.0
      %1212 = vmatpush.xpose.msra.mxu0 0.0
      %1213 = vmatpush.xpose.msra.mxu0 0.0
      %1214 = vmatpush.xpose.msra.mxu0 0.0
      %1215 = vmatpush.xpose.msra.mxu0 0.0
      %1216 = vmatpush.xpose.msra.mxu0 0.0
      %1217 = vmatpush.xpose.msra.mxu0 0.0
      %1218 = vmatpush.xpose.msra.mxu0 0.0
      %1219 = vmatpush.xpose.msra.mxu0 0.0
      %1220 = vmatpush.xpose.msra.mxu0 %v1203
      %1221 = vmatmul.f32.gmra.mxu0 %v1201
      %v1222 = vpop.f32.mrf.mxu0
      %v1223 = vadd.f32 0.0, %v1222
      %1224 = vdwg.mxu0
      %v1225 = vsel %vm906, %v1223, -inf
      %1226 = vmax.xlane.f32.xlu0 %v1225
      %v1227 = vpop.xlane.xlu0 %1226
      %v1228 = vsub.f32 %v1223, %v1227
      %v1229 = vmul.f32 %v1228, 1.442695
      %v1230 = vpow.pop %v1229
      %v1231 = vsel %vm906, %v1230, 0.0
      %1232 = vadd.xlane.f32.xlu0 %v1231
      %v1233 = vpop.xlane.xlu0 %1232
      %v1234 = vrcp.pop %v1233
      %v1235 = vmul.f32 %v1233, %v1234
      %v1236 = vsub.f32 1.0, %v1235
      %v1237 = vmul.f32 %v1234, %v1236
      %v1238 = vadd.f32 %v1234, %v1237
      %vm1239 = vweird.f32 %v1233
      %vm1240 = vweird.f32 %v1234
      %vm1241 = vmor %vm1239, %vm1240
      %v1242 = vsel %vm1241, %v1234, %v1238
      %v1243 = vand.u32 2147483647, %v1233
      %vm1244 = vcmp.eq.f32.partialorder %v1243, 8.507059e+37
      %v1245 = vand.u32 %v1233, 2147483648
      %v1246 = vor.u32 1.1754944e-38, %v1245
      %v1247 = vsel %vm1244, %v1246, %v1242
      %v1248 = vmul.f32 %v1230, %v1247
      %1249 = vrot.lane.b32.xlu0 %v960, 40
      %v1250 = vpop.permute.xlu0 %1249
      %v1253 = vsel %vm906, %v1248, 0
      %1255 = vmatpush.msra.mxu0 0.0
      %1256 = vmatpush.msra.mxu0 0.0
      %1257 = vmatpush.msra.mxu0 0.0
      %1258 = vmatpush.msra.mxu0 0.0
      %1259 = vmatpush.msra.mxu0 0.0
      %1260 = vmatpush.msra.mxu0 0.0
      %1261 = vmatpush.msra.mxu0 0.0
      %1262 = vmatpush.msra.mxu0 0.0
      %1263 = vmatpush.msra.mxu0 0.0
      %1264 = vmatpush.msra.mxu0 0.0
      %1265 = vmatpush.msra.mxu0 0.0
      %1266 = vmatpush.msra.mxu0 0.0
      %1267 = vmatpush.msra.mxu0 0.0
      %1268 = vmatpush.msra.mxu0 0.0
      %1269 = vmatpush.msra.mxu0 0.0
      %1270 = vmatpush.msra.mxu0 %v1250
      %1271 = vmatmul.f32.gmra.mxu0 %v1253
      %v1272 = vpop.f32.mrf.mxu0
      %v1273 = vadd.f32 0.0, %v1272
      %1274 = vdwg.mxu0
      %1276 = vrot.lane.b32.xlu0 %v1117, 8
      %v1277 = vpop.permute.xlu0 %1276
      %1280 = vrot.lane.b32.xlu0 %v1195, 16
      %v1281 = vpop.permute.xlu0 %1280
      %1284 = vrot.lane.b32.xlu0 %v1273, 24
      %v1285 = vpop.permute.xlu0 %1284
      %v1287 = vsel %vm906, %v1039, %v1277
      %vm1288 = vcmask 130048
      %v1289 = vsel %vm1288, %v1287, %v1281
      %vm1290 = vcmask 195584
      %v1291 = vsel %vm1290, %v1289, %v1285
      %v1292 = vld [vmem:[%s11] sm:$0xff]
      %v1293 = vld [vmem:[%s11 + $0x8] sm:$0xff]
      %v1294 = vld [vmem:[%s11 + $0x10] sm:$0xff]
      %v1295 = vld [vmem:[%s11 + $0x18] sm:$0xff]
      %v1296 = vld [vmem:[%s13] sm:$0x1]
      %v1298 = vperm.slane %v1296, 0
      %v1301 = vsel %vm938, %v1291, 0
      %1303 = vmatpush.msra.mxu0 0.0
      %1304 = vmatpush.msra.mxu0 0.0
      %1305 = vmatpush.msra.mxu0 0.0
      %1306 = vmatpush.msra.mxu0 0.0
      %1307 = vmatpush.msra.mxu0 0.0
      %1308 = vmatpush.msra.mxu0 0.0
      %1309 = vmatpush.msra.mxu0 0.0
      %1310 = vmatpush.msra.mxu0 0.0
      %1311 = vmatpush.msra.mxu0 0.0
      %1312 = vmatpush.msra.mxu0 0.0
      %1313 = vmatpush.msra.mxu0 0.0
      %1314 = vmatpush.msra.mxu0 0.0
      %1315 = vmatpush.msra.mxu0 %v1295
      %1316 = vmatpush.msra.mxu0 %v1294
      %1317 = vmatpush.msra.mxu0 %v1293
      %1318 = vmatpush.msra.mxu0 %v1292
      %1319 = vmatmul.f32.gmra.mxu0 %v1301
      %v1320 = vpop.f32.mrf.mxu0
      %v1321 = vadd.f32 %v1298, %v1320
      %1322 = vdwg.mxu0
      %v1323 = vadd.f32 %v928, %v1321
      %v1324 = vld [vmem:[%s15] sm:$0x1]
      %v1325 = vld [vmem:[%s17] sm:$0x1]
      %v1326 = vsel %vm938, %v1323, 0.0
      %1327 = vadd.xlane.f32.xlu0 %v1326
      %v1328 = vpop.xlane.xlu0 %1327
      %v1329 = vrcp.pop 32.0
      %v1330 = vmul.f32 32.0, %v1329
      %v1331 = vsub.f32 1.0, %v1330
      %v1332 = vmul.f32 %v1329, %v1331
      %v1333 = vadd.f32 %v1329, %v1332
      %vm1334 = vweird.f32 %v1329
      %v1335 = vsel %vm1334, %v1329, %v1333
      %v1336 = vmul.f32 %v1328, %v1335
      %v1337 = vsub.f32 %v1323, %v1336
      %v1338 = vmul.f32 %v1337, %v1337
      %v1339 = vsel %vm938, %v1338, 0.0
      %1340 = vadd.xlane.f32.xlu0 %v1339
      %v1341 = vpop.xlane.xlu0 %1340
      %v1342 = vmul.f32 %v1341, %v1335
      %v1343 = vadd.f32 %v1342, 1e-05
      %v1344 = vrsqrt.pop %v1343
      %v1345 = vmul.f32 %v1344, %v1343
      %v1346 = vmul.f32 %v1345, %v1344
      %v1347 = vmul.f32 0.5, %v1346
      %v1348 = vsub.f32 1.5, %v1347
      %v1349 = vmul.f32 %v1344, %v1348
      %vm1350 = vweird.f32 %v1343
      %vm1351 = vweird.f32 %v1344
      %vm1352 = vmor %vm1350, %vm1351
      %v1353 = vsel %vm1352, %v1344, %v1349
      %v1354 = vmul.f32 %v1337, %v1353
      %v1356 = vperm.slane %v1324, 0
      %v1358 = vmul.f32 %v1354, %v1356
      %v1360 = vperm.slane %v1325, 0
      %v1362 = vadd.f32 %v1358, %v1360
      %v1363 = vld [vmem:[%s19] sm:$0xff]
      %v1364 = vld [vmem:[%s19 + $0x8] sm:$0xff]
      %v1365 = vld [vmem:[%s19 + $0x10] sm:$0xff]
      %v1366 = vld [vmem:[%s19 + $0x18] sm:$0xff]
      %v1367 = vld [vmem:[%s19 + $0x80] sm:$0xff]
      %v1368 = vld [vmem:[%s19 + $0x88] sm:$0xff]
      %v1369 = vld [vmem:[%s19 + $0x90] sm:$0xff]
      %v1370 = vld [vmem:[%s19 + $0x98] sm:$0xff]
      %v1371 = vld [vmem:[%s19 + $0x100] sm:$0xff]
      %v1372 = vld [vmem:[%s19 + $0x108] sm:$0xff]
      %v1373 = vld [vmem:[%s19 + $0x110] sm:$0xff]
      %v1374 = vld [vmem:[%s19 + $0x118] sm:$0xff]
      %v1375 = vld [vmem:[%s19 + $0x180] sm:$0xff]
      %v1376 = vld [vmem:[%s19 + $0x188] sm:$0xff]
      %v1377 = vld [vmem:[%s19 + $0x190] sm:$0xff]
      %v1378 = vld [vmem:[%s19 + $0x198] sm:$0xff]
      %v1379 = vld [vmem:[%s21] sm:$0xf]
      %v1380 = vld [vmem:[%s23] sm:$0xff]
      %v1381 = vld [vmem:[%s23 + $0x8] sm:$0xff]
      %v1382 = vld [vmem:[%s23 + $0x10] sm:$0xff]
      %v1383 = vld [vmem:[%s23 + $0x18] sm:$0xff]
      %v1384 = vld [vmem:[%s23 + $0x20] sm:$0xff]
      %v1385 = vld [vmem:[%s23 + $0x28] sm:$0xff]
      %v1386 = vld [vmem:[%s23 + $0x30] sm:$0xff]
      %v1387 = vld [vmem:[%s23 + $0x38] sm:$0xff]
      %v1388 = vld [vmem:[%s23 + $0x40] sm:$0xff]
      %v1389 = vld [vmem:[%s23 + $0x48] sm:$0xff]
      %v1390 = vld [vmem:[%s23 + $0x50] sm:$0xff]
      %v1391 = vld [vmem:[%s23 + $0x58] sm:$0xff]
      %v1392 = vld [vmem:[%s23 + $0x60] sm:$0xff]
      %v1393 = vld [vmem:[%s23 + $0x68] sm:$0xff]
      %v1394 = vld [vmem:[%s23 + $0x70] sm:$0xff]
      %v1395 = vld [vmem:[%s23 + $0x78] sm:$0xff]
      %v1396 = vld [vmem:[%s23 + $0x80] sm:$0xff]
      %v1397 = vld [vmem:[%s23 + $0x88] sm:$0xff]
      %v1398 = vld [vmem:[%s23 + $0x90] sm:$0xff]
      %v1399 = vld [vmem:[%s23 + $0x98] sm:$0xff]
      %v1400 = vld [vmem:[%s23 + $0xa0] sm:$0xff]
      %v1401 = vld [vmem:[%s23 + $0xa8] sm:$0xff]
      %v1402 = vld [vmem:[%s23 + $0xb0] sm:$0xff]
      %v1403 = vld [vmem:[%s23 + $0xb8] sm:$0xff]
      %v1404 = vld [vmem:[%s23 + $0xc0] sm:$0xff]
      %v1405 = vld [vmem:[%s23 + $0xc8] sm:$0xff]
      %v1406 = vld [vmem:[%s23 + $0xd0] sm:$0xff]
      %v1407 = vld [vmem:[%s23 + $0xd8] sm:$0xff]
      %v1408 = vld [vmem:[%s23 + $0xe0] sm:$0xff]
      %v1409 = vld [vmem:[%s23 + $0xe8] sm:$0xff]
      %v1410 = vld [vmem:[%s23 + $0xf0] sm:$0xff]
      %v1411 = vld [vmem:[%s23 + $0xf8] sm:$0xff]
      %v1412 = vld [vmem:[%s23 + $0x100] sm:$0xff]
      %v1413 = vld [vmem:[%s23 + $0x108] sm:$0xff]
      %v1414 = vld [vmem:[%s23 + $0x110] sm:$0xff]
      %v1415 = vld [vmem:[%s23 + $0x118] sm:$0xff]
      %v1416 = vld [vmem:[%s23 + $0x120] sm:$0xff]
      %v1417 = vld [vmem:[%s23 + $0x128] sm:$0xff]
      %v1418 = vld [vmem:[%s23 + $0x130] sm:$0xff]
      %v1419 = vld [vmem:[%s23 + $0x138] sm:$0xff]
      %v1420 = vld [vmem:[%s23 + $0x140] sm:$0xff]
      %v1421 = vld [vmem:[%s23 + $0x148] sm:$0xff]
      %v1422 = vld [vmem:[%s23 + $0x150] sm:$0xff]
      %v1423 = vld [vmem:[%s23 + $0x158] sm:$0xff]
      %v1424 = vld [vmem:[%s23 + $0x160] sm:$0xff]
      %v1425 = vld [vmem:[%s23 + $0x168] sm:$0xff]
      %v1426 = vld [vmem:[%s23 + $0x170] sm:$0xff]
      %v1427 = vld [vmem:[%s23 + $0x178] sm:$0xff]
      %v1428 = vld [vmem:[%s23 + $0x180] sm:$0xff]
      %v1429 = vld [vmem:[%s23 + $0x188] sm:$0xff]
      %v1430 = vld [vmem:[%s23 + $0x190] sm:$0xff]
      %v1431 = vld [vmem:[%s23 + $0x198] sm:$0xff]
      %v1432 = vld [vmem:[%s23 + $0x1a0] sm:$0xff]
      %v1433 = vld [vmem:[%s23 + $0x1a8] sm:$0xff]
      %v1434 = vld [vmem:[%s23 + $0x1b0] sm:$0xff]
      %v1435 = vld [vmem:[%s23 + $0x1b8] sm:$0xff]
      %v1436 = vld [vmem:[%s23 + $0x1c0] sm:$0xff]
      %v1437 = vld [vmem:[%s23 + $0x1c8] sm:$0xff]
      %v1438 = vld [vmem:[%s23 + $0x1d0] sm:$0xff]
      %v1439 = vld [vmem:[%s23 + $0x1d8] sm:$0xff]
      %v1440 = vld [vmem:[%s23 + $0x1e0] sm:$0xff]
      %v1441 = vld [vmem:[%s23 + $0x1e8] sm:$0xff]
      %v1442 = vld [vmem:[%s23 + $0x1f0] sm:$0xff]
      %v1443 = vld [vmem:[%s23 + $0x1f8] sm:$0xff]
      %v1445 = vperm.slane %v1379, 0
      %v1446 = vperm.slane %v1379, 1
      %v1447 = vperm.slane %v1379, 2
      %v1448 = vperm.slane %v1379, 3
      %v1454 = vsel %vm938, %v1362, 0
      %1456 = vmatpush.msra.mxu0 0.0
      %1457 = vmatpush.msra.mxu0 0.0
      %1458 = vmatpush.msra.mxu0 0.0
      %1459 = vmatpush.msra.mxu0 0.0
      %1460 = vmatpush.msra.mxu0 0.0
      %1461 = vmatpush.msra.mxu0 0.0
      %1462 = vmatpush.msra.mxu0 0.0
      %1463 = vmatpush.msra.mxu0 0.0
      %1464 = vmatpush.msra.mxu0 0.0
      %1465 = vmatpush.msra.mxu0 0.0
      %1466 = vmatpush.msra.mxu0 0.0
      %1467 = vmatpush.msra.mxu0 0.0
      %1468 = vmatpush.msra.mxu0 %v1375
      %1469 = vmatpush.msra.mxu0 %v1371
      %1470 = vmatpush.msra.mxu0 %v1367
      %1471 = vmatpush.msra.mxu0 %v1363
      %1472 = vmatmul.f32.gmra.mxu0 %v1454
      %v1473 = vpop.f32.mrf.mxu0
      %v1474 = vadd.f32 %v1445, %v1473
      %1475 = vdwg.mxu0
      %1476 = vmatpush.msra.mxu0 0.0
      %1477 = vmatpush.msra.mxu0 0.0
      %1478 = vmatpush.msra.mxu0 0.0
      %1479 = vmatpush.msra.mxu0 0.0
      %1480 = vmatpush.msra.mxu0 0.0
      %1481 = vmatpush.msra.mxu0 0.0
      %1482 = vmatpush.msra.mxu0 0.0
      %1483 = vmatpush.msra.mxu0 0.0
      %1484 = vmatpush.msra.mxu0 0.0
      %1485 = vmatpush.msra.mxu0 0.0
      %1486 = vmatpush.msra.mxu0 0.0
      %1487 = vmatpush.msra.mxu0 0.0
      %1488 = vmatpush.msra.mxu0 %v1376
      %1489 = vmatpush.msra.mxu0 %v1372
      %1490 = vmatpush.msra.mxu0 %v1368
      %1491 = vmatpush.msra.mxu0 %v1364
      %1492 = vmatmul.f32.gmra.mxu0 %v1454
      %v1493 = vpop.f32.mrf.mxu0
      %v1494 = vadd.f32 %v1446, %v1493
      %1495 = vdwg.mxu0
      %1496 = vmatpush.msra.mxu0 0.0
      %1497 = vmatpush.msra.mxu0 0.0
      %1498 = vmatpush.msra.mxu0 0.0
      %1499 = vmatpush.msra.mxu0 0.0
      %1500 = vmatpush.msra.mxu0 0.0
      %1501 = vmatpush.msra.mxu0 0.0
      %1502 = vmatpush.msra.mxu0 0.0
      %1503 = vmatpush.msra.mxu0 0.0
      %1504 = vmatpush.msra.mxu0 0.0
      %1505 = vmatpush.msra.mxu0 0.0
      %1506 = vmatpush.msra.mxu0 0.0
      %1507 = vmatpush.msra.mxu0 0.0
      %1508 = vmatpush.msra.mxu0 %v1377
      %1509 = vmatpush.msra.mxu0 %v1373
      %1510 = vmatpush.msra.mxu0 %v1369
      %1511 = vmatpush.msra.mxu0 %v1365
      %1512 = vmatmul.f32.gmra.mxu0 %v1454
      %v1513 = vpop.f32.mrf.mxu0
      %v1514 = vadd.f32 %v1447, %v1513
      %1515 = vdwg.mxu0
      %1516 = vmatpush.msra.mxu0 0.0
      %1517 = vmatpush.msra.mxu0 0.0
      %1518 = vmatpush.msra.mxu0 0.0
      %1519 = vmatpush.msra.mxu0 0.0
      %1520 = vmatpush.msra.mxu0 0.0
      %1521 = vmatpush.msra.mxu0 0.0
      %1522 = vmatpush.msra.mxu0 0.0
      %1523 = vmatpush.msra.mxu0 0.0
      %1524 = vmatpush.msra.mxu0 0.0
      %1525 = vmatpush.msra.mxu0 0.0
      %1526 = vmatpush.msra.mxu0 0.0
      %1527 = vmatpush.msra.mxu0 0.0
      %1528 = vmatpush.msra.mxu0 %v1378
      %1529 = vmatpush.msra.mxu0 %v1374
      %1530 = vmatpush.msra.mxu0 %v1370
      %1531 = vmatpush.msra.mxu0 %v1366
      %1532 = vmatmul.f32.gmra.mxu0 %v1454
      %v1533 = vpop.f32.mrf.mxu0
      %v1534 = vadd.f32 %v1448, %v1533
      %1535 = vdwg.mxu0
      %v1536 = vmax.f32 %v1474, 0.0
      %v1537 = vmax.f32 %v1494, 0.0
      %v1538 = vmax.f32 %v1514, 0.0
      %v1539 = vmax.f32 %v1534, 0.0
      %v1540 = vld [vmem:[%s19 + $0x20] sm:$0xff]
      %v1541 = vld [vmem:[%s19 + $0x28] sm:$0xff]
      %v1542 = vld [vmem:[%s19 + $0x30] sm:$0xff]
      %v1543 = vld [vmem:[%s19 + $0x38] sm:$0xff]
      %v1544 = vld [vmem:[%s19 + $0xa0] sm:$0xff]
      %v1545 = vld [vmem:[%s19 + $0xa8] sm:$0xff]
      %v1546 = vld [vmem:[%s19 + $0xb0] sm:$0xff]
      %v1547 = vld [vmem:[%s19 + $0xb8] sm:$0xff]
      %v1548 = vld [vmem:[%s19 + $0x120] sm:$0xff]
      %v1549 = vld [vmem:[%s19 + $0x128] sm:$0xff]
      %v1550 = vld [vmem:[%s19 + $0x130] sm:$0xff]
      %v1551 = vld [vmem:[%s19 + $0x138] sm:$0xff]
      %v1552 = vld [vmem:[%s19 + $0x1a0] sm:$0xff]
      %v1553 = vld [vmem:[%s19 + $0x1a8] sm:$0xff]
      %v1554 = vld [vmem:[%s19 + $0x1b0] sm:$0xff]
      %v1555 = vld [vmem:[%s19 + $0x1b8] sm:$0xff]
      %v1556 = vld [vmem:[%s21 + $0x4] sm:$0xf]
      %v1557 = vld [vmem:[%s23 + $0x200] sm:$0xff]
      %v1558 = vld [vmem:[%s23 + $0x208] sm:$0xff]
      %v1559 = vld [vmem:[%s23 + $0x210] sm:$0xff]
      %v1560 = vld [vmem:[%s23 + $0x218] sm:$0xff]
      %v1561 = vld [vmem:[%s23 + $0x220] sm:$0xff]
      %v1562 = vld [vmem:[%s23 + $0x228] sm:$0xff]
      %v1563 = vld [vmem:[%s23 + $0x230] sm:$0xff]
      %v1564 = vld [vmem:[%s23 + $0x238] sm:$0xff]
      %v1565 = vld [vmem:[%s23 + $0x240] sm:$0xff]
      %v1566 = vld [vmem:[%s23 + $0x248] sm:$0xff]
      %v1567 = vld [vmem:[%s23 + $0x250] sm:$0xff]
      %v1568 = vld [vmem:[%s23 + $0x258] sm:$0xff]
      %v1569 = vld [vmem:[%s23 + $0x260] sm:$0xff]
      %v1570 = vld [vmem:[%s23 + $0x268] sm:$0xff]
      %v1571 = vld [vmem:[%s23 + $0x270] sm:$0xff]
      %v1572 = vld [vmem:[%s23 + $0x278] sm:$0xff]
      %v1573 = vld [vmem:[%s23 + $0x280] sm:$0xff]
      %v1574 = vld [vmem:[%s23 + $0x288] sm:$0xff]
      %v1575 = vld [vmem:[%s23 + $0x290] sm:$0xff]
      %v1576 = vld [vmem:[%s23 + $0x298] sm:$0xff]
      %v1577 = vld [vmem:[%s23 + $0x2a0] sm:$0xff]
      %v1578 = vld [vmem:[%s23 + $0x2a8] sm:$0xff]
      %v1579 = vld [vmem:[%s23 + $0x2b0] sm:$0xff]
      %v1580 = vld [vmem:[%s23 + $0x2b8] sm:$0xff]
      %v1581 = vld [vmem:[%s23 + $0x2c0] sm:$0xff]
      %v1582 = vld [vmem:[%s23 + $0x2c8] sm:$0xff]
      %v1583 = vld [vmem:[%s23 + $0x2d0] sm:$0xff]
      %v1584 = vld [vmem:[%s23 + $0x2d8] sm:$0xff]
      %v1585 = vld [vmem:[%s23 + $0x2e0] sm:$0xff]
      %v1586 = vld [vmem:[%s23 + $0x2e8] sm:$0xff]
      %v1587 = vld [vmem:[%s23 + $0x2f0] sm:$0xff]
      %v1588 = vld [vmem:[%s23 + $0x2f8] sm:$0xff]
      %v1589 = vld [vmem:[%s23 + $0x300] sm:$0xff]
      %v1590 = vld [vmem:[%s23 + $0x308] sm:$0xff]
      %v1591 = vld [vmem:[%s23 + $0x310] sm:$0xff]
      %v1592 = vld [vmem:[%s23 + $0x318] sm:$0xff]
      %v1593 = vld [vmem:[%s23 + $0x320] sm:$0xff]
      %v1594 = vld [vmem:[%s23 + $0x328] sm:$0xff]
      %v1595 = vld [vmem:[%s23 + $0x330] sm:$0xff]
      %v1596 = vld [vmem:[%s23 + $0x338] sm:$0xff]
      %v1597 = vld [vmem:[%s23 + $0x340] sm:$0xff]
      %v1598 = vld [vmem:[%s23 + $0x348] sm:$0xff]
      %v1599 = vld [vmem:[%s23 + $0x350] sm:$0xff]
      %v1600 = vld [vmem:[%s23 + $0x358] sm:$0xff]
      %v1601 = vld [vmem:[%s23 + $0x360] sm:$0xff]
      %v1602 = vld [vmem:[%s23 + $0x368] sm:$0xff]
      %v1603 = vld [vmem:[%s23 + $0x370] sm:$0xff]
      %v1604 = vld [vmem:[%s23 + $0x378] sm:$0xff]
      %v1605 = vld [vmem:[%s23 + $0x380] sm:$0xff]
      %v1606 = vld [vmem:[%s23 + $0x388] sm:$0xff]
      %v1607 = vld [vmem:[%s23 + $0x390] sm:$0xff]
      %v1608 = vld [vmem:[%s23 + $0x398] sm:$0xff]
      %v1609 = vld [vmem:[%s23 + $0x3a0] sm:$0xff]
      %v1610 = vld [vmem:[%s23 + $0x3a8] sm:$0xff]
      %v1611 = vld [vmem:[%s23 + $0x3b0] sm:$0xff]
      %v1612 = vld [vmem:[%s23 + $0x3b8] sm:$0xff]
      %v1613 = vld [vmem:[%s23 + $0x3c0] sm:$0xff]
      %v1614 = vld [vmem:[%s23 + $0x3c8] sm:$0xff]
      %v1615 = vld [vmem:[%s23 + $0x3d0] sm:$0xff]
      %v1616 = vld [vmem:[%s23 + $0x3d8] sm:$0xff]
      %v1617 = vld [vmem:[%s23 + $0x3e0] sm:$0xff]
      %v1618 = vld [vmem:[%s23 + $0x3e8] sm:$0xff]
      %v1619 = vld [vmem:[%s23 + $0x3f0] sm:$0xff]
      %v1620 = vld [vmem:[%s23 + $0x3f8] sm:$0xff]
      %v1622 = vperm.slane %v1556, 0
      %v1623 = vperm.slane %v1556, 1
      %v1624 = vperm.slane %v1556, 2
      %v1625 = vperm.slane %v1556, 3
      %1630 = vmatpush.msra.mxu0 0.0
      %1631 = vmatpush.msra.mxu0 0.0
      %1632 = vmatpush.msra.mxu0 0.0
      %1633 = vmatpush.msra.mxu0 0.0
      %1634 = vmatpush.msra.mxu0 0.0
      %1635 = vmatpush.msra.mxu0 0.0
      %1636 = vmatpush.msra.mxu0 0.0
      %1637 = vmatpush.msra.mxu0 0.0
      %1638 = vmatpush.msra.mxu0 0.0
      %1639 = vmatpush.msra.mxu0 0.0
      %1640 = vmatpush.msra.mxu0 0.0
      %1641 = vmatpush.msra.mxu0 0.0
      %1642 = vmatpush.msra.mxu0 %v1552
      %1643 = vmatpush.msra.mxu0 %v1548
      %1644 = vmatpush.msra.mxu0 %v1544
      %1645 = vmatpush.msra.mxu0 %v1540
      %1646 = vmatmul.f32.gmra.mxu0 %v1454
      %v1647 = vpop.f32.mrf.mxu0
      %v1648 = vadd.f32 %v1622, %v1647
      %1649 = vdwg.mxu0
      %1650 = vmatpush.msra.mxu0 0.0
      %1651 = vmatpush.msra.mxu0 0.0
      %1652 = vmatpush.msra.mxu0 0.0
      %1653 = vmatpush.msra.mxu0 0.0
      %1654 = vmatpush.msra.mxu0 0.0
      %1655 = vmatpush.msra.mxu0 0.0
      %1656 = vmatpush.msra.mxu0 0.0
      %1657 = vmatpush.msra.mxu0 0.0
      %1658 = vmatpush.msra.mxu0 0.0
      %1659 = vmatpush.msra.mxu0 0.0
      %1660 = vmatpush.msra.mxu0 0.0
      %1661 = vmatpush.msra.mxu0 0.0
      %1662 = vmatpush.msra.mxu0 %v1553
      %1663 = vmatpush.msra.mxu0 %v1549
      %1664 = vmatpush.msra.mxu0 %v1545
      %1665 = vmatpush.msra.mxu0 %v1541
      %1666 = vmatmul.f32.gmra.mxu0 %v1454
      %v1667 = vpop.f32.mrf.mxu0
      %v1668 = vadd.f32 %v1623, %v1667
      %1669 = vdwg.mxu0
      %1670 = vmatpush.msra.mxu0 0.0
      %1671 = vmatpush.msra.mxu0 0.0
      %1672 = vmatpush.msra.mxu0 0.0
      %1673 = vmatpush.msra.mxu0 0.0
      %1674 = vmatpush.msra.mxu0 0.0
      %1675 = vmatpush.msra.mxu0 0.0
      %1676 = vmatpush.msra.mxu0 0.0
      %1677 = vmatpush.msra.mxu0 0.0
      %1678 = vmatpush.msra.mxu0 0.0
      %1679 = vmatpush.msra.mxu0 0.0
      %1680 = vmatpush.msra.mxu0 0.0
      %1681 = vmatpush.msra.mxu0 0.0
      %1682 = vmatpush.msra.mxu0 %v1554
      %1683 = vmatpush.msra.mxu0 %v1550
      %1684 = vmatpush.msra.mxu0 %v1546
      %1685 = vmatpush.msra.mxu0 %v1542
      %1686 = vmatmul.f32.gmra.mxu0 %v1454
      %v1687 = vpop.f32.mrf.mxu0
      %v1688 = vadd.f32 %v1624, %v1687
      %1689 = vdwg.mxu0
      %1690 = vmatpush.msra.mxu0 0.0
      %1691 = vmatpush.msra.mxu0 0.0
      %1692 = vmatpush.msra.mxu0 0.0
      %1693 = vmatpush.msra.mxu0 0.0
      %1694 = vmatpush.msra.mxu0 0.0
      %1695 = vmatpush.msra.mxu0 0.0
      %1696 = vmatpush.msra.mxu0 0.0
      %1697 = vmatpush.msra.mxu0 0.0
      %1698 = vmatpush.msra.mxu0 0.0
      %1699 = vmatpush.msra.mxu0 0.0
      %1700 = vmatpush.msra.mxu0 0.0
      %1701 = vmatpush.msra.mxu0 0.0
      %1702 = vmatpush.msra.mxu0 %v1555
      %1703 = vmatpush.msra.mxu0 %v1551
      %1704 = vmatpush.msra.mxu0 %v1547
      %1705 = vmatpush.msra.mxu0 %v1543
      %1706 = vmatmul.f32.gmra.mxu0 %v1454
      %v1707 = vpop.f32.mrf.mxu0
      %v1708 = vadd.f32 %v1625, %v1707
      %1709 = vdwg.mxu0
      %v1710 = vmax.f32 %v1648, 0.0
      %v1711 = vmax.f32 %v1668, 0.0
      %v1712 = vmax.f32 %v1688, 0.0
      %v1713 = vmax.f32 %v1708, 0.0
      %1714 = vmatpush.msra.mxu0 %v1572
      %1715 = vmatpush.msra.mxu0 %v1571
      %1716 = vmatpush.msra.mxu0 %v1570
      %1717 = vmatpush.msra.mxu0 %v1569
      %1718 = vmatpush.msra.mxu0 %v1568
      %1719 = vmatpush.msra.mxu0 %v1567
      %1720 = vmatpush.msra.mxu0 %v1566
      %1721 = vmatpush.msra.mxu0 %v1565
      %1722 = vmatpush.msra.mxu0 %v1564
      %1723 = vmatpush.msra.mxu0 %v1563
      %1724 = vmatpush.msra.mxu0 %v1562
      %1725 = vmatpush.msra.mxu0 %v1561
      %1726 = vmatpush.msra.mxu0 %v1560
      %1727 = vmatpush.msra.mxu0 %v1559
      %1728 = vmatpush.msra.mxu0 %v1558
      %1729 = vmatpush.msra.mxu0 %v1557
      %1730 = vmatmul.f32.gmra.mxu0 %v1710
      %v1731 = vpop.f32.mrf.mxu0
      %v1732 = vadd.f32 0.0, %v1731
      %1733 = vdwg.mxu0
      %1734 = vmatpush.msra.mxu0 %v1588
      %1735 = vmatpush.msra.mxu0 %v1587
      %1736 = vmatpush.msra.mxu0 %v1586
      %1737 = vmatpush.msra.mxu0 %v1585
      %1738 = vmatpush.msra.mxu0 %v1584
      %1739 = vmatpush.msra.mxu0 %v1583
      %1740 = vmatpush.msra.mxu0 %v1582
      %1741 = vmatpush.msra.mxu0 %v1581
      %1742 = vmatpush.msra.mxu0 %v1580
      %1743 = vmatpush.msra.mxu0 %v1579
      %1744 = vmatpush.msra.mxu0 %v1578
      %1745 = vmatpush.msra.mxu0 %v1577
      %1746 = vmatpush.msra.mxu0 %v1576
      %1747 = vmatpush.msra.mxu0 %v1575
      %1748 = vmatpush.msra.mxu0 %v1574
      %1749 = vmatpush.msra.mxu0 %v1573
      %1750 = vmatmul.f32.gmra.mxu0 %v1711
      %v1751 = vpop.f32.mrf.mxu0
      %v1752 = vadd.f32 %v1732, %v1751
      %1753 = vdwg.mxu0
      %1754 = vmatpush.msra.mxu0 %v1604
      %1755 = vmatpush.msra.mxu0 %v1603
      %1756 = vmatpush.msra.mxu0 %v1602
      %1757 = vmatpush.msra.mxu0 %v1601
      %1758 = vmatpush.msra.mxu0 %v1600
      %1759 = vmatpush.msra.mxu0 %v1599
      %1760 = vmatpush.msra.mxu0 %v1598
      %1761 = vmatpush.msra.mxu0 %v1597
      %1762 = vmatpush.msra.mxu0 %v1596
      %1763 = vmatpush.msra.mxu0 %v1595
      %1764 = vmatpush.msra.mxu0 %v1594
      %1765 = vmatpush.msra.mxu0 %v1593
      %1766 = vmatpush.msra.mxu0 %v1592
      %1767 = vmatpush.msra.mxu0 %v1591
      %1768 = vmatpush.msra.mxu0 %v1590
      %1769 = vmatpush.msra.mxu0 %v1589
      %1770 = vmatmul.f32.gmra.mxu0 %v1712
      %v1771 = vpop.f32.mrf.mxu0
      %v1772 = vadd.f32 %v1752, %v1771
      %1773 = vdwg.mxu0
      %1774 = vmatpush.msra.mxu0 %v1620
      %1775 = vmatpush.msra.mxu0 %v1619
      %1776 = vmatpush.msra.mxu0 %v1618
      %1777 = vmatpush.msra.mxu0 %v1617
      %1778 = vmatpush.msra.mxu0 %v1616
      %1779 = vmatpush.msra.mxu0 %v1615
      %1780 = vmatpush.msra.mxu0 %v1614
      %1781 = vmatpush.msra.mxu0 %v1613
      %1782 = vmatpush.msra.mxu0 %v1612
      %1783 = vmatpush.msra.mxu0 %v1611
      %1784 = vmatpush.msra.mxu0 %v1610
      %1785 = vmatpush.msra.mxu0 %v1609
      %1786 = vmatpush.msra.mxu0 %v1608
      %1787 = vmatpush.msra.mxu0 %v1607
      %1788 = vmatpush.msra.mxu0 %v1606
      %1789 = vmatpush.msra.mxu0 %v1605
      %1790 = vmatmul.f32.gmra.mxu0 %v1713
      %v1791 = vpop.f32.mrf.mxu0
      %v1792 = vadd.f32 %v1772, %v1791
      %1793 = vdwg.mxu0
      %1794 = vmatpush.msra.mxu0 %v1395
      %1795 = vmatpush.msra.mxu0 %v1394
      %1796 = vmatpush.msra.mxu0 %v1393
      %1797 = vmatpush.msra.mxu0 %v1392
      %1798 = vmatpush.msra.mxu0 %v1391
      %1799 = vmatpush.msra.mxu0 %v1390
      %1800 = vmatpush.msra.mxu0 %v1389
      %1801 = vmatpush.msra.mxu0 %v1388
      %1802 = vmatpush.msra.mxu0 %v1387
      %1803 = vmatpush.msra.mxu0 %v1386
      %1804 = vmatpush.msra.mxu0 %v1385
      %1805 = vmatpush.msra.mxu0 %v1384
      %1806 = vmatpush.msra.mxu0 %v1383
      %1807 = vmatpush.msra.mxu0 %v1382
      %1808 = vmatpush.msra.mxu0 %v1381
      %1809 = vmatpush.msra.mxu0 %v1380
      %1810 = vmatmul.f32.gmra.mxu0 %v1536
      %v1811 = vpop.f32.mrf.mxu0
      %v1812 = vadd.f32 %v1792, %v1811
      %1813 = vdwg.mxu0
      %1814 = vmatpush.msra.mxu0 %v1411
      %1815 = vmatpush.msra.mxu0 %v1410
      %1816 = vmatpush.msra.mxu0 %v1409
      %1817 = vmatpush.msra.mxu0 %v1408
      %1818 = vmatpush.msra.mxu0 %v1407
      %1819 = vmatpush.msra.mxu0 %v1406
      %1820 = vmatpush.msra.mxu0 %v1405
      %1821 = vmatpush.msra.mxu0 %v1404
      %1822 = vmatpush.msra.mxu0 %v1403
      %1823 = vmatpush.msra.mxu0 %v1402
      %1824 = vmatpush.msra.mxu0 %v1401
      %1825 = vmatpush.msra.mxu0 %v1400
      %1826 = vmatpush.msra.mxu0 %v1399
      %1827 = vmatpush.msra.mxu0 %v1398
      %1828 = vmatpush.msra.mxu0 %v1397
      %1829 = vmatpush.msra.mxu0 %v1396
      %1830 = vmatmul.f32.gmra.mxu0 %v1537
      %v1831 = vpop.f32.mrf.mxu0
      %v1832 = vadd.f32 %v1812, %v1831
      %1833 = vdwg.mxu0
      %1834 = vmatpush.msra.mxu0 %v1427
      %1835 = vmatpush.msra.mxu0 %v1426
      %1836 = vmatpush.msra.mxu0 %v1425
      %1837 = vmatpush.msra.mxu0 %v1424
      %1838 = vmatpush.msra.mxu0 %v1423
      %1839 = vmatpush.msra.mxu0 %v1422
      %1840 = vmatpush.msra.mxu0 %v1421
      %1841 = vmatpush.msra.mxu0 %v1420
      %1842 = vmatpush.msra.mxu0 %v1419
      %1843 = vmatpush.msra.mxu0 %v1418
      %1844 = vmatpush.msra.mxu0 %v1417
      %1845 = vmatpush.msra.mxu0 %v1416
      %1846 = vmatpush.msra.mxu0 %v1415
      %1847 = vmatpush.msra.mxu0 %v1414
      %1848 = vmatpush.msra.mxu0 %v1413
      %1849 = vmatpush.msra.mxu0 %v1412
      %1850 = vmatmul.f32.gmra.mxu0 %v1538
      %v1851 = vpop.f32.mrf.mxu0
      %v1852 = vadd.f32 %v1832, %v1851
      %1853 = vdwg.mxu0
      %1854 = vmatpush.msra.mxu0 %v1443
      %1855 = vmatpush.msra.mxu0 %v1442
      %1856 = vmatpush.msra.mxu0 %v1441
      %1857 = vmatpush.msra.mxu0 %v1440
      %1858 = vmatpush.msra.mxu0 %v1439
      %1859 = vmatpush.msra.mxu0 %v1438
      %1860 = vmatpush.msra.mxu0 %v1437
      %1861 = vmatpush.msra.mxu0 %v1436
      %1862 = vmatpush.msra.mxu0 %v1435
      %1863 = vmatpush.msra.mxu0 %v1434
      %1864 = vmatpush.msra.mxu0 %v1433
      %1865 = vmatpush.msra.mxu0 %v1432
      %1866 = vmatpush.msra.mxu0 %v1431
      %1867 = vmatpush.msra.mxu0 %v1430
      %1868 = vmatpush.msra.mxu0 %v1429
      %1869 = vmatpush.msra.mxu0 %v1428
      %1870 = vmatmul.f32.gmra.mxu0 %v1539
      %v1871 = vpop.f32.mrf.mxu0
      %v1872 = vadd.f32 %v1852, %v1871
      %1873 = vdwg.mxu0
      %v1874 = vld [vmem:[%s19 + $0x40] sm:$0xff]
      %v1875 = vld [vmem:[%s19 + $0x48] sm:$0xff]
      %v1876 = vld [vmem:[%s19 + $0x50] sm:$0xff]
      %v1877 = vld [vmem:[%s19 + $0x58] sm:$0xff]
      %v1878 = vld [vmem:[%s19 + $0xc0] sm:$0xff]
      %v1879 = vld [vmem:[%s19 + $0xc8] sm:$0xff]
      %v1880 = vld [vmem:[%s19 + $0xd0] sm:$0xff]
      %v1881 = vld [vmem:[%s19 + $0xd8] sm:$0xff]
      %v1882 = vld [vmem:[%s19 + $0x140] sm:$0xff]
      %v1883 = vld [vmem:[%s19 + $0x148] sm:$0xff]
      %v1884 = vld [vmem:[%s19 + $0x150] sm:$0xff]
      %v1885 = vld [vmem:[%s19 + $0x158] sm:$0xff]
      %v1886 = vld [vmem:[%s19 + $0x1c0] sm:$0xff]
      %v1887 = vld [vmem:[%s19 + $0x1c8] sm:$0xff]
      %v1888 = vld [vmem:[%s19 + $0x1d0] sm:$0xff]
      %v1889 = vld [vmem:[%s19 + $0x1d8] sm:$0xff]
      %v1890 = vld [vmem:[%s21 + $0x8] sm:$0xf]
      %v1891 = vld [vmem:[%s23 + $0x400] sm:$0xff]
      %v1892 = vld [vmem:[%s23 + $0x408] sm:$0xff]
      %v1893 = vld [vmem:[%s23 + $0x410] sm:$0xff]
      %v1894 = vld [vmem:[%s23 + $0x418] sm:$0xff]
      %v1895 = vld [vmem:[%s23 + $0x420] sm:$0xff]
      %v1896 = vld [vmem:[%s23 + $0x428] sm:$0xff]
      %v1897 = vld [vmem:[%s23 + $0x430] sm:$0xff]
      %v1898 = vld [vmem:[%s23 + $0x438] sm:$0xff]
      %v1899 = vld [vmem:[%s23 + $0x440] sm:$0xff]
      %v1900 = vld [vmem:[%s23 + $0x448] sm:$0xff]
      %v1901 = vld [vmem:[%s23 + $0x450] sm:$0xff]
      %v1902 = vld [vmem:[%s23 + $0x458] sm:$0xff]
      %v1903 = vld [vmem:[%s23 + $0x460] sm:$0xff]
      %v1904 = vld [vmem:[%s23 + $0x468] sm:$0xff]
      %v1905 = vld [vmem:[%s23 + $0x470] sm:$0xff]
      %v1906 = vld [vmem:[%s23 + $0x478] sm:$0xff]
      %v1907 = vld [vmem:[%s23 + $0x480] sm:$0xff]
      %v1908 = vld [vmem:[%s23 + $0x488] sm:$0xff]
      %v1909 = vld [vmem:[%s23 + $0x490] sm:$0xff]
      %v1910 = vld [vmem:[%s23 + $0x498] sm:$0xff]
      %v1911 = vld [vmem:[%s23 + $0x4a0] sm:$0xff]
      %v1912 = vld [vmem:[%s23 + $0x4a8] sm:$0xff]
      %v1913 = vld [vmem:[%s23 + $0x4b0] sm:$0xff]
      %v1914 = vld [vmem:[%s23 + $0x4b8] sm:$0xff]
      %v1915 = vld [vmem:[%s23 + $0x4c0] sm:$0xff]
      %v1916 = vld [vmem:[%s23 + $0x4c8] sm:$0xff]
      %v1917 = vld [vmem:[%s23 + $0x4d0] sm:$0xff]
      %v1918 = vld [vmem:[%s23 + $0x4d8] sm:$0xff]
      %v1919 = vld [vmem:[%s23 + $0x4e0] sm:$0xff]
      %v1920 = vld [vmem:[%s23 + $0x4e8] sm:$0xff]
      %v1921 = vld [vmem:[%s23 + $0x4f0] sm:$0xff]
      %v1922 = vld [vmem:[%s23 + $0x4f8] sm:$0xff]
      %v1923 = vld [vmem:[%s23 + $0x500] sm:$0xff]
      %v1924 = vld [vmem:[%s23 + $0x508] sm:$0xff]
      %v1925 = vld [vmem:[%s23 + $0x510] sm:$0xff]
      %v1926 = vld [vmem:[%s23 + $0x518] sm:$0xff]
      %v1927 = vld [vmem:[%s23 + $0x520] sm:$0xff]
      %v1928 = vld [vmem:[%s23 + $0x528] sm:$0xff]
      %v1929 = vld [vmem:[%s23 + $0x530] sm:$0xff]
      %v1930 = vld [vmem:[%s23 + $0x538] sm:$0xff]
      %v1931 = vld [vmem:[%s23 + $0x540] sm:$0xff]
      %v1932 = vld [vmem:[%s23 + $0x548] sm:$0xff]
      %v1933 = vld [vmem:[%s23 + $0x550] sm:$0xff]
      %v1934 = vld [vmem:[%s23 + $0x558] sm:$0xff]
      %v1935 = vld [vmem:[%s23 + $0x560] sm:$0xff]
      %v1936 = vld [vmem:[%s23 + $0x568] sm:$0xff]
      %v1937 = vld [vmem:[%s23 + $0x570] sm:$0xff]
      %v1938 = vld [vmem:[%s23 + $0x578] sm:$0xff]
      %v1939 = vld [vmem:[%s23 + $0x580] sm:$0xff]
      %v1940 = vld [vmem:[%s23 + $0x588] sm:$0xff]
      %v1941 = vld [vmem:[%s23 + $0x590] sm:$0xff]
      %v1942 = vld [vmem:[%s23 + $0x598] sm:$0xff]
      %v1943 = vld [vmem:[%s23 + $0x5a0] sm:$0xff]
      %v1944 = vld [vmem:[%s23 + $0x5a8] sm:$0xff]
      %v1945 = vld [vmem:[%s23 + $0x5b0] sm:$0xff]
      %v1946 = vld [vmem:[%s23 + $0x5b8] sm:$0xff]
      %v1947 = vld [vmem:[%s23 + $0x5c0] sm:$0xff]
      %v1948 = vld [vmem:[%s23 + $0x5c8] sm:$0xff]
      %v1949 = vld [vmem:[%s23 + $0x5d0] sm:$0xff]
      %v1950 = vld [vmem:[%s23 + $0x5d8] sm:$0xff]
      %v1951 = vld [vmem:[%s23 + $0x5e0] sm:$0xff]
      %v1952 = vld [vmem:[%s23 + $0x5e8] sm:$0xff]
      %v1953 = vld [vmem:[%s23 + $0x5f0] sm:$0xff]
      %v1954 = vld [vmem:[%s23 + $0x5f8] sm:$0xff]
      %v1956 = vperm.slane %v1890, 0
      %v1957 = vperm.slane %v1890, 1
      %v1958 = vperm.slane %v1890, 2
      %v1959 = vperm.slane %v1890, 3
      %1964 = vmatpush.msra.mxu0 0.0
      %1965 = vmatpush.msra.mxu0 0.0
      %1966 = vmatpush.msra.mxu0 0.0
      %1967 = vmatpush.msra.mxu0 0.0
      %1968 = vmatpush.msra.mxu0 0.0
      %1969 = vmatpush.msra.mxu0 0.0
      %1970 = vmatpush.msra.mxu0 0.0
      %1971 = vmatpush.msra.mxu0 0.0
      %1972 = vmatpush.msra.mxu0 0.0
      %1973 = vmatpush.msra.mxu0 0.0
      %1974 = vmatpush.msra.mxu0 0.0
      %1975 = vmatpush.msra.mxu0 0.0
      %1976 = vmatpush.msra.mxu0 %v1886
      %1977 = vmatpush.msra.mxu0 %v1882
      %1978 = vmatpush.msra.mxu0 %v1878
      %1979 = vmatpush.msra.mxu0 %v1874
      %1980 = vmatmul.f32.gmra.mxu0 %v1454
      %v1981 = vpop.f32.mrf.mxu0
      %v1982 = vadd.f32 %v1956, %v1981
      %1983 = vdwg.mxu0
      %1984 = vmatpush.msra.mxu0 0.0
      %1985 = vmatpush.msra.mxu0 0.0
      %1986 = vmatpush.msra.mxu0 0.0
      %1987 = vmatpush.msra.mxu0 0.0
      %1988 = vmatpush.msra.mxu0 0.0
      %1989 = vmatpush.msra.mxu0 0.0
      %1990 = vmatpush.msra.mxu0 0.0
      %1991 = vmatpush.msra.mxu0 0.0
      %1992 = vmatpush.msra.mxu0 0.0
      %1993 = vmatpush.msra.mxu0 0.0
      %1994 = vmatpush.msra.mxu0 0.0
      %1995 = vmatpush.msra.mxu0 0.0
      %1996 = vmatpush.msra.mxu0 %v1887
      %1997 = vmatpush.msra.mxu0 %v1883
      %1998 = vmatpush.msra.mxu0 %v1879
      %1999 = vmatpush.msra.mxu0 %v1875
      %2000 = vmatmul.f32.gmra.mxu0 %v1454
      %v2001 = vpop.f32.mrf.mxu0
      %v2002 = vadd.f32 %v1957, %v2001
      %2003 = vdwg.mxu0
      %2004 = vmatpush.msra.mxu0 0.0
      %2005 = vmatpush.msra.mxu0 0.0
      %2006 = vmatpush.msra.mxu0 0.0
      %2007 = vmatpush.msra.mxu0 0.0
      %2008 = vmatpush.msra.mxu0 0.0
      %2009 = vmatpush.msra.mxu0 0.0
      %2010 = vmatpush.msra.mxu0 0.0
      %2011 = vmatpush.msra.mxu0 0.0
      %2012 = vmatpush.msra.mxu0 0.0
      %2013 = vmatpush.msra.mxu0 0.0
      %2014 = vmatpush.msra.mxu0 0.0
      %2015 = vmatpush.msra.mxu0 0.0
      %2016 = vmatpush.msra.mxu0 %v1888
      %2017 = vmatpush.msra.mxu0 %v1884
      %2018 = vmatpush.msra.mxu0 %v1880
      %2019 = vmatpush.msra.mxu0 %v1876
      %2020 = vmatmul.f32.gmra.mxu0 %v1454
      %v2021 = vpop.f32.mrf.mxu0
      %v2022 = vadd.f32 %v1958, %v2021
      %2023 = vdwg.mxu0
      %2024 = vmatpush.msra.mxu0 0.0
      %2025 = vmatpush.msra.mxu0 0.0
      %2026 = vmatpush.msra.mxu0 0.0
      %2027 = vmatpush.msra.mxu0 0.0
      %2028 = vmatpush.msra.mxu0 0.0
      %2029 = vmatpush.msra.mxu0 0.0
      %2030 = vmatpush.msra.mxu0 0.0
      %2031 = vmatpush.msra.mxu0 0.0
      %2032 = vmatpush.msra.mxu0 0.0
      %2033 = vmatpush.msra.mxu0 0.0
      %2034 = vmatpush.msra.mxu0 0.0
      %2035 = vmatpush.msra.mxu0 0.0
      %2036 = vmatpush.msra.mxu0 %v1889
      %2037 = vmatpush.msra.mxu0 %v1885
      %2038 = vmatpush.msra.mxu0 %v1881
      %2039 = vmatpush.msra.mxu0 %v1877
      %2040 = vmatmul.f32.gmra.mxu0 %v1454
      %v2041 = vpop.f32.mrf.mxu0
      %v2042 = vadd.f32 %v1959, %v2041
      %2043 = vdwg.mxu0
      %v2044 = vmax.f32 %v1982, 0.0
      %v2045 = vmax.f32 %v2002, 0.0
      %v2046 = vmax.f32 %v2022, 0.0
      %v2047 = vmax.f32 %v2042, 0.0
      %2048 = vmatpush.msra.mxu0 %v1906
      %2049 = vmatpush.msra.mxu0 %v1905
      %2050 = vmatpush.msra.mxu0 %v1904
      %2051 = vmatpush.msra.mxu0 %v1903
      %2052 = vmatpush.msra.mxu0 %v1902
      %2053 = vmatpush.msra.mxu0 %v1901
      %2054 = vmatpush.msra.mxu0 %v1900
      %2055 = vmatpush.msra.mxu0 %v1899
      %2056 = vmatpush.msra.mxu0 %v1898
      %2057 = vmatpush.msra.mxu0 %v1897
      %2058 = vmatpush.msra.mxu0 %v1896
      %2059 = vmatpush.msra.mxu0 %v1895
      %2060 = vmatpush.msra.mxu0 %v1894
      %2061 = vmatpush.msra.mxu0 %v1893
      %2062 = vmatpush.msra.mxu0 %v1892
      %2063 = vmatpush.msra.mxu0 %v1891
      %2064 = vmatmul.f32.gmra.mxu0 %v2044
      %v2065 = vpop.f32.mrf.mxu0
      %v2066 = vadd.f32 0.0, %v2065
      %2067 = vdwg.mxu0
      %2068 = vmatpush.msra.mxu0 %v1922
      %2069 = vmatpush.msra.mxu0 %v1921
      %2070 = vmatpush.msra.mxu0 %v1920
      %2071 = vmatpush.msra.mxu0 %v1919
      %2072 = vmatpush.msra.mxu0 %v1918
      %2073 = vmatpush.msra.mxu0 %v1917
      %2074 = vmatpush.msra.mxu0 %v1916
      %2075 = vmatpush.msra.mxu0 %v1915
      %2076 = vmatpush.msra.mxu0 %v1914
      %2077 = vmatpush.msra.mxu0 %v1913
      %2078 = vmatpush.msra.mxu0 %v1912
      %2079 = vmatpush.msra.mxu0 %v1911
      %2080 = vmatpush.msra.mxu0 %v1910
      %2081 = vmatpush.msra.mxu0 %v1909
      %2082 = vmatpush.msra.mxu0 %v1908
      %2083 = vmatpush.msra.mxu0 %v1907
      %2084 = vmatmul.f32.gmra.mxu0 %v2045
      %v2085 = vpop.f32.mrf.mxu0
      %v2086 = vadd.f32 %v2066, %v2085
      %2087 = vdwg.mxu0
      %2088 = vmatpush.msra.mxu0 %v1938
      %2089 = vmatpush.msra.mxu0 %v1937
      %2090 = vmatpush.msra.mxu0 %v1936
      %2091 = vmatpush.msra.mxu0 %v1935
      %2092 = vmatpush.msra.mxu0 %v1934
      %2093 = vmatpush.msra.mxu0 %v1933
      %2094 = vmatpush.msra.mxu0 %v1932
      %2095 = vmatpush.msra.mxu0 %v1931
      %2096 = vmatpush.msra.mxu0 %v1930
      %2097 = vmatpush.msra.mxu0 %v1929
      %2098 = vmatpush.msra.mxu0 %v1928
      %2099 = vmatpush.msra.mxu0 %v1927
      %2100 = vmatpush.msra.mxu0 %v1926
      %2101 = vmatpush.msra.mxu0 %v1925
      %2102 = vmatpush.msra.mxu0 %v1924
      %2103 = vmatpush.msra.mxu0 %v1923
      %2104 = vmatmul.f32.gmra.mxu0 %v2046
      %v2105 = vpop.f32.mrf.mxu0
      %v2106 = vadd.f32 %v2086, %v2105
      %2107 = vdwg.mxu0
      %2108 = vmatpush.msra.mxu0 %v1954
      %2109 = vmatpush.msra.mxu0 %v1953
      %2110 = vmatpush.msra.mxu0 %v1952
      %2111 = vmatpush.msra.mxu0 %v1951
      %2112 = vmatpush.msra.mxu0 %v1950
      %2113 = vmatpush.msra.mxu0 %v1949
      %2114 = vmatpush.msra.mxu0 %v1948
      %2115 = vmatpush.msra.mxu0 %v1947
      %2116 = vmatpush.msra.mxu0 %v1946
      %2117 = vmatpush.msra.mxu0 %v1945
      %2118 = vmatpush.msra.mxu0 %v1944
      %2119 = vmatpush.msra.mxu0 %v1943
      %2120 = vmatpush.msra.mxu0 %v1942
      %2121 = vmatpush.msra.mxu0 %v1941
      %2122 = vmatpush.msra.mxu0 %v1940
      %2123 = vmatpush.msra.mxu0 %v1939
      %2124 = vmatmul.f32.gmra.mxu0 %v2047
      %v2125 = vpop.f32.mrf.mxu0
      %v2126 = vadd.f32 %v2106, %v2125
      %2127 = vdwg.mxu0
      %v2128 = vadd.f32 %v1872, %v2126
      %v2129 = vld [vmem:[%s19 + $0x60] sm:$0xff]
      %v2130 = vld [vmem:[%s19 + $0x68] sm:$0xff]
      %v2131 = vld [vmem:[%s19 + $0x70] sm:$0xff]
      %v2132 = vld [vmem:[%s19 + $0x78] sm:$0xff]
      %v2133 = vld [vmem:[%s19 + $0xe0] sm:$0xff]
      %v2134 = vld [vmem:[%s19 + $0xe8] sm:$0xff]
      %v2135 = vld [vmem:[%s19 + $0xf0] sm:$0xff]
      %v2136 = vld [vmem:[%s19 + $0xf8] sm:$0xff]
      %v2137 = vld [vmem:[%s19 + $0x160] sm:$0xff]
      %v2138 = vld [vmem:[%s19 + $0x168] sm:$0xff]
      %v2139 = vld [vmem:[%s19 + $0x170] sm:$0xff]
      %v2140 = vld [vmem:[%s19 + $0x178] sm:$0xff]
      %v2141 = vld [vmem:[%s19 + $0x1e0] sm:$0xff]
      %v2142 = vld [vmem:[%s19 + $0x1e8] sm:$0xff]
      %v2143 = vld [vmem:[%s19 + $0x1f0] sm:$0xff]
      %v2144 = vld [vmem:[%s19 + $0x1f8] sm:$0xff]
      %v2145 = vld [vmem:[%s21 + $0xc] sm:$0xf]
      %v2146 = vld [vmem:[%s23 + $0x600] sm:$0xff]
      %v2147 = vld [vmem:[%s23 + $0x608] sm:$0xff]
      %v2148 = vld [vmem:[%s23 + $0x610] sm:$0xff]
      %v2149 = vld [vmem:[%s23 + $0x618] sm:$0xff]
      %v2150 = vld [vmem:[%s23 + $0x620] sm:$0xff]
      %v2151 = vld [vmem:[%s23 + $0x628] sm:$0xff]
      %v2152 = vld [vmem:[%s23 + $0x630] sm:$0xff]
      %v2153 = vld [vmem:[%s23 + $0x638] sm:$0xff]
      %v2154 = vld [vmem:[%s23 + $0x640] sm:$0xff]
      %v2155 = vld [vmem:[%s23 + $0x648] sm:$0xff]
      %v2156 = vld [vmem:[%s23 + $0x650] sm:$0xff]
      %v2157 = vld [vmem:[%s23 + $0x658] sm:$0xff]
      %v2158 = vld [vmem:[%s23 + $0x660] sm:$0xff]
      %v2159 = vld [vmem:[%s23 + $0x668] sm:$0xff]
      %v2160 = vld [vmem:[%s23 + $0x670] sm:$0xff]
      %v2161 = vld [vmem:[%s23 + $0x678] sm:$0xff]
      %v2162 = vld [vmem:[%s23 + $0x680] sm:$0xff]
      %v2163 = vld [vmem:[%s23 + $0x688] sm:$0xff]
      %v2164 = vld [vmem:[%s23 + $0x690] sm:$0xff]
      %v2165 = vld [vmem:[%s23 + $0x698] sm:$0xff]
      %v2166 = vld [vmem:[%s23 + $0x6a0] sm:$0xff]
      %v2167 = vld [vmem:[%s23 + $0x6a8] sm:$0xff]
      %v2168 = vld [vmem:[%s23 + $0x6b0] sm:$0xff]
      %v2169 = vld [vmem:[%s23 + $0x6b8] sm:$0xff]
      %v2170 = vld [vmem:[%s23 + $0x6c0] sm:$0xff]
      %v2171 = vld [vmem:[%s23 + $0x6c8] sm:$0xff]
      %v2172 = vld [vmem:[%s23 + $0x6d0] sm:$0xff]
      %v2173 = vld [vmem:[%s23 + $0x6d8] sm:$0xff]
      %v2174 = vld [vmem:[%s23 + $0x6e0] sm:$0xff]
      %v2175 = vld [vmem:[%s23 + $0x6e8] sm:$0xff]
      %v2176 = vld [vmem:[%s23 + $0x6f0] sm:$0xff]
      %v2177 = vld [vmem:[%s23 + $0x6f8] sm:$0xff]
      %v2178 = vld [vmem:[%s23 + $0x700] sm:$0xff]
      %v2179 = vld [vmem:[%s23 + $0x708] sm:$0xff]
      %v2180 = vld [vmem:[%s23 + $0x710] sm:$0xff]
      %v2181 = vld [vmem:[%s23 + $0x718] sm:$0xff]
      %v2182 = vld [vmem:[%s23 + $0x720] sm:$0xff]
      %v2183 = vld [vmem:[%s23 + $0x728] sm:$0xff]
      %v2184 = vld [vmem:[%s23 + $0x730] sm:$0xff]
      %v2185 = vld [vmem:[%s23 + $0x738] sm:$0xff]
      %v2186 = vld [vmem:[%s23 + $0x740] sm:$0xff]
      %v2187 = vld [vmem:[%s23 + $0x748] sm:$0xff]
      %v2188 = vld [vmem:[%s23 + $0x750] sm:$0xff]
      %v2189 = vld [vmem:[%s23 + $0x758] sm:$0xff]
      %v2190 = vld [vmem:[%s23 + $0x760] sm:$0xff]
      %v2191 = vld [vmem:[%s23 + $0x768] sm:$0xff]
      %v2192 = vld [vmem:[%s23 + $0x770] sm:$0xff]
      %v2193 = vld [vmem:[%s23 + $0x778] sm:$0xff]
      %v2194 = vld [vmem:[%s23 + $0x780] sm:$0xff]
      %v2195 = vld [vmem:[%s23 + $0x788] sm:$0xff]
      %v2196 = vld [vmem:[%s23 + $0x790] sm:$0xff]
      %v2197 = vld [vmem:[%s23 + $0x798] sm:$0xff]
      %v2198 = vld [vmem:[%s23 + $0x7a0] sm:$0xff]
      %v2199 = vld [vmem:[%s23 + $0x7a8] sm:$0xff]
      %v2200 = vld [vmem:[%s23 + $0x7b0] sm:$0xff]
      %v2201 = vld [vmem:[%s23 + $0x7b8] sm:$0xff]
      %v2202 = vld [vmem:[%s23 + $0x7c0] sm:$0xff]
      %v2203 = vld [vmem:[%s23 + $0x7c8] sm:$0xff]
      %v2204 = vld [vmem:[%s23 + $0x7d0] sm:$0xff]
      %v2205 = vld [vmem:[%s23 + $0x7d8] sm:$0xff]
      %v2206 = vld [vmem:[%s23 + $0x7e0] sm:$0xff]
      %v2207 = vld [vmem:[%s23 + $0x7e8] sm:$0xff]
      %v2208 = vld [vmem:[%s23 + $0x7f0] sm:$0xff]
      %v2209 = vld [vmem:[%s23 + $0x7f8] sm:$0xff]
      %v2211 = vperm.slane %v2145, 0
      %v2212 = vperm.slane %v2145, 1
      %v2213 = vperm.slane %v2145, 2
      %v2214 = vperm.slane %v2145, 3
      %2219 = vmatpush.msra.mxu0 0.0
      %2220 = vmatpush.msra.mxu0 0.0
      %2221 = vmatpush.msra.mxu0 0.0
      %2222 = vmatpush.msra.mxu0 0.0
      %2223 = vmatpush.msra.mxu0 0.0
      %2224 = vmatpush.msra.mxu0 0.0
      %2225 = vmatpush.msra.mxu0 0.0
      %2226 = vmatpush.msra.mxu0 0.0
      %2227 = vmatpush.msra.mxu0 0.0
      %2228 = vmatpush.msra.mxu0 0.0
      %2229 = vmatpush.msra.mxu0 0.0
      %2230 = vmatpush.msra.mxu0 0.0
      %2231 = vmatpush.msra.mxu0 %v2141
      %2232 = vmatpush.msra.mxu0 %v2137
      %2233 = vmatpush.msra.mxu0 %v2133
      %2234 = vmatpush.msra.mxu0 %v2129
      %2235 = vmatmul.f32.gmra.mxu0 %v1454
      %v2236 = vpop.f32.mrf.mxu0
      %v2237 = vadd.f32 %v2211, %v2236
      %2238 = vdwg.mxu0
      %2239 = vmatpush.msra.mxu0 0.0
      %2240 = vmatpush.msra.mxu0 0.0
      %2241 = vmatpush.msra.mxu0 0.0
      %2242 = vmatpush.msra.mxu0 0.0
      %2243 = vmatpush.msra.mxu0 0.0
      %2244 = vmatpush.msra.mxu0 0.0
      %2245 = vmatpush.msra.mxu0 0.0
      %2246 = vmatpush.msra.mxu0 0.0
      %2247 = vmatpush.msra.mxu0 0.0
      %2248 = vmatpush.msra.mxu0 0.0
      %2249 = vmatpush.msra.mxu0 0.0
      %2250 = vmatpush.msra.mxu0 0.0
      %2251 = vmatpush.msra.mxu0 %v2142
      %2252 = vmatpush.msra.mxu0 %v2138
      %2253 = vmatpush.msra.mxu0 %v2134
      %2254 = vmatpush.msra.mxu0 %v2130
      %2255 = vmatmul.f32.gmra.mxu0 %v1454
      %v2256 = vpop.f32.mrf.mxu0
      %v2257 = vadd.f32 %v2212, %v2256
      %2258 = vdwg.mxu0
      %2259 = vmatpush.msra.mxu0 0.0
      %2260 = vmatpush.msra.mxu0 0.0
      %2261 = vmatpush.msra.mxu0 0.0
      %2262 = vmatpush.msra.mxu0 0.0
      %2263 = vmatpush.msra.mxu0 0.0
      %2264 = vmatpush.msra.mxu0 0.0
      %2265 = vmatpush.msra.mxu0 0.0
      %2266 = vmatpush.msra.mxu0 0.0
      %2267 = vmatpush.msra.mxu0 0.0
      %2268 = vmatpush.msra.mxu0 0.0
      %2269 = vmatpush.msra.mxu0 0.0
      %2270 = vmatpush.msra.mxu0 0.0
      %2271 = vmatpush.msra.mxu0 %v2143
      %2272 = vmatpush.msra.mxu0 %v2139
      %2273 = vmatpush.msra.mxu0 %v2135
      %2274 = vmatpush.msra.mxu0 %v2131
      %2275 = vmatmul.f32.gmra.mxu0 %v1454
      %v2276 = vpop.f32.mrf.mxu0
      %v2277 = vadd.f32 %v2213, %v2276
      %2278 = vdwg.mxu0
      %2279 = vmatpush.msra.mxu0 0.0
      %2280 = vmatpush.msra.mxu0 0.0
      %2281 = vmatpush.msra.mxu0 0.0
      %2282 = vmatpush.msra.mxu0 0.0
      %2283 = vmatpush.msra.mxu0 0.0
      %2284 = vmatpush.msra.mxu0 0.0
      %2285 = vmatpush.msra.mxu0 0.0
      %2286 = vmatpush.msra.mxu0 0.0
      %2287 = vmatpush.msra.mxu0 0.0
      %2288 = vmatpush.msra.mxu0 0.0
      %2289 = vmatpush.msra.mxu0 0.0
      %2290 = vmatpush.msra.mxu0 0.0
      %2291 = vmatpush.msra.mxu0 %v2144
      %2292 = vmatpush.msra.mxu0 %v2140
      %2293 = vmatpush.msra.mxu0 %v2136
      %2294 = vmatpush.msra.mxu0 %v2132
      %2295 = vmatmul.f32.gmra.mxu0 %v1454
      %v2296 = vpop.f32.mrf.mxu0
      %v2297 = vadd.f32 %v2214, %v2296
      %2298 = vdwg.mxu0
      %v2299 = vmax.f32 %v2237, 0.0
      %v2300 = vmax.f32 %v2257, 0.0
      %v2301 = vmax.f32 %v2277, 0.0
      %v2302 = vmax.f32 %v2297, 0.0
      %2303 = vmatpush.msra.mxu0 %v2161
      %2304 = vmatpush.msra.mxu0 %v2160
      %2305 = vmatpush.msra.mxu0 %v2159
      %2306 = vmatpush.msra.mxu0 %v2158
      %2307 = vmatpush.msra.mxu0 %v2157
      %2308 = vmatpush.msra.mxu0 %v2156
      %2309 = vmatpush.msra.mxu0 %v2155
      %2310 = vmatpush.msra.mxu0 %v2154
      %2311 = vmatpush.msra.mxu0 %v2153
      %2312 = vmatpush.msra.mxu0 %v2152
      %2313 = vmatpush.msra.mxu0 %v2151
      %2314 = vmatpush.msra.mxu0 %v2150
      %2315 = vmatpush.msra.mxu0 %v2149
      %2316 = vmatpush.msra.mxu0 %v2148
      %2317 = vmatpush.msra.mxu0 %v2147
      %2318 = vmatpush.msra.mxu0 %v2146
      %2319 = vmatmul.f32.gmra.mxu0 %v2299
      %v2320 = vpop.f32.mrf.mxu0
      %v2321 = vadd.f32 0.0, %v2320
      %2322 = vdwg.mxu0
      %2323 = vmatpush.msra.mxu0 %v2177
      %2324 = vmatpush.msra.mxu0 %v2176
      %2325 = vmatpush.msra.mxu0 %v2175
      %2326 = vmatpush.msra.mxu0 %v2174
      %2327 = vmatpush.msra.mxu0 %v2173
      %2328 = vmatpush.msra.mxu0 %v2172
      %2329 = vmatpush.msra.mxu0 %v2171
      %2330 = vmatpush.msra.mxu0 %v2170
      %2331 = vmatpush.msra.mxu0 %v2169
      %2332 = vmatpush.msra.mxu0 %v2168
      %2333 = vmatpush.msra.mxu0 %v2167
      %2334 = vmatpush.msra.mxu0 %v2166
      %2335 = vmatpush.msra.mxu0 %v2165
      %2336 = vmatpush.msra.mxu0 %v2164
      %2337 = vmatpush.msra.mxu0 %v2163
      %2338 = vmatpush.msra.mxu0 %v2162
      %2339 = vmatmul.f32.gmra.mxu0 %v2300
      %v2340 = vpop.f32.mrf.mxu0
      %v2341 = vadd.f32 %v2321, %v2340
      %2342 = vdwg.mxu0
      %2343 = vmatpush.msra.mxu0 %v2193
      %2344 = vmatpush.msra.mxu0 %v2192
      %2345 = vmatpush.msra.mxu0 %v2191
      %2346 = vmatpush.msra.mxu0 %v2190
      %2347 = vmatpush.msra.mxu0 %v2189
      %2348 = vmatpush.msra.mxu0 %v2188
      %2349 = vmatpush.msra.mxu0 %v2187
      %2350 = vmatpush.msra.mxu0 %v2186
      %2351 = vmatpush.msra.mxu0 %v2185
      %2352 = vmatpush.msra.mxu0 %v2184
      %2353 = vmatpush.msra.mxu0 %v2183
      %2354 = vmatpush.msra.mxu0 %v2182
      %2355 = vmatpush.msra.mxu0 %v2181
      %2356 = vmatpush.msra.mxu0 %v2180
      %2357 = vmatpush.msra.mxu0 %v2179
      %2358 = vmatpush.msra.mxu0 %v2178
      %2359 = vmatmul.f32.gmra.mxu0 %v2301
      %v2360 = vpop.f32.mrf.mxu0
      %v2361 = vadd.f32 %v2341, %v2360
      %2362 = vdwg.mxu0
      %2363 = vmatpush.msra.mxu0 %v2209
      %2364 = vmatpush.msra.mxu0 %v2208
      %2365 = vmatpush.msra.mxu0 %v2207
      %2366 = vmatpush.msra.mxu0 %v2206
      %2367 = vmatpush.msra.mxu0 %v2205
      %2368 = vmatpush.msra.mxu0 %v2204
      %2369 = vmatpush.msra.mxu0 %v2203
      %2370 = vmatpush.msra.mxu0 %v2202
      %2371 = vmatpush.msra.mxu0 %v2201
      %2372 = vmatpush.msra.mxu0 %v2200
      %2373 = vmatpush.msra.mxu0 %v2199
      %2374 = vmatpush.msra.mxu0 %v2198
      %2375 = vmatpush.msra.mxu0 %v2197
      %2376 = vmatpush.msra.mxu0 %v2196
      %2377 = vmatpush.msra.mxu0 %v2195
      %2378 = vmatpush.msra.mxu0 %v2194
      %2379 = vmatmul.f32.gmra.mxu0 %v2302
      %v2380 = vpop.f32.mrf.mxu0
      %v2381 = vadd.f32 %v2361, %v2380
      %2382 = vdwg.mxu0
      %v2383 = vadd.f32 %v2128, %v2381
      %v2384 = vld [vmem:[%s25] sm:$0x1]
      %v2386 = vperm.slane %v2384, 0
      %v2388 = vadd.f32 %v2383, %v2386
      %v2389 = vadd.f32 %v1362, %v2388
      %v2390 = vld [vmem:[%s27] sm:$0x1]
      %v2391 = vld [vmem:[%s29] sm:$0x1]
      %v2392 = vsel %vm938, %v2389, 0.0
      %2393 = vadd.xlane.f32.xlu0 %v2392
      %v2394 = vpop.xlane.xlu0 %2393
      %v2395 = vmul.f32 %v2394, %v1335
      %v2396 = vsub.f32 %v2389, %v2395
      %v2397 = vmul.f32 %v2396, %v2396
      %v2398 = vsel %vm938, %v2397, 0.0
      %2399 = vadd.xlane.f32.xlu0 %v2398
      %v2400 = vpop.xlane.xlu0 %2399
      %v2401 = vmul.f32 %v2400, %v1335
      %v2402 = vadd.f32 %v2401, 1e-05
      %v2403 = vrsqrt.pop %v2402
      %v2404 = vmul.f32 %v2403, %v2402
      %v2405 = vmul.f32 %v2404, %v2403
      %v2406 = vmul.f32 0.5, %v2405
      %v2407 = vsub.f32 1.5, %v2406
      %v2408 = vmul.f32 %v2403, %v2407
      %vm2409 = vweird.f32 %v2402
      %vm2410 = vweird.f32 %v2403
      %vm2411 = vmor %vm2409, %vm2410
      %v2412 = vsel %vm2411, %v2403, %v2408
      %v2413 = vmul.f32 %v2396, %v2412
      %v2415 = vperm.slane %v2390, 0
      %v2417 = vmul.f32 %v2413, %v2415
      %v2419 = vperm.slane %v2391, 0
      %v2421 = vadd.f32 %v2417, %v2419
      %v2422 = vld [vmem:[%s31] sm:$0xff]
      %v2423 = vld [vmem:[%s31 + $0x8] sm:$0xff]
      %v2424 = vld [vmem:[%s31 + $0x10] sm:$0xff]
      %v2425 = vld [vmem:[%s31 + $0x18] sm:$0xff]
      %v2426 = vld [vmem:[%s33] sm:$0x1]
      %v2428 = vperm.slane %v2426, 0
      %v2431 = vsel %vm938, %v2421, 0
      %2433 = vmatpush.msra.mxu0 0.0
      %2434 = vmatpush.msra.mxu0 0.0
      %2435 = vmatpush.msra.mxu0 0.0
      %2436 = vmatpush.msra.mxu0 0.0
      %2437 = vmatpush.msra.mxu0 0.0
      %2438 = vmatpush.msra.mxu0 0.0
      %2439 = vmatpush.msra.mxu0 0.0
      %2440 = vmatpush.msra.mxu0 0.0
      %2441 = vmatpush.msra.mxu0 0.0
      %2442 = vmatpush.msra.mxu0 0.0
      %2443 = vmatpush.msra.mxu0 0.0
      %2444 = vmatpush.msra.mxu0 0.0
      %2445 = vmatpush.msra.mxu0 %v2425
      %2446 = vmatpush.msra.mxu0 %v2424
      %2447 = vmatpush.msra.mxu0 %v2423
      %2448 = vmatpush.msra.mxu0 %v2422
      %2449 = vmatmul.f32.gmra.mxu0 %v2431
      %v2450 = vpop.f32.mrf.mxu0
      %v2451 = vadd.f32 %v2428, %v2450
      %2452 = vdwg.mxu0
      %v2453 = vmul.f32 %v2451, 0.35355338
      %2455 = vrot.lane.b32.xlu0 %v2451, 96
      %v2456 = vpop.permute.xlu0 %2455
      %v2458 = vsel %vm906, %v2453, 0
      %v2460 = vsel %vm906, %v2456, 0
      %2462 = vmatpush.xpose.msra.mxu0 0.0
      %2463 = vmatpush.xpose.msra.mxu0 0.0
      %2464 = vmatpush.xpose.msra.mxu0 0.0
      %2465 = vmatpush.xpose.msra.mxu0 0.0
      %2466 = vmatpush.xpose.msra.mxu0 0.0
      %2467 = vmatpush.xpose.msra.mxu0 0.0
      %2468 = vmatpush.xpose.msra.mxu0 0.0
      %2469 = vmatpush.xpose.msra.mxu0 0.0
      %2470 = vmatpush.xpose.msra.mxu0 0.0
      %2471 = vmatpush.xpose.msra.mxu0 0.0
      %2472 = vmatpush.xpose.msra.mxu0 0.0
      %2473 = vmatpush.xpose.msra.mxu0 0.0
      %2474 = vmatpush.xpose.msra.mxu0 0.0
      %2475 = vmatpush.xpose.msra.mxu0 0.0
      %2476 = vmatpush.xpose.msra.mxu0 0.0
      %2477 = vmatpush.xpose.msra.mxu0 %v2460
      %2478 = vmatmul.f32.gmra.mxu0 %v2458
      %v2479 = vpop.f32.mrf.mxu0
      %v2480 = vadd.f32 0.0, %v2479
      %2481 = vdwg.mxu0
      %v2482 = vsel %vm906, %v2480, -inf
      %2483 = vmax.xlane.f32.xlu0 %v2482
      %v2484 = vpop.xlane.xlu0 %2483
      %v2485 = vsub.f32 %v2480, %v2484
      %v2486 = vmul.f32 %v2485, 1.442695
      %v2487 = vpow.pop %v2486
      %v2488 = vsel %vm906, %v2487, 0.0
      %2489 = vadd.xlane.f32.xlu0 %v2488
      %v2490 = vpop.xlane.xlu0 %2489
      %v2491 = vrcp.pop %v2490
      %v2492 = vmul.f32 %v2490, %v2491
      %v2493 = vsub.f32 1.0, %v2492
      %v2494 = vmul.f32 %v2491, %v2493
      %v2495 = vadd.f32 %v2491, %v2494
      %vm2496 = vweird.f32 %v2490
      %vm2497 = vweird.f32 %v2491
      %vm2498 = vmor %vm2496, %vm2497
      %v2499 = vsel %vm2498, %v2491, %v2495
      %v2500 = vand.u32 2147483647, %v2490
      %vm2501 = vcmp.eq.f32.partialorder %v2500, 8.507059e+37
      %v2502 = vand.u32 %v2490, 2147483648
      %v2503 = vor.u32 1.1754944e-38, %v2502
      %v2504 = vsel %vm2501, %v2503, %v2499
      %v2505 = vmul.f32 %v2487, %v2504
      %2506 = vrot.lane.b32.xlu0 %v2451, 64
      %v2507 = vpop.permute.xlu0 %2506
      %v2510 = vsel %vm906, %v2505, 0
      %2512 = vmatpush.msra.mxu0 0.0
      %2513 = vmatpush.msra.mxu0 0.0
      %2514 = vmatpush.msra.mxu0 0.0
      %2515 = vmatpush.msra.mxu0 0.0
      %2516 = vmatpush.msra.mxu0 0.0
      %2517 = vmatpush.msra.mxu0 0.0
      %2518 = vmatpush.msra.mxu0 0.0
      %2519 = vmatpush.msra.mxu0 0.0
      %2520 = vmatpush.msra.mxu0 0.0
      %2521 = vmatpush.msra.mxu0 0.0
      %2522 = vmatpush.msra.mxu0 0.0
      %2523 = vmatpush.msra.mxu0 0.0
      %2524 = vmatpush.msra.mxu0 0.0
      %2525 = vmatpush.msra.mxu0 0.0
      %2526 = vmatpush.msra.mxu0 0.0
      %2527 = vmatpush.msra.mxu0 %v2507
      %2528 = vmatmul.f32.gmra.mxu0 %v2510
      %v2529 = vpop.f32.mrf.mxu0
      %v2530 = vadd.f32 0.0, %v2529
      %2531 = vdwg.mxu0
      %2532 = vrot.lane.b32.xlu0 %v2453, 120
      %v2533 = vpop.permute.xlu0 %2532
      %2534 = vrot.lane.b32.xlu0 %v2451, 88
      %v2535 = vpop.permute.xlu0 %2534
      %v2536 = vsel %vm906, %v2533, 0
      %v2538 = vsel %vm906, %v2535, 0
      %2540 = vmatpush.xpose.msra.mxu0 0.0
      %2541 = vmatpush.xpose.msra.mxu0 0.0
      %2542 = vmatpush.xpose.msra.mxu0 0.0
      %2543 = vmatpush.xpose.msra.mxu0 0.0
      %2544 = vmatpush.xpose.msra.mxu0 0.0
      %2545 = vmatpush.xpose.msra.mxu0 0.0
      %2546 = vmatpush.xpose.msra.mxu0 0.0
      %2547 = vmatpush.xpose.msra.mxu0 0.0
      %2548 = vmatpush.xpose.msra.mxu0 0.0
      %2549 = vmatpush.xpose.msra.mxu0 0.0
      %2550 = vmatpush.xpose.msra.mxu0 0.0
      %2551 = vmatpush.xpose.msra.mxu0 0.0
      %2552 = vmatpush.xpose.msra.mxu0 0.0
      %2553 = vmatpush.xpose.msra.mxu0 0.0
      %2554 = vmatpush.xpose.msra.mxu0 0.0
      %2555 = vmatpush.xpose.msra.mxu0 %v2538
      %2556 = vmatmul.f32.gmra.mxu0 %v2536
      %v2557 = vpop.f32.mrf.mxu0
      %v2558 = vadd.f32 0.0, %v2557
      %2559 = vdwg.mxu0
      %v2560 = vsel %vm906, %v2558, -inf
      %2561 = vmax.xlane.f32.xlu0 %v2560
      %v2562 = vpop.xlane.xlu0 %2561
      %v2563 = vsub.f32 %v2558, %v2562
      %v2564 = vmul.f32 %v2563, 1.442695
      %v2565 = vpow.pop %v2564
      %v2566 = vsel %vm906, %v2565, 0.0
      %2567 = vadd.xlane.f32.xlu0 %v2566
      %v2568 = vpop.xlane.xlu0 %2567
      %v2569 = vrcp.pop %v2568
      %v2570 = vmul.f32 %v2568, %v2569
      %v2571 = vsub.f32 1.0, %v2570
      %v2572 = vmul.f32 %v2569, %v2571
      %v2573 = vadd.f32 %v2569, %v2572
      %vm2574 = vweird.f32 %v2568
      %vm2575 = vweird.f32 %v2569
      %vm2576 = vmor %vm2574, %vm2575
      %v2577 = vsel %vm2576, %v2569, %v2573
      %v2578 = vand.u32 2147483647, %v2568
      %vm2579 = vcmp.eq.f32.partialorder %v2578, 8.507059e+37
      %v2580 = vand.u32 %v2568, 2147483648
      %v2581 = vor.u32 1.1754944e-38, %v2580
      %v2582 = vsel %vm2579, %v2581, %v2577
      %v2583 = vmul.f32 %v2565, %v2582
      %2584 = vrot.lane.b32.xlu0 %v2451, 56
      %v2585 = vpop.permute.xlu0 %2584
      %v2588 = vsel %vm906, %v2583, 0
      %2590 = vmatpush.msra.mxu0 0.0
      %2591 = vmatpush.msra.mxu0 0.0
      %2592 = vmatpush.msra.mxu0 0.0
      %2593 = vmatpush.msra.mxu0 0.0
      %2594 = vmatpush.msra.mxu0 0.0
      %2595 = vmatpush.msra.mxu0 0.0
      %2596 = vmatpush.msra.mxu0 0.0
      %2597 = vmatpush.msra.mxu0 0.0
      %2598 = vmatpush.msra.mxu0 0.0
      %2599 = vmatpush.msra.mxu0 0.0
      %2600 = vmatpush.msra.mxu0 0.0
      %2601 = vmatpush.msra.mxu0 0.0
      %2602 = vmatpush.msra.mxu0 0.0
      %2603 = vmatpush.msra.mxu0 0.0
      %2604 = vmatpush.msra.mxu0 0.0
      %2605 = vmatpush.msra.mxu0 %v2585
      %2606 = vmatmul.f32.gmra.mxu0 %v2588
      %v2607 = vpop.f32.mrf.mxu0
      %v2608 = vadd.f32 0.0, %v2607
      %2609 = vdwg.mxu0
      %2610 = vrot.lane.b32.xlu0 %v2453, 112
      %v2611 = vpop.permute.xlu0 %2610
      %2612 = vrot.lane.b32.xlu0 %v2451, 80
      %v2613 = vpop.permute.xlu0 %2612
      %v2614 = vsel %vm906, %v2611, 0
      %v2616 = vsel %vm906, %v2613, 0
      %2618 = vmatpush.xpose.msra.mxu0 0.0
      %2619 = vmatpush.xpose.msra.mxu0 0.0
      %2620 = vmatpush.xpose.msra.mxu0 0.0
      %2621 = vmatpush.xpose.msra.mxu0 0.0
      %2622 = vmatpush.xpose.msra.mxu0 0.0
      %2623 = vmatpush.xpose.msra.mxu0 0.0
      %2624 = vmatpush.xpose.msra.mxu0 0.0
      %2625 = vmatpush.xpose.msra.mxu0 0.0
      %2626 = vmatpush.xpose.msra.mxu0 0.0
      %2627 = vmatpush.xpose.msra.mxu0 0.0
      %2628 = vmatpush.xpose.msra.mxu0 0.0
      %2629 = vmatpush.xpose.msra.mxu0 0.0
      %2630 = vmatpush.xpose.msra.mxu0 0.0
      %2631 = vmatpush.xpose.msra.mxu0 0.0
      %2632 = vmatpush.xpose.msra.mxu0 0.0
      %2633 = vmatpush.xpose.msra.mxu0 %v2616
      %2634 = vmatmul.f32.gmra.mxu0 %v2614
      %v2635 = vpop.f32.mrf.mxu0
      %v2636 = vadd.f32 0.0, %v2635
      %2637 = vdwg.mxu0
      %v2638 = vsel %vm906, %v2636, -inf
      %2639 = vmax.xlane.f32.xlu0 %v2638
      %v2640 = vpop.xlane.xlu0 %2639
      %v2641 = vsub.f32 %v2636, %v2640
      %v2642 = vmul.f32 %v2641, 1.442695
      %v2643 = vpow.pop %v2642
      %v2644 = vsel %vm906, %v2643, 0.0
      %2645 = vadd.xlane.f32.xlu0 %v2644
      %v2646 = vpop.xlane.xlu0 %2645
      %v2647 = vrcp.pop %v2646
      %v2648 = vmul.f32 %v2646, %v2647
      %v2649 = vsub.f32 1.0, %v2648
      %v2650 = vmul.f32 %v2647, %v2649
      %v2651 = vadd.f32 %v2647, %v2650
      %vm2652 = vweird.f32 %v2646
      %vm2653 = vweird.f32 %v2647
      %vm2654 = vmor %vm2652, %vm2653
      %v2655 = vsel %vm2654, %v2647, %v2651
      %v2656 = vand.u32 2147483647, %v2646
      %vm2657 = vcmp.eq.f32.partialorder %v2656, 8.507059e+37
      %v2658 = vand.u32 %v2646, 2147483648
      %v2659 = vor.u32 1.1754944e-38, %v2658
      %v2660 = vsel %vm2657, %v2659, %v2655
      %v2661 = vmul.f32 %v2643, %v2660
      %2662 = vrot.lane.b32.xlu0 %v2451, 48
      %v2663 = vpop.permute.xlu0 %2662
      %v2666 = vsel %vm906, %v2661, 0
      %2668 = vmatpush.msra.mxu0 0.0
      %2669 = vmatpush.msra.mxu0 0.0
      %2670 = vmatpush.msra.mxu0 0.0
      %2671 = vmatpush.msra.mxu0 0.0
      %2672 = vmatpush.msra.mxu0 0.0
      %2673 = vmatpush.msra.mxu0 0.0
      %2674 = vmatpush.msra.mxu0 0.0
      %2675 = vmatpush.msra.mxu0 0.0
      %2676 = vmatpush.msra.mxu0 0.0
      %2677 = vmatpush.msra.mxu0 0.0
      %2678 = vmatpush.msra.mxu0 0.0
      %2679 = vmatpush.msra.mxu0 0.0
      %2680 = vmatpush.msra.mxu0 0.0
      %2681 = vmatpush.msra.mxu0 0.0
      %2682 = vmatpush.msra.mxu0 0.0
      %2683 = vmatpush.msra.mxu0 %v2663
      %2684 = vmatmul.f32.gmra.mxu0 %v2666
      %v2685 = vpop.f32.mrf.mxu0
      %v2686 = vadd.f32 0.0, %v2685
      %2687 = vdwg.mxu0
      %2688 = vrot.lane.b32.xlu0 %v2453, 104
      %v2689 = vpop.permute.xlu0 %2688
      %2690 = vrot.lane.b32.xlu0 %v2451, 72
      %v2691 = vpop.permute.xlu0 %2690
      %v2692 = vsel %vm906, %v2689, 0
      %v2694 = vsel %vm906, %v2691, 0
      %2696 = vmatpush.xpose.msra.mxu0 0.0
      %2697 = vmatpush.xpose.msra.mxu0 0.0
      %2698 = vmatpush.xpose.msra.mxu0 0.0
      %2699 = vmatpush.xpose.msra.mxu0 0.0
      %2700 = vmatpush.xpose.msra.mxu0 0.0
      %2701 = vmatpush.xpose.msra.mxu0 0.0
      %2702 = vmatpush.xpose.msra.mxu0 0.0
      %2703 = vmatpush.xpose.msra.mxu0 0.0
      %2704 = vmatpush.xpose.msra.mxu0 0.0
      %2705 = vmatpush.xpose.msra.mxu0 0.0
      %2706 = vmatpush.xpose.msra.mxu0 0.0
      %2707 = vmatpush.xpose.msra.mxu0 0.0
      %2708 = vmatpush.xpose.msra.mxu0 0.0
      %2709 = vmatpush.xpose.msra.mxu0 0.0
      %2710 = vmatpush.xpose.msra.mxu0 0.0
      %2711 = vmatpush.xpose.msra.mxu0 %v2694
      %2712 = vmatmul.f32.gmra.mxu0 %v2692
      %v2713 = vpop.f32.mrf.mxu0
      %v2714 = vadd.f32 0.0, %v2713
      %2715 = vdwg.mxu0
      %v2716 = vsel %vm906, %v2714, -inf
      %2717 = vmax.xlane.f32.xlu0 %v2716
      %v2718 = vpop.xlane.xlu0 %2717
      %v2719 = vsub.f32 %v2714, %v2718
      %v2720 = vmul.f32 %v2719, 1.442695
      %v2721 = vpow.pop %v2720
      %v2722 = vsel %vm906, %v2721, 0.0
      %2723 = vadd.xlane.f32.xlu0 %v2722
      %v2724 = vpop.xlane.xlu0 %2723
      %v2725 = vrcp.pop %v2724
      %v2726 = vmul.f32 %v2724, %v2725
      %v2727 = vsub.f32 1.0, %v2726
      %v2728 = vmul.f32 %v2725, %v2727
      %v2729 = vadd.f32 %v2725, %v2728
      %vm2730 = vweird.f32 %v2724
      %vm2731 = vweird.f32 %v2725
      %vm2732 = vmor %vm2730, %vm2731
      %v2733 = vsel %vm2732, %v2725, %v2729
      %v2734 = vand.u32 2147483647, %v2724
      %vm2735 = vcmp.eq.f32.partialorder %v2734, 8.507059e+37
      %v2736 = vand.u32 %v2724, 2147483648
      %v2737 = vor.u32 1.1754944e-38, %v2736
      %v2738 = vsel %vm2735, %v2737, %v2733
      %v2739 = vmul.f32 %v2721, %v2738
      %2740 = vrot.lane.b32.xlu0 %v2451, 40
      %v2741 = vpop.permute.xlu0 %2740
      %v2744 = vsel %vm906, %v2739, 0
      %2746 = vmatpush.msra.mxu0 0.0
      %2747 = vmatpush.msra.mxu0 0.0
      %2748 = vmatpush.msra.mxu0 0.0
      %2749 = vmatpush.msra.mxu0 0.0
      %2750 = vmatpush.msra.mxu0 0.0
      %2751 = vmatpush.msra.mxu0 0.0
      %2752 = vmatpush.msra.mxu0 0.0
      %2753 = vmatpush.msra.mxu0 0.0
      %2754 = vmatpush.msra.mxu0 0.0
      %2755 = vmatpush.msra.mxu0 0.0
      %2756 = vmatpush.msra.mxu0 0.0
      %2757 = vmatpush.msra.mxu0 0.0
      %2758 = vmatpush.msra.mxu0 0.0
      %2759 = vmatpush.msra.mxu0 0.0
      %2760 = vmatpush.msra.mxu0 0.0
      %2761 = vmatpush.msra.mxu0 %v2741
      %2762 = vmatmul.f32.gmra.mxu0 %v2744
      %v2763 = vpop.f32.mrf.mxu0
      %v2764 = vadd.f32 0.0, %v2763
      %2765 = vdwg.mxu0
      %2767 = vrot.lane.b32.xlu0 %v2608, 8
      %v2768 = vpop.permute.xlu0 %2767
      %2771 = vrot.lane.b32.xlu0 %v2686, 16
      %v2772 = vpop.permute.xlu0 %2771
      %2775 = vrot.lane.b32.xlu0 %v2764, 24
      %v2776 = vpop.permute.xlu0 %2775
      %v2778 = vsel %vm906, %v2530, %v2768
      %v2779 = vsel %vm1288, %v2778, %v2772
      %v2780 = vsel %vm1290, %v2779, %v2776
      %v2781 = vld [vmem:[%s35] sm:$0xff]
      %v2782 = vld [vmem:[%s35 + $0x8] sm:$0xff]
      %v2783 = vld [vmem:[%s35 + $0x10] sm:$0xff]
      %v2784 = vld [vmem:[%s35 + $0x18] sm:$0xff]
      %v2785 = vld [vmem:[%s37] sm:$0x1]
      %v2787 = vperm.slane %v2785, 0
      %v2790 = vsel %vm938, %v2780, 0
      %2792 = vmatpush.msra.mxu0 0.0
      %2793 = vmatpush.msra.mxu0 0.0
      %2794 = vmatpush.msra.mxu0 0.0
      %2795 = vmatpush.msra.mxu0 0.0
      %2796 = vmatpush.msra.mxu0 0.0
      %2797 = vmatpush.msra.mxu0 0.0
      %2798 = vmatpush.msra.mxu0 0.0
      %2799 = vmatpush.msra.mxu0 0.0
      %2800 = vmatpush.msra.mxu0 0.0
      %2801 = vmatpush.msra.mxu0 0.0
      %2802 = vmatpush.msra.mxu0 0.0
      %2803 = vmatpush.msra.mxu0 0.0
      %2804 = vmatpush.msra.mxu0 %v2784
      %2805 = vmatpush.msra.mxu0 %v2783
      %2806 = vmatpush.msra.mxu0 %v2782
      %2807 = vmatpush.msra.mxu0 %v2781
      %2808 = vmatmul.f32.gmra.mxu0 %v2790
      %v2809 = vpop.f32.mrf.mxu0
      %v2810 = vadd.f32 %v2787, %v2809
      %2811 = vdwg.mxu0
      %v2812 = vadd.f32 %v2421, %v2810
      %v2813 = vld [vmem:[%s39] sm:$0x1]
      %v2814 = vld [vmem:[%s41] sm:$0x1]
      %v2815 = vsel %vm938, %v2812, 0.0
      %2816 = vadd.xlane.f32.xlu0 %v2815
      %v2817 = vpop.xlane.xlu0 %2816
      %v2818 = vmul.f32 %v2817, %v1335
      %v2819 = vsub.f32 %v2812, %v2818
      %v2820 = vmul.f32 %v2819, %v2819
      %v2821 = vsel %vm938, %v2820, 0.0
      %2822 = vadd.xlane.f32.xlu0 %v2821
      %v2823 = vpop.xlane.xlu0 %2822
      %v2824 = vmul.f32 %v2823, %v1335
      %v2825 = vadd.f32 %v2824, 1e-05
      %v2826 = vrsqrt.pop %v2825
      %v2827 = vmul.f32 %v2826, %v2825
      %v2828 = vmul.f32 %v2827, %v2826
      %v2829 = vmul.f32 0.5, %v2828
      %v2830 = vsub.f32 1.5, %v2829
      %v2831 = vmul.f32 %v2826, %v2830
      %vm2832 = vweird.f32 %v2825
      %vm2833 = vweird.f32 %v2826
      %vm2834 = vmor %vm2832, %vm2833
      %v2835 = vsel %vm2834, %v2826, %v2831
      %v2836 = vmul.f32 %v2819, %v2835
      %v2838 = vperm.slane %v2813, 0
      %v2840 = vmul.f32 %v2836, %v2838
      %v2842 = vperm.slane %v2814, 0
      %v2844 = vadd.f32 %v2840, %v2842
      %v2845 = vld [vmem:[%s43] sm:$0xff]
      %v2846 = vld [vmem:[%s43 + $0x8] sm:$0xff]
      %v2847 = vld [vmem:[%s43 + $0x10] sm:$0xff]
      %v2848 = vld [vmem:[%s43 + $0x18] sm:$0xff]
      %v2849 = vld [vmem:[%s43 + $0x80] sm:$0xff]
      %v2850 = vld [vmem:[%s43 + $0x88] sm:$0xff]
      %v2851 = vld [vmem:[%s43 + $0x90] sm:$0xff]
      %v2852 = vld [vmem:[%s43 + $0x98] sm:$0xff]
      %v2853 = vld [vmem:[%s43 + $0x100] sm:$0xff]
      %v2854 = vld [vmem:[%s43 + $0x108] sm:$0xff]
      %v2855 = vld [vmem:[%s43 + $0x110] sm:$0xff]
      %v2856 = vld [vmem:[%s43 + $0x118] sm:$0xff]
      %v2857 = vld [vmem:[%s43 + $0x180] sm:$0xff]
      %v2858 = vld [vmem:[%s43 + $0x188] sm:$0xff]
      %v2859 = vld [vmem:[%s43 + $0x190] sm:$0xff]
      %v2860 = vld [vmem:[%s43 + $0x198] sm:$0xff]
      %v2861 = vld [vmem:[%s45] sm:$0xf]
      %v2862 = vld [vmem:[%s47] sm:$0xff]
      %v2863 = vld [vmem:[%s47 + $0x8] sm:$0xff]
      %v2864 = vld [vmem:[%s47 + $0x10] sm:$0xff]
      %v2865 = vld [vmem:[%s47 + $0x18] sm:$0xff]
      %v2866 = vld [vmem:[%s47 + $0x20] sm:$0xff]
      %v2867 = vld [vmem:[%s47 + $0x28] sm:$0xff]
      %v2868 = vld [vmem:[%s47 + $0x30] sm:$0xff]
      %v2869 = vld [vmem:[%s47 + $0x38] sm:$0xff]
      %v2870 = vld [vmem:[%s47 + $0x40] sm:$0xff]
      %v2871 = vld [vmem:[%s47 + $0x48] sm:$0xff]
      %v2872 = vld [vmem:[%s47 + $0x50] sm:$0xff]
      %v2873 = vld [vmem:[%s47 + $0x58] sm:$0xff]
      %v2874 = vld [vmem:[%s47 + $0x60] sm:$0xff]
      %v2875 = vld [vmem:[%s47 + $0x68] sm:$0xff]
      %v2876 = vld [vmem:[%s47 + $0x70] sm:$0xff]
      %v2877 = vld [vmem:[%s47 + $0x78] sm:$0xff]
      %v2878 = vld [vmem:[%s47 + $0x80] sm:$0xff]
      %v2879 = vld [vmem:[%s47 + $0x88] sm:$0xff]
      %v2880 = vld [vmem:[%s47 + $0x90] sm:$0xff]
      %v2881 = vld [vmem:[%s47 + $0x98] sm:$0xff]
      %v2882 = vld [vmem:[%s47 + $0xa0] sm:$0xff]
      %v2883 = vld [vmem:[%s47 + $0xa8] sm:$0xff]
      %v2884 = vld [vmem:[%s47 + $0xb0] sm:$0xff]
      %v2885 = vld [vmem:[%s47 + $0xb8] sm:$0xff]
      %v2886 = vld [vmem:[%s47 + $0xc0] sm:$0xff]
      %v2887 = vld [vmem:[%s47 + $0xc8] sm:$0xff]
      %v2888 = vld [vmem:[%s47 + $0xd0] sm:$0xff]
      %v2889 = vld [vmem:[%s47 + $0xd8] sm:$0xff]
      %v2890 = vld [vmem:[%s47 + $0xe0] sm:$0xff]
      %v2891 = vld [vmem:[%s47 + $0xe8] sm:$0xff]
      %v2892 = vld [vmem:[%s47 + $0xf0] sm:$0xff]
      %v2893 = vld [vmem:[%s47 + $0xf8] sm:$0xff]
      %v2894 = vld [vmem:[%s47 + $0x100] sm:$0xff]
      %v2895 = vld [vmem:[%s47 + $0x108] sm:$0xff]
      %v2896 = vld [vmem:[%s47 + $0x110] sm:$0xff]
      %v2897 = vld [vmem:[%s47 + $0x118] sm:$0xff]
      %v2898 = vld [vmem:[%s47 + $0x120] sm:$0xff]
      %v2899 = vld [vmem:[%s47 + $0x128] sm:$0xff]
      %v2900 = vld [vmem:[%s47 + $0x130] sm:$0xff]
      %v2901 = vld [vmem:[%s47 + $0x138] sm:$0xff]
      %v2902 = vld [vmem:[%s47 + $0x140] sm:$0xff]
      %v2903 = vld [vmem:[%s47 + $0x148] sm:$0xff]
      %v2904 = vld [vmem:[%s47 + $0x150] sm:$0xff]
      %v2905 = vld [vmem:[%s47 + $0x158] sm:$0xff]
      %v2906 = vld [vmem:[%s47 + $0x160] sm:$0xff]
      %v2907 = vld [vmem:[%s47 + $0x168] sm:$0xff]
      %v2908 = vld [vmem:[%s47 + $0x170] sm:$0xff]
      %v2909 = vld [vmem:[%s47 + $0x178] sm:$0xff]
      %v2910 = vld [vmem:[%s47 + $0x180] sm:$0xff]
      %v2911 = vld [vmem:[%s47 + $0x188] sm:$0xff]
      %v2912 = vld [vmem:[%s47 + $0x190] sm:$0xff]
      %v2913 = vld [vmem:[%s47 + $0x198] sm:$0xff]
      %v2914 = vld [vmem:[%s47 + $0x1a0] sm:$0xff]
      %v2915 = vld [vmem:[%s47 + $0x1a8] sm:$0xff]
      %v2916 = vld [vmem:[%s47 + $0x1b0] sm:$0xff]
      %v2917 = vld [vmem:[%s47 + $0x1b8] sm:$0xff]
      %v2918 = vld [vmem:[%s47 + $0x1c0] sm:$0xff]
      %v2919 = vld [vmem:[%s47 + $0x1c8] sm:$0xff]
      %v2920 = vld [vmem:[%s47 + $0x1d0] sm:$0xff]
      %v2921 = vld [vmem:[%s47 + $0x1d8] sm:$0xff]
      %v2922 = vld [vmem:[%s47 + $0x1e0] sm:$0xff]
      %v2923 = vld [vmem:[%s47 + $0x1e8] sm:$0xff]
      %v2924 = vld [vmem:[%s47 + $0x1f0] sm:$0xff]
      %v2925 = vld [vmem:[%s47 + $0x1f8] sm:$0xff]
      %v2927 = vperm.slane %v2861, 0
      %v2928 = vperm.slane %v2861, 1
      %v2929 = vperm.slane %v2861, 2
      %v2930 = vperm.slane %v2861, 3
      %v2936 = vsel %vm938, %v2844, 0
      %2938 = vmatpush.msra.mxu0 0.0
      %2939 = vmatpush.msra.mxu0 0.0
      %2940 = vmatpush.msra.mxu0 0.0
      %2941 = vmatpush.msra.mxu0 0.0
      %2942 = vmatpush.msra.mxu0 0.0
      %2943 = vmatpush.msra.mxu0 0.0
      %2944 = vmatpush.msra.mxu0 0.0
      %2945 = vmatpush.msra.mxu0 0.0
      %2946 = vmatpush.msra.mxu0 0.0
      %2947 = vmatpush.msra.mxu0 0.0
      %2948 = vmatpush.msra.mxu0 0.0
      %2949 = vmatpush.msra.mxu0 0.0
      %2950 = vmatpush.msra.mxu0 %v2857
      %2951 = vmatpush.msra.mxu0 %v2853
      %2952 = vmatpush.msra.mxu0 %v2849
      %2953 = vmatpush.msra.mxu0 %v2845
      %2954 = vmatmul.f32.gmra.mxu0 %v2936
      %v2955 = vpop.f32.mrf.mxu0
      %v2956 = vadd.f32 %v2927, %v2955
      %2957 = vdwg.mxu0
      %2958 = vmatpush.msra.mxu0 0.0
      %2959 = vmatpush.msra.mxu0 0.0
      %2960 = vmatpush.msra.mxu0 0.0
      %2961 = vmatpush.msra.mxu0 0.0
      %2962 = vmatpush.msra.mxu0 0.0
      %2963 = vmatpush.msra.mxu0 0.0
      %2964 = vmatpush.msra.mxu0 0.0
      %2965 = vmatpush.msra.mxu0 0.0
      %2966 = vmatpush.msra.mxu0 0.0
      %2967 = vmatpush.msra.mxu0 0.0
      %2968 = vmatpush.msra.mxu0 0.0
      %2969 = vmatpush.msra.mxu0 0.0
      %2970 = vmatpush.msra.mxu0 %v2858
      %2971 = vmatpush.msra.mxu0 %v2854
      %2972 = vmatpush.msra.mxu0 %v2850
      %2973 = vmatpush.msra.mxu0 %v2846
      %2974 = vmatmul.f32.gmra.mxu0 %v2936
      %v2975 = vpop.f32.mrf.mxu0
      %v2976 = vadd.f32 %v2928, %v2975
      %2977 = vdwg.mxu0
      %2978 = vmatpush.msra.mxu0 0.0
      %2979 = vmatpush.msra.mxu0 0.0
      %2980 = vmatpush.msra.mxu0 0.0
      %2981 = vmatpush.msra.mxu0 0.0
      %2982 = vmatpush.msra.mxu0 0.0
      %2983 = vmatpush.msra.mxu0 0.0
      %2984 = vmatpush.msra.mxu0 0.0
      %2985 = vmatpush.msra.mxu0 0.0
      %2986 = vmatpush.msra.mxu0 0.0
      %2987 = vmatpush.msra.mxu0 0.0
      %2988 = vmatpush.msra.mxu0 0.0
      %2989 = vmatpush.msra.mxu0 0.0
      %2990 = vmatpush.msra.mxu0 %v2859
      %2991 = vmatpush.msra.mxu0 %v2855
      %2992 = vmatpush.msra.mxu0 %v2851
      %2993 = vmatpush.msra.mxu0 %v2847
      %2994 = vmatmul.f32.gmra.mxu0 %v2936
      %v2995 = vpop.f32.mrf.mxu0
      %v2996 = vadd.f32 %v2929, %v2995
      %2997 = vdwg.mxu0
      %2998 = vmatpush.msra.mxu0 0.0
      %2999 = vmatpush.msra.mxu0 0.0
      %3000 = vmatpush.msra.mxu0 0.0
      %3001 = vmatpush.msra.mxu0 0.0
      %3002 = vmatpush.msra.mxu0 0.0
      %3003 = vmatpush.msra.mxu0 0.0
      %3004 = vmatpush.msra.mxu0 0.0
      %3005 = vmatpush.msra.mxu0 0.0
      %3006 = vmatpush.msra.mxu0 0.0
      %3007 = vmatpush.msra.mxu0 0.0
      %3008 = vmatpush.msra.mxu0 0.0
      %3009 = vmatpush.msra.mxu0 0.0
      %3010 = vmatpush.msra.mxu0 %v2860
      %3011 = vmatpush.msra.mxu0 %v2856
      %3012 = vmatpush.msra.mxu0 %v2852
      %3013 = vmatpush.msra.mxu0 %v2848
      %3014 = vmatmul.f32.gmra.mxu0 %v2936
      %v3015 = vpop.f32.mrf.mxu0
      %v3016 = vadd.f32 %v2930, %v3015
      %3017 = vdwg.mxu0
      %v3018 = vmax.f32 %v2956, 0.0
      %v3019 = vmax.f32 %v2976, 0.0
      %v3020 = vmax.f32 %v2996, 0.0
      %v3021 = vmax.f32 %v3016, 0.0
      %v3022 = vld [vmem:[%s43 + $0x20] sm:$0xff]
      %v3023 = vld [vmem:[%s43 + $0x28] sm:$0xff]
      %v3024 = vld [vmem:[%s43 + $0x30] sm:$0xff]
      %v3025 = vld [vmem:[%s43 + $0x38] sm:$0xff]
      %v3026 = vld [vmem:[%s43 + $0xa0] sm:$0xff]
      %v3027 = vld [vmem:[%s43 + $0xa8] sm:$0xff]
      %v3028 = vld [vmem:[%s43 + $0xb0] sm:$0xff]
      %v3029 = vld [vmem:[%s43 + $0xb8] sm:$0xff]
      %v3030 = vld [vmem:[%s43 + $0x120] sm:$0xff]
      %v3031 = vld [vmem:[%s43 + $0x128] sm:$0xff]
      %v3032 = vld [vmem:[%s43 + $0x130] sm:$0xff]
      %v3033 = vld [vmem:[%s43 + $0x138] sm:$0xff]
      %v3034 = vld [vmem:[%s43 + $0x1a0] sm:$0xff]
      %v3035 = vld [vmem:[%s43 + $0x1a8] sm:$0xff]
      %v3036 = vld [vmem:[%s43 + $0x1b0] sm:$0xff]
      %v3037 = vld [vmem:[%s43 + $0x1b8] sm:$0xff]
      %v3038 = vld [vmem:[%s45 + $0x4] sm:$0xf]
      %v3039 = vld [vmem:[%s47 + $0x200] sm:$0xff]
      %v3040 = vld [vmem:[%s47 + $0x208] sm:$0xff]
      %v3041 = vld [vmem:[%s47 + $0x210] sm:$0xff]
      %v3042 = vld [vmem:[%s47 + $0x218] sm:$0xff]
      %v3043 = vld [vmem:[%s47 + $0x220] sm:$0xff]
      %v3044 = vld [vmem:[%s47 + $0x228] sm:$0xff]
      %v3045 = vld [vmem:[%s47 + $0x230] sm:$0xff]
      %v3046 = vld [vmem:[%s47 + $0x238] sm:$0xff]
      %v3047 = vld [vmem:[%s47 + $0x240] sm:$0xff]
      %v3048 = vld [vmem:[%s47 + $0x248] sm:$0xff]
      %v3049 = vld [vmem:[%s47 + $0x250] sm:$0xff]
      %v3050 = vld [vmem:[%s47 + $0x258] sm:$0xff]
      %v3051 = vld [vmem:[%s47 + $0x260] sm:$0xff]
      %v3052 = vld [vmem:[%s47 + $0x268] sm:$0xff]
      %v3053 = vld [vmem:[%s47 + $0x270] sm:$0xff]
      %v3054 = vld [vmem:[%s47 + $0x278] sm:$0xff]
      %v3055 = vld [vmem:[%s47 + $0x280] sm:$0xff]
      %v3056 = vld [vmem:[%s47 + $0x288] sm:$0xff]
      %v3057 = vld [vmem:[%s47 + $0x290] sm:$0xff]
      %v3058 = vld [vmem:[%s47 + $0x298] sm:$0xff]
      %v3059 = vld [vmem:[%s47 + $0x2a0] sm:$0xff]
      %v3060 = vld [vmem:[%s47 + $0x2a8] sm:$0xff]
      %v3061 = vld [vmem:[%s47 + $0x2b0] sm:$0xff]
      %v3062 = vld [vmem:[%s47 + $0x2b8] sm:$0xff]
      %v3063 = vld [vmem:[%s47 + $0x2c0] sm:$0xff]
      %v3064 = vld [vmem:[%s47 + $0x2c8] sm:$0xff]
      %v3065 = vld [vmem:[%s47 + $0x2d0] sm:$0xff]
      %v3066 = vld [vmem:[%s47 + $0x2d8] sm:$0xff]
      %v3067 = vld [vmem:[%s47 + $0x2e0] sm:$0xff]
      %v3068 = vld [vmem:[%s47 + $0x2e8] sm:$0xff]
      %v3069 = vld [vmem:[%s47 + $0x2f0] sm:$0xff]
      %v3070 = vld [vmem:[%s47 + $0x2f8] sm:$0xff]
      %v3071 = vld [vmem:[%s47 + $0x300] sm:$0xff]
      %v3072 = vld [vmem:[%s47 + $0x308] sm:$0xff]
      %v3073 = vld [vmem:[%s47 + $0x310] sm:$0xff]
      %v3074 = vld [vmem:[%s47 + $0x318] sm:$0xff]
      %v3075 = vld [vmem:[%s47 + $0x320] sm:$0xff]
      %v3076 = vld [vmem:[%s47 + $0x328] sm:$0xff]
      %v3077 = vld [vmem:[%s47 + $0x330] sm:$0xff]
      %v3078 = vld [vmem:[%s47 + $0x338] sm:$0xff]
      %v3079 = vld [vmem:[%s47 + $0x340] sm:$0xff]
      %v3080 = vld [vmem:[%s47 + $0x348] sm:$0xff]
      %v3081 = vld [vmem:[%s47 + $0x350] sm:$0xff]
      %v3082 = vld [vmem:[%s47 + $0x358] sm:$0xff]
      %v3083 = vld [vmem:[%s47 + $0x360] sm:$0xff]
      %v3084 = vld [vmem:[%s47 + $0x368] sm:$0xff]
      %v3085 = vld [vmem:[%s47 + $0x370] sm:$0xff]
      %v3086 = vld [vmem:[%s47 + $0x378] sm:$0xff]
      %v3087 = vld [vmem:[%s47 + $0x380] sm:$0xff]
      %v3088 = vld [vmem:[%s47 + $0x388] sm:$0xff]
      %v3089 = vld [vmem:[%s47 + $0x390] sm:$0xff]
      %v3090 = vld [vmem:[%s47 + $0x398] sm:$0xff]
      %v3091 = vld [vmem:[%s47 + $0x3a0] sm:$0xff]
      %v3092 = vld [vmem:[%s47 + $0x3a8] sm:$0xff]
      %v3093 = vld [vmem:[%s47 + $0x3b0] sm:$0xff]
      %v3094 = vld [vmem:[%s47 + $0x3b8] sm:$0xff]
      %v3095 = vld [vmem:[%s47 + $0x3c0] sm:$0xff]
      %v3096 = vld [vmem:[%s47 + $0x3c8] sm:$0xff]
      %v3097 = vld [vmem:[%s47 + $0x3d0] sm:$0xff]
      %v3098 = vld [vmem:[%s47 + $0x3d8] sm:$0xff]
      %v3099 = vld [vmem:[%s47 + $0x3e0] sm:$0xff]
      %v3100 = vld [vmem:[%s47 + $0x3e8] sm:$0xff]
      %v3101 = vld [vmem:[%s47 + $0x3f0] sm:$0xff]
      %v3102 = vld [vmem:[%s47 + $0x3f8] sm:$0xff]
      %v3104 = vperm.slane %v3038, 0
      %v3105 = vperm.slane %v3038, 1
      %v3106 = vperm.slane %v3038, 2
      %v3107 = vperm.slane %v3038, 3
      %3112 = vmatpush.msra.mxu0 0.0
      %3113 = vmatpush.msra.mxu0 0.0
      %3114 = vmatpush.msra.mxu0 0.0
      %3115 = vmatpush.msra.mxu0 0.0
      %3116 = vmatpush.msra.mxu0 0.0
      %3117 = vmatpush.msra.mxu0 0.0
      %3118 = vmatpush.msra.mxu0 0.0
      %3119 = vmatpush.msra.mxu0 0.0
      %3120 = vmatpush.msra.mxu0 0.0
      %3121 = vmatpush.msra.mxu0 0.0
      %3122 = vmatpush.msra.mxu0 0.0
      %3123 = vmatpush.msra.mxu0 0.0
      %3124 = vmatpush.msra.mxu0 %v3034
      %3125 = vmatpush.msra.mxu0 %v3030
      %3126 = vmatpush.msra.mxu0 %v3026
      %3127 = vmatpush.msra.mxu0 %v3022
      %3128 = vmatmul.f32.gmra.mxu0 %v2936
      %v3129 = vpop.f32.mrf.mxu0
      %v3130 = vadd.f32 %v3104, %v3129
      %3131 = vdwg.mxu0
      %3132 = vmatpush.msra.mxu0 0.0
      %3133 = vmatpush.msra.mxu0 0.0
      %3134 = vmatpush.msra.mxu0 0.0
      %3135 = vmatpush.msra.mxu0 0.0
      %3136 = vmatpush.msra.mxu0 0.0
      %3137 = vmatpush.msra.mxu0 0.0
      %3138 = vmatpush.msra.mxu0 0.0
      %3139 = vmatpush.msra.mxu0 0.0
      %3140 = vmatpush.msra.mxu0 0.0
      %3141 = vmatpush.msra.mxu0 0.0
      %3142 = vmatpush.msra.mxu0 0.0
      %3143 = vmatpush.msra.mxu0 0.0
      %3144 = vmatpush.msra.mxu0 %v3035
      %3145 = vmatpush.msra.mxu0 %v3031
      %3146 = vmatpush.msra.mxu0 %v3027
      %3147 = vmatpush.msra.mxu0 %v3023
      %3148 = vmatmul.f32.gmra.mxu0 %v2936
      %v3149 = vpop.f32.mrf.mxu0
      %v3150 = vadd.f32 %v3105, %v3149
      %3151 = vdwg.mxu0
      %3152 = vmatpush.msra.mxu0 0.0
      %3153 = vmatpush.msra.mxu0 0.0
      %3154 = vmatpush.msra.mxu0 0.0
      %3155 = vmatpush.msra.mxu0 0.0
      %3156 = vmatpush.msra.mxu0 0.0
      %3157 = vmatpush.msra.mxu0 0.0
      %3158 = vmatpush.msra.mxu0 0.0
      %3159 = vmatpush.msra.mxu0 0.0
      %3160 = vmatpush.msra.mxu0 0.0
      %3161 = vmatpush.msra.mxu0 0.0
      %3162 = vmatpush.msra.mxu0 0.0
      %3163 = vmatpush.msra.mxu0 0.0
      %3164 = vmatpush.msra.mxu0 %v3036
      %3165 = vmatpush.msra.mxu0 %v3032
      %3166 = vmatpush.msra.mxu0 %v3028
      %3167 = vmatpush.msra.mxu0 %v3024
      %3168 = vmatmul.f32.gmra.mxu0 %v2936
      %v3169 = vpop.f32.mrf.mxu0
      %v3170 = vadd.f32 %v3106, %v3169
      %3171 = vdwg.mxu0
      %3172 = vmatpush.msra.mxu0 0.0
      %3173 = vmatpush.msra.mxu0 0.0
      %3174 = vmatpush.msra.mxu0 0.0
      %3175 = vmatpush.msra.mxu0 0.0
      %3176 = vmatpush.msra.mxu0 0.0
      %3177 = vmatpush.msra.mxu0 0.0
      %3178 = vmatpush.msra.mxu0 0.0
      %3179 = vmatpush.msra.mxu0 0.0
      %3180 = vmatpush.msra.mxu0 0.0
      %3181 = vmatpush.msra.mxu0 0.0
      %3182 = vmatpush.msra.mxu0 0.0
      %3183 = vmatpush.msra.mxu0 0.0
      %3184 = vmatpush.msra.mxu0 %v3037
      %3185 = vmatpush.msra.mxu0 %v3033
      %3186 = vmatpush.msra.mxu0 %v3029
      %3187 = vmatpush.msra.mxu0 %v3025
      %3188 = vmatmul.f32.gmra.mxu0 %v2936
      %v3189 = vpop.f32.mrf.mxu0
      %v3190 = vadd.f32 %v3107, %v3189
      %3191 = vdwg.mxu0
      %v3192 = vmax.f32 %v3130, 0.0
      %v3193 = vmax.f32 %v3150, 0.0
      %v3194 = vmax.f32 %v3170, 0.0
      %v3195 = vmax.f32 %v3190, 0.0
      %3196 = vmatpush.msra.mxu0 %v3054
      %3197 = vmatpush.msra.mxu0 %v3053
      %3198 = vmatpush.msra.mxu0 %v3052
      %3199 = vmatpush.msra.mxu0 %v3051
      %3200 = vmatpush.msra.mxu0 %v3050
      %3201 = vmatpush.msra.mxu0 %v3049
      %3202 = vmatpush.msra.mxu0 %v3048
      %3203 = vmatpush.msra.mxu0 %v3047
      %3204 = vmatpush.msra.mxu0 %v3046
      %3205 = vmatpush.msra.mxu0 %v3045
      %3206 = vmatpush.msra.mxu0 %v3044
      %3207 = vmatpush.msra.mxu0 %v3043
      %3208 = vmatpush.msra.mxu0 %v3042
      %3209 = vmatpush.msra.mxu0 %v3041
      %3210 = vmatpush.msra.mxu0 %v3040
      %3211 = vmatpush.msra.mxu0 %v3039
      %3212 = vmatmul.f32.gmra.mxu0 %v3192
      %v3213 = vpop.f32.mrf.mxu0
      %v3214 = vadd.f32 0.0, %v3213
      %3215 = vdwg.mxu0
      %3216 = vmatpush.msra.mxu0 %v3070
      %3217 = vmatpush.msra.mxu0 %v3069
      %3218 = vmatpush.msra.mxu0 %v3068
      %3219 = vmatpush.msra.mxu0 %v3067
      %3220 = vmatpush.msra.mxu0 %v3066
      %3221 = vmatpush.msra.mxu0 %v3065
      %3222 = vmatpush.msra.mxu0 %v3064
      %3223 = vmatpush.msra.mxu0 %v3063
      %3224 = vmatpush.msra.mxu0 %v3062
      %3225 = vmatpush.msra.mxu0 %v3061
      %3226 = vmatpush.msra.mxu0 %v3060
      %3227 = vmatpush.msra.mxu0 %v3059
      %3228 = vmatpush.msra.mxu0 %v3058
      %3229 = vmatpush.msra.mxu0 %v3057
      %3230 = vmatpush.msra.mxu0 %v3056
      %3231 = vmatpush.msra.mxu0 %v3055
      %3232 = vmatmul.f32.gmra.mxu0 %v3193
      %v3233 = vpop.f32.mrf.mxu0
      %v3234 = vadd.f32 %v3214, %v3233
      %3235 = vdwg.mxu0
      %3236 = vmatpush.msra.mxu0 %v3086
      %3237 = vmatpush.msra.mxu0 %v3085
      %3238 = vmatpush.msra.mxu0 %v3084
      %3239 = vmatpush.msra.mxu0 %v3083
      %3240 = vmatpush.msra.mxu0 %v3082
      %3241 = vmatpush.msra.mxu0 %v3081
      %3242 = vmatpush.msra.mxu0 %v3080
      %3243 = vmatpush.msra.mxu0 %v3079
      %3244 = vmatpush.msra.mxu0 %v3078
      %3245 = vmatpush.msra.mxu0 %v3077
      %3246 = vmatpush.msra.mxu0 %v3076
      %3247 = vmatpush.msra.mxu0 %v3075
      %3248 = vmatpush.msra.mxu0 %v3074
      %3249 = vmatpush.msra.mxu0 %v3073
      %3250 = vmatpush.msra.mxu0 %v3072
      %3251 = vmatpush.msra.mxu0 %v3071
      %3252 = vmatmul.f32.gmra.mxu0 %v3194
      %v3253 = vpop.f32.mrf.mxu0
      %v3254 = vadd.f32 %v3234, %v3253
      %3255 = vdwg.mxu0
      %3256 = vmatpush.msra.mxu0 %v3102
      %3257 = vmatpush.msra.mxu0 %v3101
      %3258 = vmatpush.msra.mxu0 %v3100
      %3259 = vmatpush.msra.mxu0 %v3099
      %3260 = vmatpush.msra.mxu0 %v3098
      %3261 = vmatpush.msra.mxu0 %v3097
      %3262 = vmatpush.msra.mxu0 %v3096
      %3263 = vmatpush.msra.mxu0 %v3095
      %3264 = vmatpush.msra.mxu0 %v3094
      %3265 = vmatpush.msra.mxu0 %v3093
      %3266 = vmatpush.msra.mxu0 %v3092
      %3267 = vmatpush.msra.mxu0 %v3091
      %3268 = vmatpush.msra.mxu0 %v3090
      %3269 = vmatpush.msra.mxu0 %v3089
      %3270 = vmatpush.msra.mxu0 %v3088
      %3271 = vmatpush.msra.mxu0 %v3087
      %3272 = vmatmul.f32.gmra.mxu0 %v3195
      %v3273 = vpop.f32.mrf.mxu0
      %v3274 = vadd.f32 %v3254, %v3273
      %3275 = vdwg.mxu0
      %3276 = vmatpush.msra.mxu0 %v2877
      %3277 = vmatpush.msra.mxu0 %v2876
      %3278 = vmatpush.msra.mxu0 %v2875
      %3279 = vmatpush.msra.mxu0 %v2874
      %3280 = vmatpush.msra.mxu0 %v2873
      %3281 = vmatpush.msra.mxu0 %v2872
      %3282 = vmatpush.msra.mxu0 %v2871
      %3283 = vmatpush.msra.mxu0 %v2870
      %3284 = vmatpush.msra.mxu0 %v2869
      %3285 = vmatpush.msra.mxu0 %v2868
      %3286 = vmatpush.msra.mxu0 %v2867
      %3287 = vmatpush.msra.mxu0 %v2866
      %3288 = vmatpush.msra.mxu0 %v2865
      %3289 = vmatpush.msra.mxu0 %v2864
      %3290 = vmatpush.msra.mxu0 %v2863
      %3291 = vmatpush.msra.mxu0 %v2862
      %3292 = vmatmul.f32.gmra.mxu0 %v3018
      %v3293 = vpop.f32.mrf.mxu0
      %v3294 = vadd.f32 %v3274, %v3293
      %3295 = vdwg.mxu0
      %3296 = vmatpush.msra.mxu0 %v2893
      %3297 = vmatpush.msra.mxu0 %v2892
      %3298 = vmatpush.msra.mxu0 %v2891
      %3299 = vmatpush.msra.mxu0 %v2890
      %3300 = vmatpush.msra.mxu0 %v2889
      %3301 = vmatpush.msra.mxu0 %v2888
      %3302 = vmatpush.msra.mxu0 %v2887
      %3303 = vmatpush.msra.mxu0 %v2886
      %3304 = vmatpush.msra.mxu0 %v2885
      %3305 = vmatpush.msra.mxu0 %v2884
      %3306 = vmatpush.msra.mxu0 %v2883
      %3307 = vmatpush.msra.mxu0 %v2882
      %3308 = vmatpush.msra.mxu0 %v2881
      %3309 = vmatpush.msra.mxu0 %v2880
      %3310 = vmatpush.msra.mxu0 %v2879
      %3311 = vmatpush.msra.mxu0 %v2878
      %3312 = vmatmul.f32.gmra.mxu0 %v3019
      %v3313 = vpop.f32.mrf.mxu0
      %v3314 = vadd.f32 %v3294, %v3313
      %3315 = vdwg.mxu0
      %3316 = vmatpush.msra.mxu0 %v2909
      %3317 = vmatpush.msra.mxu0 %v2908
      %3318 = vmatpush.msra.mxu0 %v2907
      %3319 = vmatpush.msra.mxu0 %v2906
      %3320 = vmatpush.msra.mxu0 %v2905
      %3321 = vmatpush.msra.mxu0 %v2904
      %3322 = vmatpush.msra.mxu0 %v2903
      %3323 = vmatpush.msra.mxu0 %v2902
      %3324 = vmatpush.msra.mxu0 %v2901
      %3325 = vmatpush.msra.mxu0 %v2900
      %3326 = vmatpush.msra.mxu0 %v2899
      %3327 = vmatpush.msra.mxu0 %v2898
      %3328 = vmatpush.msra.mxu0 %v2897
      %3329 = vmatpush.msra.mxu0 %v2896
      %3330 = vmatpush.msra.mxu0 %v2895
      %3331 = vmatpush.msra.mxu0 %v2894
      %3332 = vmatmul.f32.gmra.mxu0 %v3020
      %v3333 = vpop.f32.mrf.mxu0
      %v3334 = vadd.f32 %v3314, %v3333
      %3335 = vdwg.mxu0
      %3336 = vmatpush.msra.mxu0 %v2925
      %3337 = vmatpush.msra.mxu0 %v2924
      %3338 = vmatpush.msra.mxu0 %v2923
      %3339 = vmatpush.msra.mxu0 %v2922
      %3340 = vmatpush.msra.mxu0 %v2921
      %3341 = vmatpush.msra.mxu0 %v2920
      %3342 = vmatpush.msra.mxu0 %v2919
      %3343 = vmatpush.msra.mxu0 %v2918
      %3344 = vmatpush.msra.mxu0 %v2917
      %3345 = vmatpush.msra.mxu0 %v2916
      %3346 = vmatpush.msra.mxu0 %v2915
      %3347 = vmatpush.msra.mxu0 %v2914
      %3348 = vmatpush.msra.mxu0 %v2913
      %3349 = vmatpush.msra.mxu0 %v2912
      %3350 = vmatpush.msra.mxu0 %v2911
      %3351 = vmatpush.msra.mxu0 %v2910
      %3352 = vmatmul.f32.gmra.mxu0 %v3021
      %v3353 = vpop.f32.mrf.mxu0
      %v3354 = vadd.f32 %v3334, %v3353
      %3355 = vdwg.mxu0
      %v3356 = vld [vmem:[%s43 + $0x40] sm:$0xff]
      %v3357 = vld [vmem:[%s43 + $0x48] sm:$0xff]
      %v3358 = vld [vmem:[%s43 + $0x50] sm:$0xff]
      %v3359 = vld [vmem:[%s43 + $0x58] sm:$0xff]
      %v3360 = vld [vmem:[%s43 + $0xc0] sm:$0xff]
      %v3361 = vld [vmem:[%s43 + $0xc8] sm:$0xff]
      %v3362 = vld [vmem:[%s43 + $0xd0] sm:$0xff]
      %v3363 = vld [vmem:[%s43 + $0xd8] sm:$0xff]
      %v3364 = vld [vmem:[%s43 + $0x140] sm:$0xff]
      %v3365 = vld [vmem:[%s43 + $0x148] sm:$0xff]
      %v3366 = vld [vmem:[%s43 + $0x150] sm:$0xff]
      %v3367 = vld [vmem:[%s43 + $0x158] sm:$0xff]
      %v3368 = vld [vmem:[%s43 + $0x1c0] sm:$0xff]
      %v3369 = vld [vmem:[%s43 + $0x1c8] sm:$0xff]
      %v3370 = vld [vmem:[%s43 + $0x1d0] sm:$0xff]
      %v3371 = vld [vmem:[%s43 + $0x1d8] sm:$0xff]
      %v3372 = vld [vmem:[%s45 + $0x8] sm:$0xf]
      %v3373 = vld [vmem:[%s47 + $0x400] sm:$0xff]
      %v3374 = vld [vmem:[%s47 + $0x408] sm:$0xff]
      %v3375 = vld [vmem:[%s47 + $0x410] sm:$0xff]
      %v3376 = vld [vmem:[%s47 + $0x418] sm:$0xff]
      %v3377 = vld [vmem:[%s47 + $0x420] sm:$0xff]
      %v3378 = vld [vmem:[%s47 + $0x428] sm:$0xff]
      %v3379 = vld [vmem:[%s47 + $0x430] sm:$0xff]
      %v3380 = vld [vmem:[%s47 + $0x438] sm:$0xff]
      %v3381 = vld [vmem:[%s47 + $0x440] sm:$0xff]
      %v3382 = vld [vmem:[%s47 + $0x448] sm:$0xff]
      %v3383 = vld [vmem:[%s47 + $0x450] sm:$0xff]
      %v3384 = vld [vmem:[%s47 + $0x458] sm:$0xff]
      %v3385 = vld [vmem:[%s47 + $0x460] sm:$0xff]
      %v3386 = vld [vmem:[%s47 + $0x468] sm:$0xff]
      %v3387 = vld [vmem:[%s47 + $0x470] sm:$0xff]
      %v3388 = vld [vmem:[%s47 + $0x478] sm:$0xff]
      %v3389 = vld [vmem:[%s47 + $0x480] sm:$0xff]
      %v3390 = vld [vmem:[%s47 + $0x488] sm:$0xff]
      %v3391 = vld [vmem:[%s47 + $0x490] sm:$0xff]
      %v3392 = vld [vmem:[%s47 + $0x498] sm:$0xff]
      %v3393 = vld [vmem:[%s47 + $0x4a0] sm:$0xff]
      %v3394 = vld [vmem:[%s47 + $0x4a8] sm:$0xff]
      %v3395 = vld [vmem:[%s47 + $0x4b0] sm:$0xff]
      %v3396 = vld [vmem:[%s47 + $0x4b8] sm:$0xff]
      %v3397 = vld [vmem:[%s47 + $0x4c0] sm:$0xff]
      %v3398 = vld [vmem:[%s47 + $0x4c8] sm:$0xff]
      %v3399 = vld [vmem:[%s47 + $0x4d0] sm:$0xff]
      %v3400 = vld [vmem:[%s47 + $0x4d8] sm:$0xff]
      %v3401 = vld [vmem:[%s47 + $0x4e0] sm:$0xff]
      %v3402 = vld [vmem:[%s47 + $0x4e8] sm:$0xff]
      %v3403 = vld [vmem:[%s47 + $0x4f0] sm:$0xff]
      %v3404 = vld [vmem:[%s47 + $0x4f8] sm:$0xff]
      %v3405 = vld [vmem:[%s47 + $0x500] sm:$0xff]
      %v3406 = vld [vmem:[%s47 + $0x508] sm:$0xff]
      %v3407 = vld [vmem:[%s47 + $0x510] sm:$0xff]
      %v3408 = vld [vmem:[%s47 + $0x518] sm:$0xff]
      %v3409 = vld [vmem:[%s47 + $0x520] sm:$0xff]
      %v3410 = vld [vmem:[%s47 + $0x528] sm:$0xff]
      %v3411 = vld [vmem:[%s47 + $0x530] sm:$0xff]
      %v3412 = vld [vmem:[%s47 + $0x538] sm:$0xff]
      %v3413 = vld [vmem:[%s47 + $0x540] sm:$0xff]
      %v3414 = vld [vmem:[%s47 + $0x548] sm:$0xff]
      %v3415 = vld [vmem:[%s47 + $0x550] sm:$0xff]
      %v3416 = vld [vmem:[%s47 + $0x558] sm:$0xff]
      %v3417 = vld [vmem:[%s47 + $0x560] sm:$0xff]
      %v3418 = vld [vmem:[%s47 + $0x568] sm:$0xff]
      %v3419 = vld [vmem:[%s47 + $0x570] sm:$0xff]
      %v3420 = vld [vmem:[%s47 + $0x578] sm:$0xff]
      %v3421 = vld [vmem:[%s47 + $0x580] sm:$0xff]
      %v3422 = vld [vmem:[%s47 + $0x588] sm:$0xff]
      %v3423 = vld [vmem:[%s47 + $0x590] sm:$0xff]
      %v3424 = vld [vmem:[%s47 + $0x598] sm:$0xff]
      %v3425 = vld [vmem:[%s47 + $0x5a0] sm:$0xff]
      %v3426 = vld [vmem:[%s47 + $0x5a8] sm:$0xff]
      %v3427 = vld [vmem:[%s47 + $0x5b0] sm:$0xff]
      %v3428 = vld [vmem:[%s47 + $0x5b8] sm:$0xff]
      %v3429 = vld [vmem:[%s47 + $0x5c0] sm:$0xff]
      %v3430 = vld [vmem:[%s47 + $0x5c8] sm:$0xff]
      %v3431 = vld [vmem:[%s47 + $0x5d0] sm:$0xff]
      %v3432 = vld [vmem:[%s47 + $0x5d8] sm:$0xff]
      %v3433 = vld [vmem:[%s47 + $0x5e0] sm:$0xff]
      %v3434 = vld [vmem:[%s47 + $0x5e8] sm:$0xff]
      %v3435 = vld [vmem:[%s47 + $0x5f0] sm:$0xff]
      %v3436 = vld [vmem:[%s47 + $0x5f8] sm:$0xff]
      %v3438 = vperm.slane %v3372, 0
      %v3439 = vperm.slane %v3372, 1
      %v3440 = vperm.slane %v3372, 2
      %v3441 = vperm.slane %v3372, 3
      %3446 = vmatpush.msra.mxu0 0.0
      %3447 = vmatpush.msra.mxu0 0.0
      %3448 = vmatpush.msra.mxu0 0.0
      %3449 = vmatpush.msra.mxu0 0.0
      %3450 = vmatpush.msra.mxu0 0.0
      %3451 = vmatpush.msra.mxu0 0.0
      %3452 = vmatpush.msra.mxu0 0.0
      %3453 = vmatpush.msra.mxu0 0.0
      %3454 = vmatpush.msra.mxu0 0.0
      %3455 = vmatpush.msra.mxu0 0.0
      %3456 = vmatpush.msra.mxu0 0.0
      %3457 = vmatpush.msra.mxu0 0.0
      %3458 = vmatpush.msra.mxu0 %v3368
      %3459 = vmatpush.msra.mxu0 %v3364
      %3460 = vmatpush.msra.mxu0 %v3360
      %3461 = vmatpush.msra.mxu0 %v3356
      %3462 = vmatmul.f32.gmra.mxu0 %v2936
      %v3463 = vpop.f32.mrf.mxu0
      %v3464 = vadd.f32 %v3438, %v3463
      %3465 = vdwg.mxu0
      %3466 = vmatpush.msra.mxu0 0.0
      %3467 = vmatpush.msra.mxu0 0.0
      %3468 = vmatpush.msra.mxu0 0.0
      %3469 = vmatpush.msra.mxu0 0.0
      %3470 = vmatpush.msra.mxu0 0.0
      %3471 = vmatpush.msra.mxu0 0.0
      %3472 = vmatpush.msra.mxu0 0.0
      %3473 = vmatpush.msra.mxu0 0.0
      %3474 = vmatpush.msra.mxu0 0.0
      %3475 = vmatpush.msra.mxu0 0.0
      %3476 = vmatpush.msra.mxu0 0.0
      %3477 = vmatpush.msra.mxu0 0.0
      %3478 = vmatpush.msra.mxu0 %v3369
      %3479 = vmatpush.msra.mxu0 %v3365
      %3480 = vmatpush.msra.mxu0 %v3361
      %3481 = vmatpush.msra.mxu0 %v3357
      %3482 = vmatmul.f32.gmra.mxu0 %v2936
      %v3483 = vpop.f32.mrf.mxu0
      %v3484 = vadd.f32 %v3439, %v3483
      %3485 = vdwg.mxu0
      %3486 = vmatpush.msra.mxu0 0.0
      %3487 = vmatpush.msra.mxu0 0.0
      %3488 = vmatpush.msra.mxu0 0.0
      %3489 = vmatpush.msra.mxu0 0.0
      %3490 = vmatpush.msra.mxu0 0.0
      %3491 = vmatpush.msra.mxu0 0.0
      %3492 = vmatpush.msra.mxu0 0.0
      %3493 = vmatpush.msra.mxu0 0.0
      %3494 = vmatpush.msra.mxu0 0.0
      %3495 = vmatpush.msra.mxu0 0.0
      %3496 = vmatpush.msra.mxu0 0.0
      %3497 = vmatpush.msra.mxu0 0.0
      %3498 = vmatpush.msra.mxu0 %v3370
      %3499 = vmatpush.msra.mxu0 %v3366
      %3500 = vmatpush.msra.mxu0 %v3362
      %3501 = vmatpush.msra.mxu0 %v3358
      %3502 = vmatmul.f32.gmra.mxu0 %v2936
      %v3503 = vpop.f32.mrf.mxu0
      %v3504 = vadd.f32 %v3440, %v3503
      %3505 = vdwg.mxu0
      %3506 = vmatpush.msra.mxu0 0.0
      %3507 = vmatpush.msra.mxu0 0.0
      %3508 = vmatpush.msra.mxu0 0.0
      %3509 = vmatpush.msra.mxu0 0.0
      %3510 = vmatpush.msra.mxu0 0.0
      %3511 = vmatpush.msra.mxu0 0.0
      %3512 = vmatpush.msra.mxu0 0.0
      %3513 = vmatpush.msra.mxu0 0.0
      %3514 = vmatpush.msra.mxu0 0.0
      %3515 = vmatpush.msra.mxu0 0.0
      %3516 = vmatpush.msra.mxu0 0.0
      %3517 = vmatpush.msra.mxu0 0.0
      %3518 = vmatpush.msra.mxu0 %v3371
      %3519 = vmatpush.msra.mxu0 %v3367
      %3520 = vmatpush.msra.mxu0 %v3363
      %3521 = vmatpush.msra.mxu0 %v3359
      %3522 = vmatmul.f32.gmra.mxu0 %v2936
      %v3523 = vpop.f32.mrf.mxu0
      %v3524 = vadd.f32 %v3441, %v3523
      %3525 = vdwg.mxu0
      %v3526 = vmax.f32 %v3464, 0.0
      %v3527 = vmax.f32 %v3484, 0.0
      %v3528 = vmax.f32 %v3504, 0.0
      %v3529 = vmax.f32 %v3524, 0.0
      %3530 = vmatpush.msra.mxu0 %v3388
      %3531 = vmatpush.msra.mxu0 %v3387
      %3532 = vmatpush.msra.mxu0 %v3386
      %3533 = vmatpush.msra.mxu0 %v3385
      %3534 = vmatpush.msra.mxu0 %v3384
      %3535 = vmatpush.msra.mxu0 %v3383
      %3536 = vmatpush.msra.mxu0 %v3382
      %3537 = vmatpush.msra.mxu0 %v3381
      %3538 = vmatpush.msra.mxu0 %v3380
      %3539 = vmatpush.msra.mxu0 %v3379
      %3540 = vmatpush.msra.mxu0 %v3378
      %3541 = vmatpush.msra.mxu0 %v3377
      %3542 = vmatpush.msra.mxu0 %v3376
      %3543 = vmatpush.msra.mxu0 %v3375
      %3544 = vmatpush.msra.mxu0 %v3374
      %3545 = vmatpush.msra.mxu0 %v3373
      %3546 = vmatmul.f32.gmra.mxu0 %v3526
      %v3547 = vpop.f32.mrf.mxu0
      %v3548 = vadd.f32 0.0, %v3547
      %3549 = vdwg.mxu0
      %3550 = vmatpush.msra.mxu0 %v3404
      %3551 = vmatpush.msra.mxu0 %v3403
      %3552 = vmatpush.msra.mxu0 %v3402
      %3553 = vmatpush.msra.mxu0 %v3401
      %3554 = vmatpush.msra.mxu0 %v3400
      %3555 = vmatpush.msra.mxu0 %v3399
      %3556 = vmatpush.msra.mxu0 %v3398
      %3557 = vmatpush.msra.mxu0 %v3397
      %3558 = vmatpush.msra.mxu0 %v3396
      %3559 = vmatpush.msra.mxu0 %v3395
      %3560 = vmatpush.msra.mxu0 %v3394
      %3561 = vmatpush.msra.mxu0 %v3393
      %3562 = vmatpush.msra.mxu0 %v3392
      %3563 = vmatpush.msra.mxu0 %v3391
      %3564 = vmatpush.msra.mxu0 %v3390
      %3565 = vmatpush.msra.mxu0 %v3389
      %3566 = vmatmul.f32.gmra.mxu0 %v3527
      %v3567 = vpop.f32.mrf.mxu0
      %v3568 = vadd.f32 %v3548, %v3567
      %3569 = vdwg.mxu0
      %3570 = vmatpush.msra.mxu0 %v3420
      %3571 = vmatpush.msra.mxu0 %v3419
      %3572 = vmatpush.msra.mxu0 %v3418
      %3573 = vmatpush.msra.mxu0 %v3417
      %3574 = vmatpush.msra.mxu0 %v3416
      %3575 = vmatpush.msra.mxu0 %v3415
      %3576 = vmatpush.msra.mxu0 %v3414
      %3577 = vmatpush.msra.mxu0 %v3413
      %3578 = vmatpush.msra.mxu0 %v3412
      %3579 = vmatpush.msra.mxu0 %v3411
      %3580 = vmatpush.msra.mxu0 %v3410
      %3581 = vmatpush.msra.mxu0 %v3409
      %3582 = vmatpush.msra.mxu0 %v3408
      %3583 = vmatpush.msra.mxu0 %v3407
      %3584 = vmatpush.msra.mxu0 %v3406
      %3585 = vmatpush.msra.mxu0 %v3405
      %3586 = vmatmul.f32.gmra.mxu0 %v3528
      %v3587 = vpop.f32.mrf.mxu0
      %v3588 = vadd.f32 %v3568, %v3587
      %3589 = vdwg.mxu0
      %3590 = vmatpush.msra.mxu0 %v3436
      %3591 = vmatpush.msra.mxu0 %v3435
      %3592 = vmatpush.msra.mxu0 %v3434
      %3593 = vmatpush.msra.mxu0 %v3433
      %3594 = vmatpush.msra.mxu0 %v3432
      %3595 = vmatpush.msra.mxu0 %v3431
      %3596 = vmatpush.msra.mxu0 %v3430
      %3597 = vmatpush.msra.mxu0 %v3429
      %3598 = vmatpush.msra.mxu0 %v3428
      %3599 = vmatpush.msra.mxu0 %v3427
      %3600 = vmatpush.msra.mxu0 %v3426
      %3601 = vmatpush.msra.mxu0 %v3425
      %3602 = vmatpush.msra.mxu0 %v3424
      %3603 = vmatpush.msra.mxu0 %v3423
      %3604 = vmatpush.msra.mxu0 %v3422
      %3605 = vmatpush.msra.mxu0 %v3421
      %3606 = vmatmul.f32.gmra.mxu0 %v3529
      %v3607 = vpop.f32.mrf.mxu0
      %v3608 = vadd.f32 %v3588, %v3607
      %3609 = vdwg.mxu0
      %v3610 = vadd.f32 %v3354, %v3608
      %v3611 = vld [vmem:[%s43 + $0x60] sm:$0xff]
      %v3612 = vld [vmem:[%s43 + $0x68] sm:$0xff]
      %v3613 = vld [vmem:[%s43 + $0x70] sm:$0xff]
      %v3614 = vld [vmem:[%s43 + $0x78] sm:$0xff]
      %v3615 = vld [vmem:[%s43 + $0xe0] sm:$0xff]
      %v3616 = vld [vmem:[%s43 + $0xe8] sm:$0xff]
      %v3617 = vld [vmem:[%s43 + $0xf0] sm:$0xff]
      %v3618 = vld [vmem:[%s43 + $0xf8] sm:$0xff]
      %v3619 = vld [vmem:[%s43 + $0x160] sm:$0xff]
      %v3620 = vld [vmem:[%s43 + $0x168] sm:$0xff]
      %v3621 = vld [vmem:[%s43 + $0x170] sm:$0xff]
      %v3622 = vld [vmem:[%s43 + $0x178] sm:$0xff]
      %v3623 = vld [vmem:[%s43 + $0x1e0] sm:$0xff]
      %v3624 = vld [vmem:[%s43 + $0x1e8] sm:$0xff]
      %v3625 = vld [vmem:[%s43 + $0x1f0] sm:$0xff]
      %v3626 = vld [vmem:[%s43 + $0x1f8] sm:$0xff]
      %v3627 = vld [vmem:[%s45 + $0xc] sm:$0xf]
      %v3628 = vld [vmem:[%s47 + $0x600] sm:$0xff]
      %v3629 = vld [vmem:[%s47 + $0x608] sm:$0xff]
      %v3630 = vld [vmem:[%s47 + $0x610] sm:$0xff]
      %v3631 = vld [vmem:[%s47 + $0x618] sm:$0xff]
      %v3632 = vld [vmem:[%s47 + $0x620] sm:$0xff]
      %v3633 = vld [vmem:[%s47 + $0x628] sm:$0xff]
      %v3634 = vld [vmem:[%s47 + $0x630] sm:$0xff]
      %v3635 = vld [vmem:[%s47 + $0x638] sm:$0xff]
      %v3636 = vld [vmem:[%s47 + $0x640] sm:$0xff]
      %v3637 = vld [vmem:[%s47 + $0x648] sm:$0xff]
      %v3638 = vld [vmem:[%s47 + $0x650] sm:$0xff]
      %v3639 = vld [vmem:[%s47 + $0x658] sm:$0xff]
      %v3640 = vld [vmem:[%s47 + $0x660] sm:$0xff]
      %v3641 = vld [vmem:[%s47 + $0x668] sm:$0xff]
      %v3642 = vld [vmem:[%s47 + $0x670] sm:$0xff]
      %v3643 = vld [vmem:[%s47 + $0x678] sm:$0xff]
      %v3644 = vld [vmem:[%s47 + $0x680] sm:$0xff]
      %v3645 = vld [vmem:[%s47 + $0x688] sm:$0xff]
      %v3646 = vld [vmem:[%s47 + $0x690] sm:$0xff]
      %v3647 = vld [vmem:[%s47 + $0x698] sm:$0xff]
      %v3648 = vld [vmem:[%s47 + $0x6a0] sm:$0xff]
      %v3649 = vld [vmem:[%s47 + $0x6a8] sm:$0xff]
      %v3650 = vld [vmem:[%s47 + $0x6b0] sm:$0xff]
      %v3651 = vld [vmem:[%s47 + $0x6b8] sm:$0xff]
      %v3652 = vld [vmem:[%s47 + $0x6c0] sm:$0xff]
      %v3653 = vld [vmem:[%s47 + $0x6c8] sm:$0xff]
      %v3654 = vld [vmem:[%s47 + $0x6d0] sm:$0xff]
      %v3655 = vld [vmem:[%s47 + $0x6d8] sm:$0xff]
      %v3656 = vld [vmem:[%s47 + $0x6e0] sm:$0xff]
      %v3657 = vld [vmem:[%s47 + $0x6e8] sm:$0xff]
      %v3658 = vld [vmem:[%s47 + $0x6f0] sm:$0xff]
      %v3659 = vld [vmem:[%s47 + $0x6f8] sm:$0xff]
      %v3660 = vld [vmem:[%s47 + $0x700] sm:$0xff]
      %v3661 = vld [vmem:[%s47 + $0x708] sm:$0xff]
      %v3662 = vld [vmem:[%s47 + $0x710] sm:$0xff]
      %v3663 = vld [vmem:[%s47 + $0x718] sm:$0xff]
      %v3664 = vld [vmem:[%s47 + $0x720] sm:$0xff]
      %v3665 = vld [vmem:[%s47 + $0x728] sm:$0xff]
      %v3666 = vld [vmem:[%s47 + $0x730] sm:$0xff]
      %v3667 = vld [vmem:[%s47 + $0x738] sm:$0xff]
      %v3668 = vld [vmem:[%s47 + $0x740] sm:$0xff]
      %v3669 = vld [vmem:[%s47 + $0x748] sm:$0xff]
      %v3670 = vld [vmem:[%s47 + $0x750] sm:$0xff]
      %v3671 = vld [vmem:[%s47 + $0x758] sm:$0xff]
      %v3672 = vld [vmem:[%s47 + $0x760] sm:$0xff]
      %v3673 = vld [vmem:[%s47 + $0x768] sm:$0xff]
      %v3674 = vld [vmem:[%s47 + $0x770] sm:$0xff]
      %v3675 = vld [vmem:[%s47 + $0x778] sm:$0xff]
      %v3676 = vld [vmem:[%s47 + $0x780] sm:$0xff]
      %v3677 = vld [vmem:[%s47 + $0x788] sm:$0xff]
      %v3678 = vld [vmem:[%s47 + $0x790] sm:$0xff]
      %v3679 = vld [vmem:[%s47 + $0x798] sm:$0xff]
      %v3680 = vld [vmem:[%s47 + $0x7a0] sm:$0xff]
      %v3681 = vld [vmem:[%s47 + $0x7a8] sm:$0xff]
      %v3682 = vld [vmem:[%s47 + $0x7b0] sm:$0xff]
      %v3683 = vld [vmem:[%s47 + $0x7b8] sm:$0xff]
      %v3684 = vld [vmem:[%s47 + $0x7c0] sm:$0xff]
      %v3685 = vld [vmem:[%s47 + $0x7c8] sm:$0xff]
      %v3686 = vld [vmem:[%s47 + $0x7d0] sm:$0xff]
      %v3687 = vld [vmem:[%s47 + $0x7d8] sm:$0xff]
      %v3688 = vld [vmem:[%s47 + $0x7e0] sm:$0xff]
      %v3689 = vld [vmem:[%s47 + $0x7e8] sm:$0xff]
      %v3690 = vld [vmem:[%s47 + $0x7f0] sm:$0xff]
      %v3691 = vld [vmem:[%s47 + $0x7f8] sm:$0xff]
      %v3693 = vperm.slane %v3627, 0
      %v3694 = vperm.slane %v3627, 1
      %v3695 = vperm.slane %v3627, 2
      %v3696 = vperm.slane %v3627, 3
      %3701 = vmatpush.msra.mxu0 0.0
      %3702 = vmatpush.msra.mxu0 0.0
      %3703 = vmatpush.msra.mxu0 0.0
      %3704 = vmatpush.msra.mxu0 0.0
      %3705 = vmatpush.msra.mxu0 0.0
      %3706 = vmatpush.msra.mxu0 0.0
      %3707 = vmatpush.msra.mxu0 0.0
      %3708 = vmatpush.msra.mxu0 0.0
      %3709 = vmatpush.msra.mxu0 0.0
      %3710 = vmatpush.msra.mxu0 0.0
      %3711 = vmatpush.msra.mxu0 0.0
      %3712 = vmatpush.msra.mxu0 0.0
      %3713 = vmatpush.msra.mxu0 %v3623
      %3714 = vmatpush.msra.mxu0 %v3619
      %3715 = vmatpush.msra.mxu0 %v3615
      %3716 = vmatpush.msra.mxu0 %v3611
      %3717 = vmatmul.f32.gmra.mxu0 %v2936
      %v3718 = vpop.f32.mrf.mxu0
      %v3719 = vadd.f32 %v3693, %v3718
      %3720 = vdwg.mxu0
      %3721 = vmatpush.msra.mxu0 0.0
      %3722 = vmatpush.msra.mxu0 0.0
      %3723 = vmatpush.msra.mxu0 0.0
      %3724 = vmatpush.msra.mxu0 0.0
      %3725 = vmatpush.msra.mxu0 0.0
      %3726 = vmatpush.msra.mxu0 0.0
      %3727 = vmatpush.msra.mxu0 0.0
      %3728 = vmatpush.msra.mxu0 0.0
      %3729 = vmatpush.msra.mxu0 0.0
      %3730 = vmatpush.msra.mxu0 0.0
      %3731 = vmatpush.msra.mxu0 0.0
      %3732 = vmatpush.msra.mxu0 0.0
      %3733 = vmatpush.msra.mxu0 %v3624
      %3734 = vmatpush.msra.mxu0 %v3620
      %3735 = vmatpush.msra.mxu0 %v3616
      %3736 = vmatpush.msra.mxu0 %v3612
      %3737 = vmatmul.f32.gmra.mxu0 %v2936
      %v3738 = vpop.f32.mrf.mxu0
      %v3739 = vadd.f32 %v3694, %v3738
      %3740 = vdwg.mxu0
      %3741 = vmatpush.msra.mxu0 0.0
      %3742 = vmatpush.msra.mxu0 0.0
      %3743 = vmatpush.msra.mxu0 0.0
      %3744 = vmatpush.msra.mxu0 0.0
      %3745 = vmatpush.msra.mxu0 0.0
      %3746 = vmatpush.msra.mxu0 0.0
      %3747 = vmatpush.msra.mxu0 0.0
      %3748 = vmatpush.msra.mxu0 0.0
      %3749 = vmatpush.msra.mxu0 0.0
      %3750 = vmatpush.msra.mxu0 0.0
      %3751 = vmatpush.msra.mxu0 0.0
      %3752 = vmatpush.msra.mxu0 0.0
      %3753 = vmatpush.msra.mxu0 %v3625
      %3754 = vmatpush.msra.mxu0 %v3621
      %3755 = vmatpush.msra.mxu0 %v3617
      %3756 = vmatpush.msra.mxu0 %v3613
      %3757 = vmatmul.f32.gmra.mxu0 %v2936
      %v3758 = vpop.f32.mrf.mxu0
      %v3759 = vadd.f32 %v3695, %v3758
      %3760 = vdwg.mxu0
      %3761 = vmatpush.msra.mxu0 0.0
      %3762 = vmatpush.msra.mxu0 0.0
      %3763 = vmatpush.msra.mxu0 0.0
      %3764 = vmatpush.msra.mxu0 0.0
      %3765 = vmatpush.msra.mxu0 0.0
      %3766 = vmatpush.msra.mxu0 0.0
      %3767 = vmatpush.msra.mxu0 0.0
      %3768 = vmatpush.msra.mxu0 0.0
      %3769 = vmatpush.msra.mxu0 0.0
      %3770 = vmatpush.msra.mxu0 0.0
      %3771 = vmatpush.msra.mxu0 0.0
      %3772 = vmatpush.msra.mxu0 0.0
      %3773 = vmatpush.msra.mxu0 %v3626
      %3774 = vmatpush.msra.mxu0 %v3622
      %3775 = vmatpush.msra.mxu0 %v3618
      %3776 = vmatpush.msra.mxu0 %v3614
      %3777 = vmatmul.f32.gmra.mxu0 %v2936
      %v3778 = vpop.f32.mrf.mxu0
      %v3779 = vadd.f32 %v3696, %v3778
      %3780 = vdwg.mxu0
      %v3781 = vmax.f32 %v3719, 0.0
      %v3782 = vmax.f32 %v3739, 0.0
      %v3783 = vmax.f32 %v3759, 0.0
      %v3784 = vmax.f32 %v3779, 0.0
      %3785 = vmatpush.msra.mxu0 %v3643
      %3786 = vmatpush.msra.mxu0 %v3642
      %3787 = vmatpush.msra.mxu0 %v3641
      %3788 = vmatpush.msra.mxu0 %v3640
      %3789 = vmatpush.msra.mxu0 %v3639
      %3790 = vmatpush.msra.mxu0 %v3638
      %3791 = vmatpush.msra.mxu0 %v3637
      %3792 = vmatpush.msra.mxu0 %v3636
      %3793 = vmatpush.msra.mxu0 %v3635
      %3794 = vmatpush.msra.mxu0 %v3634
      %3795 = vmatpush.msra.mxu0 %v3633
      %3796 = vmatpush.msra.mxu0 %v3632
      %3797 = vmatpush.msra.mxu0 %v3631
      %3798 = vmatpush.msra.mxu0 %v3630
      %3799 = vmatpush.msra.mxu0 %v3629
      %3800 = vmatpush.msra.mxu0 %v3628
      %3801 = vmatmul.f32.gmra.mxu0 %v3781
      %v3802 = vpop.f32.mrf.mxu0
      %v3803 = vadd.f32 0.0, %v3802
      %3804 = vdwg.mxu0
      %3805 = vmatpush.msra.mxu0 %v3659
      %3806 = vmatpush.msra.mxu0 %v3658
      %3807 = vmatpush.msra.mxu0 %v3657
      %3808 = vmatpush.msra.mxu0 %v3656
      %3809 = vmatpush.msra.mxu0 %v3655
      %3810 = vmatpush.msra.mxu0 %v3654
      %3811 = vmatpush.msra.mxu0 %v3653
      %3812 = vmatpush.msra.mxu0 %v3652
      %3813 = vmatpush.msra.mxu0 %v3651
      %3814 = vmatpush.msra.mxu0 %v3650
      %3815 = vmatpush.msra.mxu0 %v3649
      %3816 = vmatpush.msra.mxu0 %v3648
      %3817 = vmatpush.msra.mxu0 %v3647
      %3818 = vmatpush.msra.mxu0 %v3646
      %3819 = vmatpush.msra.mxu0 %v3645
      %3820 = vmatpush.msra.mxu0 %v3644
      %3821 = vmatmul.f32.gmra.mxu0 %v3782
      %v3822 = vpop.f32.mrf.mxu0
      %v3823 = vadd.f32 %v3803, %v3822
      %3824 = vdwg.mxu0
      %3825 = vmatpush.msra.mxu0 %v3675
      %3826 = vmatpush.msra.mxu0 %v3674
      %3827 = vmatpush.msra.mxu0 %v3673
      %3828 = vmatpush.msra.mxu0 %v3672
      %3829 = vmatpush.msra.mxu0 %v3671
      %3830 = vmatpush.msra.mxu0 %v3670
      %3831 = vmatpush.msra.mxu0 %v3669
      %3832 = vmatpush.msra.mxu0 %v3668
      %3833 = vmatpush.msra.mxu0 %v3667
      %3834 = vmatpush.msra.mxu0 %v3666
      %3835 = vmatpush.msra.mxu0 %v3665
      %3836 = vmatpush.msra.mxu0 %v3664
      %3837 = vmatpush.msra.mxu0 %v3663
      %3838 = vmatpush.msra.mxu0 %v3662
      %3839 = vmatpush.msra.mxu0 %v3661
      %3840 = vmatpush.msra.mxu0 %v3660
      %3841 = vmatmul.f32.gmra.mxu0 %v3783
      %v3842 = vpop.f32.mrf.mxu0
      %v3843 = vadd.f32 %v3823, %v3842
      %3844 = vdwg.mxu0
      %3845 = vmatpush.msra.mxu0 %v3691
      %3846 = vmatpush.msra.mxu0 %v3690
      %3847 = vmatpush.msra.mxu0 %v3689
      %3848 = vmatpush.msra.mxu0 %v3688
      %3849 = vmatpush.msra.mxu0 %v3687
      %3850 = vmatpush.msra.mxu0 %v3686
      %3851 = vmatpush.msra.mxu0 %v3685
      %3852 = vmatpush.msra.mxu0 %v3684
      %3853 = vmatpush.msra.mxu0 %v3683
      %3854 = vmatpush.msra.mxu0 %v3682
      %3855 = vmatpush.msra.mxu0 %v3681
      %3856 = vmatpush.msra.mxu0 %v3680
      %3857 = vmatpush.msra.mxu0 %v3679
      %3858 = vmatpush.msra.mxu0 %v3678
      %3859 = vmatpush.msra.mxu0 %v3677
      %3860 = vmatpush.msra.mxu0 %v3676
      %3861 = vmatmul.f32.gmra.mxu0 %v3784
      %v3862 = vpop.f32.mrf.mxu0
      %v3863 = vadd.f32 %v3843, %v3862
      %3864 = vdwg.mxu0
      %v3865 = vadd.f32 %v3610, %v3863
      %v3866 = vld [vmem:[%s49] sm:$0x1]
      %v3868 = vperm.slane %v3866, 0
      %v3870 = vadd.f32 %v3865, %v3868
      %v3871 = vadd.f32 %v2844, %v3870
      %v3872 = vld [vmem:[%s51] sm:$0x1]
      %v3873 = vld [vmem:[%s53] sm:$0x1]
      %v3874 = vsel %vm938, %v3871, 0.0
      %3875 = vadd.xlane.f32.xlu0 %v3874
      %v3876 = vpop.xlane.xlu0 %3875
      %v3877 = vmul.f32 %v3876, %v1335
      %v3878 = vsub.f32 %v3871, %v3877
      %v3879 = vmul.f32 %v3878, %v3878
      %v3880 = vsel %vm938, %v3879, 0.0
      %3881 = vadd.xlane.f32.xlu0 %v3880
      %v3882 = vpop.xlane.xlu0 %3881
      %v3883 = vmul.f32 %v3882, %v1335
      %v3884 = vadd.f32 %v3883, 1e-05
      %v3885 = vrsqrt.pop %v3884
      %v3886 = vmul.f32 %v3885, %v3884
      %v3887 = vmul.f32 %v3886, %v3885
      %v3888 = vmul.f32 0.5, %v3887
      %v3889 = vsub.f32 1.5, %v3888
      %v3890 = vmul.f32 %v3885, %v3889
      %vm3891 = vweird.f32 %v3884
      %vm3892 = vweird.f32 %v3885
      %vm3893 = vmor %vm3891, %vm3892
      %v3894 = vsel %vm3893, %v3885, %v3890
      %v3895 = vmul.f32 %v3878, %v3894
      %v3897 = vperm.slane %v3872, 0
      %v3899 = vmul.f32 %v3895, %v3897
      %v3901 = vperm.slane %v3873, 0
      %v3903 = vadd.f32 %v3899, %v3901
      %v3904 = vld [vmem:[%s55] sm:$0x1]
      %v3905 = vld [vmem:[#allocation2] sm:$0x1]
      %v3907 = vperm.slane %v3904, 0
      %v3909 = vmul.f32 %v3903, %v3907
      %v3910 = vsel %vm938, %v3909, 0.0
      %3911 = vadd.xlane.f32.xlu0 %v3910
      %v3912 = vpop.xlane.xlu0 %3911
      %v3914 = vperm.slane %v3905, 0
      %v3916 = vadd.f32 %v3912, %v3914
      %vm3917 = vcmask 7168
      %3918 = vst.msk [vmem:[%s899] sm:$0xff] %vm3917, %v3916
      %p3919 = scmp.lt.s32.totalorder %s72, 1
      %s3920 = scalar_select %p3919, %s72, 1
      %s3921 = smul.addr %s3920, 8
      %s3922 = scalar_lea.vmem %s59, %s3921
      // Predicated region
      $region137: #{pinn_forward.1} parent=135 // pred_check
        %p3923 = pneg %p704
      $region138: #{pinn_forward.1} parent=135 // pred_check_branch
        %3925 = sbr.rel (%p3923) target = $region140
      $region139: #{pinn_forward.1} parent=135 // pred_region
        _
      $region140: #{pinn_forward.1} parent=135 // pred_fallthru
        _
    $region136: #{pinn_forward.1} parent=5 // pred_fallthru
      _
    %p3926 = scmp.le.s32.totalorder 2, %s67
    // Predicated region
    $region141: #{pinn_forward.1} parent=5 // pred_check
      %p3927 = pneg %p3926
    $region142: #{pinn_forward.1} parent=5 // pred_check_branch
      %3929 = sbr.rel (%p3927) target = $region144
    $region143: #{pinn_forward.1} parent=5 // pred_region
      %s3930 = ssub.s32 %s67, 2
      // Predicated region
      $region145: #{pinn_forward.1} parent=143 // pred_check
        %p3931 = pneg %p710
      $region146: #{pinn_forward.1} parent=143 // pred_check_branch
        %3933 = sbr.rel (%p3931) target = $region148
      $region147: #{pinn_forward.1} parent=143 // pred_region
        %p3934 = scmp.lt.s32.totalorder %s73, 1
        %s3935 = scalar_select %p3934, %s73, 1
        %s3936 = smul.addr %s3935, 8
        %s3937 = scalar_lea.vmem %s59, %s3936
      $region148: #{pinn_forward.1} parent=143 // pred_fallthru
        _
    $region144: #{pinn_forward.1} parent=5 // pred_fallthru
      _
  $region6: #{pinn_forward.1} parent=0 // loop_footer
    %s71 = sadd.s32 1, %s67
  $region7: #{pinn_forward.1} parent=0 // loop_footer_branch
    %66 = sbr.rel target = $region3
  $region8: #{pinn_forward.1} parent=0 // loop_exit
    _

</llo_original>
